<compile_context>
chip_gen: v7x
topology: tpu7x:2x2x1
jax: 0.10.0
libtpu: 0.0.40
codegen_flags: <defaults>
</compile_context>

<pallas_src>
import math
from functools import partial

import jax
import jax.numpy as jnp
from jax import lax
from jax.experimental import pallas as pl
from jax.experimental.pallas import tpu as pltpu


# ---------------------------------------------------------------------------
# helpers
# ---------------------------------------------------------------------------

def _round_up(x, m):
    return ((x + m - 1) // m) * m


def _pad2(a, rows, cols):
    pr, pc = rows - a.shape[0], cols - a.shape[1]
    if pr == 0 and pc == 0:
        return a
    return jnp.pad(a, ((0, pr), (0, pc)))


# ---------------------------------------------------------------------------
# Tiled linear:  y = act(x @ w + b),  bf16 operands, f32 accumulator
# ---------------------------------------------------------------------------

def _matmul_kernel(x_ref, w_ref, b_ref, o_ref, acc_ref, *, activation):
    k = pl.program_id(2)

    @pl.when(k == 0)
    def _():
        acc_ref[...] = jnp.zeros_like(acc_ref)

    acc_ref[...] += jnp.dot(x_ref[...], w_ref[...],
                            preferred_element_type=jnp.float32)

    @pl.when(k == pl.num_programs(2) - 1)
    def _():
        y = acc_ref[...] + b_ref[...]
        if activation == "relu":
            y = jnp.maximum(y, 0.0)
        o_ref[...] = y


def linear(x, w, b, activation=None, tm=256, tn=256, tk=512):
    """x: (M, K) f32, w: (K, N) (bf16 or f32), b: (N,) f32 -> (M, N) f32."""
    M, K = x.shape
    N = w.shape[1]
    tm = min(tm, _round_up(M, 8))
    tn = min(tn, _round_up(N, 128))
    tk = min(tk, _round_up(K, 128))
    Mp, Kp, Np = _round_up(M, tm), _round_up(K, tk), _round_up(N, tn)

    xp = _pad2(x.astype(jnp.bfloat16), Mp, Kp)
    wp = _pad2(w.astype(jnp.bfloat16), Kp, Np)
    bp = _pad2(b.reshape(1, N).astype(jnp.float32), 1, Np)

    out = pl.pallas_call(
        partial(_matmul_kernel, activation=activation),
        grid=(Mp // tm, Np // tn, Kp // tk),
        in_specs=[pl.BlockSpec((tm, tk), lambda i, j, k: (i, k)),
                  pl.BlockSpec((tk, tn), lambda i, j, k: (k, j)),
                  pl.BlockSpec((1, tn), lambda i, j, k: (0, j))],
        out_specs=pl.BlockSpec((tm, tn), lambda i, j, k: (i, j)),
        out_shape=jax.ShapeDtypeStruct((Mp, Np), jnp.float32),
        scratch_shapes=[pltpu.VMEM((tm, tn), jnp.float32)],
        compiler_params=pltpu.CompilerParams(
            dimension_semantics=("parallel", "parallel", "arbitrary")),
    )(xp, wp, bp)
    return out[:M, :N]


# ---------------------------------------------------------------------------
# Fused multi-head self-attention (+ residual, optional LayerNorm), one batch/block
# ---------------------------------------------------------------------------

def _mha_kernel(x_ref, wqkv_ref, bqkv_ref, wout_ref, bout_ref, g_ref, bln_ref,
                o_ref, *, num_heads, scale, apply_ln):
    x = x_ref[0]                                        # (S, E) f32
    E = x.shape[-1]
    Dh = E // num_heads

    qkv = jnp.dot(x.astype(jnp.bfloat16), wqkv_ref[...],
                  preferred_element_type=jnp.float32) + bqkv_ref[...]   # (S, 3E)

    heads = []
    for h in range(num_heads):                          # static loop over heads
        qh = qkv[:, h * Dh:(h + 1) * Dh]
        kh = qkv[:, E + h * Dh:E + (h + 1) * Dh]
        vh = qkv[:, 2 * E + h * Dh:2 * E + (h + 1) * Dh]
        s = lax.dot_general(qh.astype(jnp.bfloat16), kh.astype(jnp.bfloat16),
                            (((1,), (1,)), ((), ())),
                            preferred_element_type=jnp.float32) * scale  # (S, S)
        m = jnp.max(s, axis=-1, keepdims=True)
        p = jnp.exp(s - m)
        p = p * pl.reciprocal(jnp.sum(p, axis=-1, keepdims=True), approx=True)
        heads.append(jnp.dot(p.astype(jnp.bfloat16), vh.astype(jnp.bfloat16),
                             preferred_element_type=jnp.float32))        # (S, Dh)

    attn = jnp.concatenate(heads, axis=-1)              # (S, E)
    y = x + jnp.dot(attn.astype(jnp.bfloat16), wout_ref[...],
                    preferred_element_type=jnp.float32) + bout_ref[...]  # residual

    if apply_ln:                                        # post-LN (PyTorch default)
        mean = jnp.mean(y, axis=-1, keepdims=True)
        var = jnp.mean(jnp.square(y - mean), axis=-1, keepdims=True)
        y = (y - mean) * lax.rsqrt(var + 1e-5) * g_ref[...] + bln_ref[...]

    o_ref[0] = y


def fused_mha(x, p, num_heads, ln=None):
    """x: (B, S, E) f32 -> x + MHA(x), optionally LayerNorm'ed.  Grid over batch."""
    B, S, E = x.shape
    apply_ln = ln is not None
    if apply_ln:
        g, bln = ln[0].reshape(1, E), ln[1].reshape(1, E)
    else:
        g = jnp.ones((1, E), jnp.float32)
        bln = jnp.zeros((1, E), jnp.float32)

    xspec = pl.BlockSpec((1, S, E), lambda b: (b, 0, 0))

    def wspec(arr):
        return pl.BlockSpec(arr.shape, lambda b: (0, 0))

    return pl.pallas_call(
        partial(_mha_kernel, num_heads=num_heads,
                scale=1.0 / math.sqrt(E // num_heads), apply_ln=apply_ln),
        grid=(B,),
        in_specs=[xspec,
                  wspec(p["w_qkv"]), wspec(p["b_qkv"]),
                  wspec(p["w_out"]), wspec(p["b_out"]),
                  wspec(g), wspec(bln)],
        out_specs=xspec,
        out_shape=jax.ShapeDtypeStruct((B, S, E), jnp.float32),
        compiler_params=pltpu.CompilerParams(dimension_semantics=("parallel",)),
    )(x, p["w_qkv"], p["b_qkv"], p["w_out"], p["b_out"], g, bln)


# ---------------------------------------------------------------------------
# Fused FFN (lin1 + ReLU + lin2) + residual + LayerNorm, gridded over ff dim
# ---------------------------------------------------------------------------

def _ffn_kernel(x_ref, w1_ref, b1_ref, w2_ref, b2_ref, g_ref, bln_ref,
                o_ref, acc_ref):
    j = pl.program_id(1)

    @pl.when(j == 0)
    def _():
        acc_ref[...] = jnp.zeros_like(acc_ref)

    x = x_ref[...]                                       # (tm, E) f32 (resident)
    h = jnp.dot(x.astype(jnp.bfloat16), w1_ref[...],
                preferred_element_type=jnp.float32) + b1_ref[...]
    h = jnp.maximum(h, 0.0)
    acc_ref[...] += jnp.dot(h.astype(jnp.bfloat16), w2_ref[...],
                            preferred_element_type=jnp.float32)

    @pl.when(j == pl.num_programs(1) - 1)
    def _():
        y = acc_ref[...] + b2_ref[...] + x               # residual
        mean = jnp.mean(y, axis=-1, keepdims=True)
        var = jnp.mean(jnp.square(y - mean), axis=-1, keepdims=True)
        o_ref[...] = (y - mean) * lax.rsqrt(var + 1e-5) * g_ref[...] + bln_ref[...]


def fused_ffn_ln(x2, w1, b1, w2, b2, g, bln, tf=512):
    """x2: (M, E) f32 -> LayerNorm(x2 + relu(x2@w1+b1)@w2+b2)."""
    M, E = x2.shape
    F = w1.shape[1]
    tf = min(tf, _round_up(F, 128))
    Fp = _round_up(F, tf)
    tm = min(256, _round_up(M, 8))
    Mp = _round_up(M, tm)

    xp = _pad2(x2, Mp, E)
    w1p = _pad2(w1, E, Fp)
    b1p = _pad2(b1.reshape(1, F), 1, Fp)
    w2p = _pad2(w2, Fp, E)

    out = pl.pallas_call(
        _ffn_kernel,
        grid=(Mp // tm, Fp // tf),
        in_specs=[pl.BlockSpec((tm, E), lambda i, j: (i, 0)),
                  pl.BlockSpec((E, tf), lambda i, j: (0, j)),
                  pl.BlockSpec((1, tf), lambda i, j: (0, j)),
                  pl.BlockSpec((tf, E), lambda i, j: (j, 0)),
                  pl.BlockSpec((1, E), lambda i, j: (0, 0)),
                  pl.BlockSpec((1, E), lambda i, j: (0, 0)),
                  pl.BlockSpec((1, E), lambda i, j: (0, 0))],
        out_specs=pl.BlockSpec((tm, E), lambda i, j: (i, 0)),
        out_shape=jax.ShapeDtypeStruct((Mp, E), jnp.float32),
        scratch_shapes=[pltpu.VMEM((tm, E), jnp.float32)],
        compiler_params=pltpu.CompilerParams(
            dimension_semantics=("parallel", "arbitrary")),
    )(xp, w1p, b1p, w2p, b2.reshape(1, E), g.reshape(1, E), bln.reshape(1, E))
    return out[:M]


# ---------------------------------------------------------------------------
# LSTM recurrence (x-projection already hoisted out as one big matmul)
# ---------------------------------------------------------------------------

def _lstm_rec_kernel(gx_ref, whh_ref, y_ref, h_scr, c_scr, *, hidden, seq, unroll):
    H = hidden
    h_scr[...] = jnp.zeros_like(h_scr)
    c_scr[...] = jnp.zeros_like(c_scr)
    whh = whh_ref[...]                                   # (H, 4H) bf16, hoisted load

    def body(t, carry):
        h = h_scr[...]
        gates = gx_ref[t] + jnp.dot(h.astype(jnp.bfloat16), whh,
                                    preferred_element_type=jnp.float32)  # (B, 4H)
        i_g = jax.nn.sigmoid(gates[:, 0 * H:1 * H])      # PyTorch gate order i,f,g,o
        f_g = jax.nn.sigmoid(gates[:, 1 * H:2 * H])
        g_g = jnp.tanh(gates[:, 2 * H:3 * H])
        o_g = jax.nn.sigmoid(gates[:, 3 * H:4 * H])
        c_new = f_g * c_scr[...] + i_g * g_g
        h_new = o_g * jnp.tanh(c_new)
        c_scr[...] = c_new
        h_scr[...] = h_new
        y_ref[t] = h_new
        return carry

    lax.fori_loop(0, seq, body, 0, unroll=unroll)


def lstm_layer(xt, lp):
    """One nn.LSTM layer, zero initial state, time-major in/out.
    xt: (S, B, Din) f32 -> (S, B, H) f32."""
    S, B, _ = xt.shape
    H = lp["w_hh_t"].shape[0]
    # Hoisted input projection: one lane-dense (S*B, Din) x (Din, 4H) matmul.
    gx = linear(xt.reshape(S * B, -1), lp["w_ih_t"], lp["b"]).reshape(S, B, 4 * H)
    # TODO(synk): for very long sequences / large batches, switch to a time-gridded,
    # batch-tiled recurrence instead of holding (S, B, 4H) in one VMEM block.
    return pl.pallas_call(
        partial(_lstm_rec_kernel, hidden=H, seq=S, unroll=(S <= 64)),
        out_shape=jax.ShapeDtypeStruct((S, B, H), jnp.float32),
        scratch_shapes=[pltpu.VMEM((B, H), jnp.float32),   # h state
                        pltpu.VMEM((B, H), jnp.float32)],  # c state
    )(gx, lp["w_hh_t"])


# ---------------------------------------------------------------------------
# Forward pass (composition)
# ---------------------------------------------------------------------------

def forward(prepared, x, num_heads):
    B, S, _ = x.shape
    xt = jnp.transpose(x.astype(jnp.float32), (1, 0, 2))   # time-major once
    for lp in prepared["lstm"]:
        xt = lstm_layer(xt, lp)
    lstm_out = jnp.transpose(xt, (1, 0, 2))                 # (B, S, H) once
    E = lstm_out.shape[-1]

    # attn_output + lstm_out (residual fused into the MHA kernel, no LN)
    t = fused_mha(lstm_out, prepared["mha"], num_heads, ln=None)

    # nn.TransformerEncoderLayer (post-LN, relu, ff=2048), eval mode
    for lp in prepared["encoder"]:
        h = fused_mha(t, lp["attn"], num_heads, ln=(lp["ln1_g"], lp["ln1_b"]))
        t = fused_ffn_ln(h.reshape(B * S, E), lp["w1"], lp["b1"],
                         lp["w2"], lp["b2"], lp["ln2_g"], lp["ln2_b"]).reshape(B, S, E)

    last = t[:, -1, :]                                      # (B, E)
    return linear(last, prepared["fc_w"], prepared["fc_b"])  # (B, 1)


# ---------------------------------------------------------------------------
# Parameter init (PyTorch layouts) and one-time preparation (transpose + bf16 cast)
# ---------------------------------------------------------------------------

def init_params(key, input_dim, hidden_dim, num_layers, num_heads, ff_dim=2048):
    kiter = iter(jax.random.split(key, 256))

    def u(shape, fan_in):
        bound = 1.0 / math.sqrt(fan_in)
        return jax.random.uniform(next(kiter), shape, jnp.float32, -bound, bound)

    def mha_params(embed):
        return {"in_w": u((3 * embed, embed), embed),
                "in_b": u((3 * embed,), embed),
                "out_w": u((embed, embed), embed),
                "out_b": u((embed,), embed)}

    params = {"lstm": [], "encoder": []}
    for l in range(num_layers):
        din = input_dim if l == 0 else hidden_dim
        params["lstm"].append({
            "w_ih": u((4 * hidden_dim, din), hidden_dim),
            "w_hh": u((4 * hidden_dim, hidden_dim), hidden_dim),
            "b_ih": u((4 * hidden_dim,), hidden_dim),
            "b_hh": u((4 * hidden_dim,), hidden_dim)})
    params["mha"] = mha_params(hidden_dim)
    for _ in range(num_layers):
        params["encoder"].append({
            "attn": mha_params(hidden_dim),
            "lin1_w": u((ff_dim, hidden_dim), hidden_dim),
            "lin1_b": u((ff_dim,), hidden_dim),
            "lin2_w": u((hidden_dim, ff_dim), ff_dim),
            "lin2_b": u((hidden_dim,), ff_dim),
            "ln1_g": jnp.ones((hidden_dim,), jnp.float32),
            "ln1_b": jnp.zeros((hidden_dim,), jnp.float32),
            "ln2_g": jnp.ones((hidden_dim,), jnp.float32),
            "ln2_b": jnp.zeros((hidden_dim,), jnp.float32)})
    params["fc_w"] = u((1, hidden_dim), hidden_dim)
    params["fc_b"] = u((1,), hidden_dim)
    return params


def prepare_params(params):
    """One-time re-layout: weights -> (in, out) and bf16; biases stay f32."""
    def prep_mha(p):
        e = p["out_w"].shape[0]
        return {"w_qkv": jnp.asarray(p["in_w"].T, jnp.bfloat16),
                "b_qkv": p["in_b"].reshape(1, -1).astype(jnp.float32),
                "w_out": jnp.asarray(p["out_w"].T, jnp.bfloat16),
                "b_out": p["out_b"].reshape(1, e).astype(jnp.float32)}

    prep = {"lstm": [], "encoder": []}
    for lp in params["lstm"]:
        prep["lstm"].append({
            "w_ih_t": jnp.asarray(lp["w_ih"].T, jnp.bfloat16),
            "w_hh_t": jnp.asarray(lp["w_hh"].T, jnp.bfloat16),
            "b": (lp["b_ih"] + lp["b_hh"]).astype(jnp.float32)})
    prep["mha"] = prep_mha(params["mha"])
    for lp in params["encoder"]:
        prep["encoder"].append({
            "attn": prep_mha(lp["attn"]),
            "w1": jnp.asarray(lp["lin1_w"].T, jnp.bfloat16),
            "b1": lp["lin1_b"].astype(jnp.float32),
            "w2": jnp.asarray(lp["lin2_w"].T, jnp.bfloat16),
            "b2": lp["lin2_b"].astype(jnp.float32),
            "ln1_g": lp["ln1_g"], "ln1_b": lp["ln1_b"],
            "ln2_g": lp["ln2_g"], "ln2_b": lp["ln2_b"]})
    prep["fc_w"] = jnp.asarray(params["fc_w"].T, jnp.bfloat16)
    prep["fc_b"] = params["fc_b"].astype(jnp.float32)
    return prep


if __name__ == "__main__":
    B, S = 2, 8
    input_dim, hidden_dim, num_layers, num_heads = 8, 32, 2, 4

    key = jax.random.PRNGKey(0)
    pkey, xkey = jax.random.split(key)
    params = init_params(pkey, input_dim, hidden_dim, num_layers, num_heads)
    prepared = prepare_params(params)
    x = jax.random.normal(xkey, (B, S, input_dim), jnp.float32)

    fwd = jax.jit(partial(forward, num_heads=num_heads))
    out = jax.block_until_ready(fwd(prepared, x))
    assert out.shape == (B, 1) and out.dtype == jnp.float32
    print("KERNEL_OK")
</pallas_src>

<mosaic_0001>
module attributes {stable_mosaic.version = 11 : i64} {
  func.func @_matmul_kernel(%arg0: i32, %arg1: i32, %arg2: i32, %arg3: memref<16x128xbf16, #tpu.memory_space<vmem>>, %arg4: memref<128x128xbf16, #tpu.memory_space<vmem>>, %arg5: memref<1x128xf32, #tpu.memory_space<vmem>>, %arg6: memref<16x128xf32, #tpu.memory_space<vmem>>, %arg7: memref<16x128xf32, #tpu.memory_space<vmem>>) attributes {dimension_semantics = [#tpu.dimension_semantics<parallel>, #tpu.dimension_semantics<parallel>, #tpu.dimension_semantics<arbitrary>], iteration_bounds = array<i64: 1, 1, 1>, scalar_prefetch = 0 : i64, scratch_operands = 1 : i64, tpu.core_type = #tpu.core_type<tc>, window_params = [{transform_indices = @transform_0, window_bounds = array<i64: 16, 128>}, {transform_indices = @transform_1, window_bounds = array<i64: 128, 128>}, {transform_indices = @transform_2, window_bounds = array<i64: 1, 128>}, {transform_indices = @transform_3, window_bounds = array<i64: 16, 128>}]} {
    %c0_i32 = arith.constant 0 : i32
    %0 = arith.cmpi eq, %arg2, %c0_i32 : i32
    %1 = arith.extui %0 : i1 to i32
    %c0_i32_0 = arith.constant 0 : i32
    %2 = arith.cmpi ne, %1, %c0_i32_0 : i32
    scf.if %2 {
      %cst_10 = arith.constant 0.000000e+00 : f32
      %12 = vector.broadcast %cst_10 : f32 to vector<16x128xf32>
      %c0_11 = arith.constant 0 : index
      %c0_12 = arith.constant 0 : index
      %13 = vector.load %arg7[%c0_11, %c0_12] : memref<16x128xf32, #tpu.memory_space<vmem>>, vector<16x128xf32>
      tpu.vector_store %arg7[%c0_11, %c0_12], %12 {strides = array<i32>} : memref<16x128xf32, #tpu.memory_space<vmem>>, vector<16x128xf32>,
    } else {
    }
    %c0 = arith.constant 0 : index
    %c0_1 = arith.constant 0 : index
    %3 = vector.load %arg7[%c0, %c0_1] : memref<16x128xf32, #tpu.memory_space<vmem>>, vector<16x128xf32>
    %c0_2 = arith.constant 0 : index
    %c0_3 = arith.constant 0 : index
    %4 = vector.load %arg3[%c0_2, %c0_3] : memref<16x128xbf16, #tpu.memory_space<vmem>>, vector<16x128xbf16>
    %c0_4 = arith.constant 0 : index
    %c0_5 = arith.constant 0 : index
    %5 = vector.load %arg4[%c0_4, %c0_5] : memref<128x128xbf16, #tpu.memory_space<vmem>>, vector<128x128xbf16>
    %cst = arith.constant dense<0.000000e+00> : vector<16x128xf32>
    %6 = tpu.matmul %4, %5, %cst {dimension_numbers = #tpu.dot_dimension_numbers<[1], [0], [0], [1], [0, 0, 1, 1], [], []>} : vector<16x128xbf16>, vector<128x128xbf16>, vector<16x128xf32> -> vector<16x128xf32>
    %7 = arith.addf %3, %6 : vector<16x128xf32>
    %c0_6 = arith.constant 0 : index
    %c0_7 = arith.constant 0 : index
    %8 = vector.load %arg7[%c0_6, %c0_7] : memref<16x128xf32, #tpu.memory_space<vmem>>, vector<16x128xf32>
    tpu.vector_store %arg7[%c0_6, %c0_7], %7 {strides = array<i32>} : memref<16x128xf32, #tpu.memory_space<vmem>>, vector<16x128xf32>,
    %c0_i32_8 = arith.constant 0 : i32
    %9 = arith.cmpi eq, %arg2, %c0_i32_8 : i32
    %10 = arith.extui %9 : i1 to i32
    %c0_i32_9 = arith.constant 0 : i32
    %11 = arith.cmpi ne, %10, %c0_i32_9 : i32
    scf.if %11 {
      %c0_10 = arith.constant 0 : index
      %c0_11 = arith.constant 0 : index
      %12 = vector.load %arg7[%c0_10, %c0_11] : memref<16x128xf32, #tpu.memory_space<vmem>>, vector<16x128xf32>
      %c0_12 = arith.constant 0 : index
      %c0_13 = arith.constant 0 : index
      %13 = vector.load %arg5[%c0_12, %c0_13] : memref<1x128xf32, #tpu.memory_space<vmem>>, vector<1x128xf32>
      %14 = vector.broadcast %13 : vector<1x128xf32> to vector<16x128xf32>
      %15 = arith.addf %12, %14 : vector<16x128xf32>
      %c0_14 = arith.constant 0 : index
      %c0_15 = arith.constant 0 : index
      %16 = vector.load %arg6[%c0_14, %c0_15] : memref<16x128xf32, #tpu.memory_space<vmem>>, vector<16x128xf32>
      tpu.vector_store %arg6[%c0_14, %c0_15], %15 {strides = array<i32>} : memref<16x128xf32, #tpu.memory_space<vmem>>, vector<16x128xf32>,
    } else {
    }
    return
  }
  func.func @transform_0(%arg0: i32, %arg1: i32, %arg2: i32) -> (i32, i32) {
    %c0_i32 = arith.constant 0 : i32
    return %arg0, %arg2 : i32, i32
  }
  func.func @transform_1(%arg0: i32, %arg1: i32, %arg2: i32) -> (i32, i32) {
    %c0_i32 = arith.constant 0 : i32
    return %arg2, %arg1 : i32, i32
  }
  func.func @transform_2(%arg0: i32, %arg1: i32, %arg2: i32) -> (i32, i32) {
    %c0_i32 = arith.constant 0 : i32
    %c0_i32_0 = arith.constant 0 : i32
    return %c0_i32, %arg1 : i32, i32
  }
  func.func @transform_3(%arg0: i32, %arg1: i32, %arg2: i32) -> (i32, i32) {
    %c0_i32 = arith.constant 0 : i32
    return %arg0, %arg1 : i32, i32
  }
}

module attributes {stable_mosaic.version = 11 : i64} {
  func.func @_lstm_rec_kernel(%arg0: memref<8x2x128xf32, #tpu.memory_space<vmem>>, %arg1: memref<32x128xbf16, #tpu.memory_space<vmem>>, %arg2: memref<8x2x32xf32, #tpu.memory_space<vmem>>, %arg3: memref<2x32xf32, #tpu.memory_space<vmem>>, %arg4: memref<2x32xf32, #tpu.memory_space<vmem>>) attributes {dimension_semantics = [], scalar_prefetch = 0 : i64, scratch_operands = 2 : i64, tpu.core_type = #tpu.core_type<tc>} {
    %cst = arith.constant 0.000000e+00 : f32
    %0 = vector.broadcast %cst : f32 to vector<2x32xf32>
    %c0 = arith.constant 0 : index
    %c0_0 = arith.constant 0 : index
    %1 = vector.load %arg3[%c0, %c0_0] : memref<2x32xf32, #tpu.memory_space<vmem>>, vector<2x32xf32>
    tpu.vector_store %arg3[%c0, %c0_0], %0 {strides = array<i32>} : memref<2x32xf32, #tpu.memory_space<vmem>>, vector<2x32xf32>,
    %cst_1 = arith.constant 0.000000e+00 : f32
    %2 = vector.broadcast %cst_1 : f32 to vector<2x32xf32>
    %c0_2 = arith.constant 0 : index
    %c0_3 = arith.constant 0 : index
    %3 = vector.load %arg4[%c0_2, %c0_3] : memref<2x32xf32, #tpu.memory_space<vmem>>, vector<2x32xf32>
    tpu.vector_store %arg4[%c0_2, %c0_3], %2 {strides = array<i32>} : memref<2x32xf32, #tpu.memory_space<vmem>>, vector<2x32xf32>,
    %c0_4 = arith.constant 0 : index
    %c0_5 = arith.constant 0 : index
    %4 = vector.load %arg1[%c0_4, %c0_5] : memref<32x128xbf16, #tpu.memory_space<vmem>>, vector<32x128xbf16>
    %c0_i32 = arith.constant 0 : i32
    %c0_6 = arith.constant 0 : index
    %c0_7 = arith.constant 0 : index
    %5 = vector.load %arg3[%c0_6, %c0_7] : memref<2x32xf32, #tpu.memory_space<vmem>>, vector<2x32xf32>
    %6 = arith.index_cast %c0_i32 : i32 to index
    %c0_8 = arith.constant 0 : index
    %c0_9 = arith.constant 0 : index
    %7 = vector.load %arg0[%6, %c0_8, %c0_9] : memref<8x2x128xf32, #tpu.memory_space<vmem>>, vector<1x2x128xf32>
    %8 = vector.shape_cast %7 : vector<1x2x128xf32> to vector<2x128xf32>
    %9 = arith.truncf %5 : vector<2x32xf32> to vector<2x32xbf16>
    %cst_10 = arith.constant dense<0.000000e+00> : vector<2x128xf32>
    %10 = tpu.matmul %9, %4, %cst_10 {dimension_numbers = #tpu.dot_dimension_numbers<[1], [0], [0], [1], [0, 0, 1, 1], [], []>} : vector<2x32xbf16>, vector<32x128xbf16>, vector<2x128xf32> -> vector<2x128xf32>
    %11 = arith.addf %8, %10 : vector<2x128xf32>
    %12 = vector.extract_strided_slice %11 {offsets = [0, 0], sizes = [2, 32], strides = [1, 1]} : vector<2x128xf32> to vector<2x32xf32>
    %13 = arith.negf %12 : vector<2x32xf32>
    %14 = math.exp %13 : vector<2x32xf32>
    %cst_11 = arith.constant 1.000000e+00 : f32
    %15 = vector.broadcast %cst_11 : f32 to vector<2x32xf32>
    %16 = arith.addf %15, %14 : vector<2x32xf32>
    %17 = arith.divf %15, %16 : vector<2x32xf32>
    %18 = vector.extract_strided_slice %11 {offsets = [0, 32], sizes = [2, 32], strides = [1, 1]} : vector<2x128xf32> to vector<2x32xf32>
    %19 = arith.negf %18 : vector<2x32xf32>
    %20 = math.exp %19 : vector<2x32xf32>
    %cst_12 = arith.constant 1.000000e+00 : f32
    %21 = vector.broadcast %cst_12 : f32 to vector<2x32xf32>
    %22 = arith.addf %21, %20 : vector<2x32xf32>
    %23 = arith.divf %21, %22 : vector<2x32xf32>
    %24 = vector.extract_strided_slice %11 {offsets = [0, 64], sizes = [2, 32], strides = [1, 1]} : vector<2x128xf32> to vector<2x32xf32>
    %25 = math.tanh %24 : vector<2x32xf32>
    %26 = vector.extract_strided_slice %11 {offsets = [0, 96], sizes = [2, 32], strides = [1, 1]} : vector<2x128xf32> to vector<2x32xf32>
    %27 = arith.negf %26 : vector<2x32xf32>
    %28 = math.exp %27 : vector<2x32xf32>
    %cst_13 = arith.constant 1.000000e+00 : f32
    %29 = vector.broadcast %cst_13 : f32 to vector<2x32xf32>
    %30 = arith.addf %29, %28 : vector<2x32xf32>
    %31 = arith.divf %29, %30 : vector<2x32xf32>
    %c0_14 = arith.constant 0 : index
    %c0_15 = arith.constant 0 : index
    %32 = vector.load %arg4[%c0_14, %c0_15] : memref<2x32xf32, #tpu.memory_space<vmem>>, vector<2x32xf32>
    %33 = arith.mulf %23, %32 : vector<2x32xf32>
    %34 = arith.mulf %17, %25 : vector<2x32xf32>
    %35 = arith.addf %33, %34 : vector<2x32xf32>
    %36 = math.tanh %35 : vector<2x32xf32>
    %37 = arith.mulf %31, %36 : vector<2x32xf32>
    %c0_16 = arith.constant 0 : index
    %c0_17 = arith.constant 0 : index
    %38 = vector.load %arg4[%c0_16, %c0_17] : memref<2x32xf32, #tpu.memory_space<vmem>>, vector<2x32xf32>
    tpu.vector_store %arg4[%c0_16, %c0_17], %35 {strides = array<i32>} : memref<2x32xf32, #tpu.memory_space<vmem>>, vector<2x32xf32>,
    %c0_18 = arith.constant 0 : index
    %c0_19 = arith.constant 0 : index
    %39 = vector.load %arg3[%c0_18, %c0_19] : memref<2x32xf32, #tpu.memory_space<vmem>>, vector<2x32xf32>
    tpu.vector_store %arg3[%c0_18, %c0_19], %37 {strides = array<i32>} : memref<2x32xf32, #tpu.memory_space<vmem>>, vector<2x32xf32>,
    %40 = arith.index_cast %c0_i32 : i32 to index
    %c0_20 = arith.constant 0 : index
    %c0_21 = arith.constant 0 : index
    %41 = vector.load %arg2[%40, %c0_20, %c0_21] : memref<8x2x32xf32, #tpu.memory_space<vmem>>, vector<1x2x32xf32>
    %42 = vector.shape_cast %41 : vector<1x2x32xf32> to vector<2x32xf32>
    %43 = vector.shape_cast %37 : vector<2x32xf32> to vector<1x2x32xf32>
    tpu.vector_store %arg2[%40, %c0_20, %c0_21], %43 {strides = array<i32>} : memref<8x2x32xf32, #tpu.memory_space<vmem>>, vector<1x2x32xf32>,
    %c1_i32 = arith.constant 1 : i32
    %c0_22 = arith.constant 0 : index
    %c0_23 = arith.constant 0 : index
    %44 = vector.load %arg3[%c0_22, %c0_23] : memref<2x32xf32, #tpu.memory_space<vmem>>, vector<2x32xf32>
    %45 = arith.index_cast %c1_i32 : i32 to index
    %c0_24 = arith.constant 0 : index
    %c0_25 = arith.constant 0 : index
    %46 = vector.load %arg0[%45, %c0_24, %c0_25] : memref<8x2x128xf32, #tpu.memory_space<vmem>>, vector<1x2x128xf32>
    %47 = vector.shape_cast %46 : vector<1x2x128xf32> to vector<2x128xf32>
    %48 = arith.truncf %44 : vector<2x32xf32> to vector<2x32xbf16>
    %cst_26 = arith.constant dense<0.000000e+00> : vector<2x128xf32>
    %49 = tpu.matmul %48, %4, %cst_26 {dimension_numbers = #tpu.dot_dimension_numbers<[1], [0], [0], [1], [0, 0, 1, 1], [], []>} : vector<2x32xbf16>, vector<32x128xbf16>, vector<2x128xf32> -> vector<2x128xf32>
    %50 = arith.addf %47, %49 : vector<2x128xf32>
    %51 = vector.extract_strided_slice %50 {offsets = [0, 0], sizes = [2, 32], strides = [1, 1]} : vector<2x128xf32> to vector<2x32xf32>
    %52 = arith.negf %51 : vector<2x32xf32>
    %53 = math.exp %52 : vector<2x32xf32>
    %cst_27 = arith.constant 1.000000e+00 : f32
    %54 = vector.broadcast %cst_27 : f32 to vector<2x32xf32>
    %55 = arith.addf %54, %53 : vector<2x32xf32>
    %56 = arith.divf %54, %55 : vector<2x32xf32>
    %57 = vector.extract_strided_slice %50 {offsets = [0, 32], sizes = [2, 32], strides = [1, 1]} : vector<2x128xf32> to vector<2x32xf32>
    %58 = arith.negf %57 : vector<2x32xf32>
    %59 = math.exp %58 : vector<2x32xf32>
    %cst_28 = arith.constant 1.000000e+00 : f32
    %60 = vector.broadcast %cst_28 : f32 to vector<2x32xf32>
    %61 = arith.addf %60, %59 : vector<2x32xf32>
    %62 = arith.divf %60, %61 : vector<2x32xf32>
    %63 = vector.extract_strided_slice %50 {offsets = [0, 64], sizes = [2, 32], strides = [1, 1]} : vector<2x128xf32> to vector<2x32xf32>
    %64 = math.tanh %63 : vector<2x32xf32>
    %65 = vector.extract_strided_slice %50 {offsets = [0, 96], sizes = [2, 32], strides = [1, 1]} : vector<2x128xf32> to vector<2x32xf32>
    %66 = arith.negf %65 : vector<2x32xf32>
    %67 = math.exp %66 : vector<2x32xf32>
    %cst_29 = arith.constant 1.000000e+00 : f32
    %68 = vector.broadcast %cst_29 : f32 to vector<2x32xf32>
    %69 = arith.addf %68, %67 : vector<2x32xf32>
    %70 = arith.divf %68, %69 : vector<2x32xf32>
    %c0_30 = arith.constant 0 : index
    %c0_31 = arith.constant 0 : index
    %71 = vector.load %arg4[%c0_30, %c0_31] : memref<2x32xf32, #tpu.memory_space<vmem>>, vector<2x32xf32>
    %72 = arith.mulf %62, %71 : vector<2x32xf32>
    %73 = arith.mulf %56, %64 : vector<2x32xf32>
    %74 = arith.addf %72, %73 : vector<2x32xf32>
    %75 = math.tanh %74 : vector<2x32xf32>
    %76 = arith.mulf %70, %75 : vector<2x32xf32>
    %c0_32 = arith.constant 0 : index
    %c0_33 = arith.constant 0 : index
    %77 = vector.load %arg4[%c0_32, %c0_33] : memref<2x32xf32, #tpu.memory_space<vmem>>, vector<2x32xf32>
    tpu.vector_store %arg4[%c0_32, %c0_33], %74 {strides = array<i32>} : memref<2x32xf32, #tpu.memory_space<vmem>>, vector<2x32xf32>,
    %c0_34 = arith.constant 0 : index
    %c0_35 = arith.constant 0 : index
    %78 = vector.load %arg3[%c0_34, %c0_35] : memref<2x32xf32, #tpu.memory_space<vmem>>, vector<2x32xf32>
    tpu.vector_store %arg3[%c0_34, %c0_35], %76 {strides = array<i32>} : memref<2x32xf32, #tpu.memory_space<vmem>>, vector<2x32xf32>,
    %79 = arith.index_cast %c1_i32 : i32 to index
    %c0_36 = arith.constant 0 : index
    %c0_37 = arith.constant 0 : index
    %80 = vector.load %arg2[%79, %c0_36, %c0_37] : memref<8x2x32xf32, #tpu.memory_space<vmem>>, vector<1x2x32xf32>
    %81 = vector.shape_cast %80 : vector<1x2x32xf32> to vector<2x32xf32>
    %82 = vector.shape_cast %76 : vector<2x32xf32> to vector<1x2x32xf32>
    tpu.vector_store %arg2[%79, %c0_36, %c0_37], %82 {strides = array<i32>} : memref<8x2x32xf32, #tpu.memory_space<vmem>>, vector<1x2x32xf32>,
    %c2_i32 = arith.constant 2 : i32
    %c0_38 = arith.constant 0 : index
    %c0_39 = arith.constant 0 : index
    %83 = vector.load %arg3[%c0_38, %c0_39] : memref<2x32xf32, #tpu.memory_space<vmem>>, vector<2x32xf32>
    %84 = arith.index_cast %c2_i32 : i32 to index
    %c0_40 = arith.constant 0 : index
    %c0_41 = arith.constant 0 : index
    %85 = vector.load %arg0[%84, %c0_40, %c0_41] : memref<8x2x128xf32, #tpu.memory_space<vmem>>, vector<1x2x128xf32>
    %86 = vector.shape_cast %85 : vector<1x2x128xf32> to vector<2x128xf32>
    %87 = arith.truncf %83 : vector<2x32xf32> to vector<2x32xbf16>
    %cst_42 = arith.constant dense<0.000000e+00> : vector<2x128xf32>
    %88 = tpu.matmul %87, %4, %cst_42 {dimension_numbers = #tpu.dot_dimension_numbers<[1], [0], [0], [1], [0, 0, 1, 1], [], []>} : vector<2x32xbf16>, vector<32x128xbf16>, vector<2x128xf32> -> vector<2x128xf32>
    %89 = arith.addf %86, %88 : vector<2x128xf32>
    %90 = vector.extract_strided_slice %89 {offsets = [0, 0], sizes = [2, 32], strides = [1, 1]} : vector<2x128xf32> to vector<2x32xf32>
    %91 = arith.negf %90 : vector<2x32xf32>
    %92 = math.exp %91 : vector<2x32xf32>
    %cst_43 = arith.constant 1.000000e+00 : f32
    %93 = vector.broadcast %cst_43 : f32 to vector<2x32xf32>
    %94 = arith.addf %93, %92 : vector<2x32xf32>
    %95 = arith.divf %93, %94 : vector<2x32xf32>
    %96 = vector.extract_strided_slice %89 {offsets = [0, 32], sizes = [2, 32], strides = [1, 1]} : vector<2x128xf32> to vector<2x32xf32>
    %97 = arith.negf %96 : vector<2x32xf32>
    %98 = math.exp %97 : vector<2x32xf32>
    %cst_44 = arith.constant 1.000000e+00 : f32
    %99 = vector.broadcast %cst_44 : f32 to vector<2x32xf32>
    %100 = arith.addf %99, %98 : vector<2x32xf32>
    %101 = arith.divf %99, %100 : vector<2x32xf32>
    %102 = vector.extract_strided_slice %89 {offsets = [0, 64], sizes = [2, 32], strides = [1, 1]} : vector<2x128xf32> to vector<2x32xf32>
    %103 = math.tanh %102 : vector<2x32xf32>
    %104 = vector.extract_strided_slice %89 {offsets = [0, 96], sizes = [2, 32], strides = [1, 1]} : vector<2x128xf32> to vector<2x32xf32>
    %105 = arith.negf %104 : vector<2x32xf32>
    %106 = math.exp %105 : vector<2x32xf32>
    %cst_45 = arith.constant 1.000000e+00 : f32
    %107 = vector.broadcast %cst_45 : f32 to vector<2x32xf32>
    %108 = arith.addf %107, %106 : vector<2x32xf32>
    %109 = arith.divf %107, %108 : vector<2x32xf32>
    %c0_46 = arith.constant 0 : index
    %c0_47 = arith.constant 0 : index
    %110 = vector.load %arg4[%c0_46, %c0_47] : memref<2x32xf32, #tpu.memory_space<vmem>>, vector<2x32xf32>
    %111 = arith.mulf %101, %110 : vector<2x32xf32>
    %112 = arith.mulf %95, %103 : vector<2x32xf32>
    %113 = arith.addf %111, %112 : vector<2x32xf32>
    %114 = math.tanh %113 : vector<2x32xf32>
    %115 = arith.mulf %109, %114 : vector<2x32xf32>
    %c0_48 = arith.constant 0 : index
    %c0_49 = arith.constant 0 : index
    %116 = vector.load %arg4[%c0_48, %c0_49] : memref<2x32xf32, #tpu.memory_space<vmem>>, vector<2x32xf32>
    tpu.vector_store %arg4[%c0_48, %c0_49], %113 {strides = array<i32>} : memref<2x32xf32, #tpu.memory_space<vmem>>, vector<2x32xf32>,
    %c0_50 = arith.constant 0 : index
    %c0_51 = arith.constant 0 : index
    %117 = vector.load %arg3[%c0_50, %c0_51] : memref<2x32xf32, #tpu.memory_space<vmem>>, vector<2x32xf32>
    tpu.vector_store %arg3[%c0_50, %c0_51], %115 {strides = array<i32>} : memref<2x32xf32, #tpu.memory_space<vmem>>, vector<2x32xf32>,
    %118 = arith.index_cast %c2_i32 : i32 to index
    %c0_52 = arith.constant 0 : index
    %c0_53 = arith.constant 0 : index
    %119 = vector.load %arg2[%118, %c0_52, %c0_53] : memref<8x2x32xf32, #tpu.memory_space<vmem>>, vector<1x2x32xf32>
    %120 = vector.shape_cast %119 : vector<1x2x32xf32> to vector<2x32xf32>
    %121 = vector.shape_cast %115 : vector<2x32xf32> to vector<1x2x32xf32>
    tpu.vector_store %arg2[%118, %c0_52, %c0_53], %121 {strides = array<i32>} : memref<8x2x32xf32, #tpu.memory_space<vmem>>, vector<1x2x32xf32>,
    %c3_i32 = arith.constant 3 : i32
    %c0_54 = arith.constant 0 : index
    %c0_55 = arith.constant 0 : index
    %122 = vector.load %arg3[%c0_54, %c0_55] : memref<2x32xf32, #tpu.memory_space<vmem>>, vector<2x32xf32>
    %123 = arith.index_cast %c3_i32 : i32 to index
    %c0_56 = arith.constant 0 : index
    %c0_57 = arith.constant 0 : index
    %124 = vector.load %arg0[%123, %c0_56, %c0_57] : memref<8x2x128xf32, #tpu.memory_space<vmem>>, vector<1x2x128xf32>
    %125 = vector.shape_cast %124 : vector<1x2x128xf32> to vector<2x128xf32>
    %126 = arith.truncf %122 : vector<2x32xf32> to vector<2x32xbf16>
    %cst_58 = arith.constant dense<0.000000e+00> : vector<2x128xf32>
    %127 = tpu.matmul %126, %4, %cst_58 {dimension_numbers = #tpu.dot_dimension_numbers<[1], [0], [0], [1], [0, 0, 1, 1], [], []>} : vector<2x32xbf16>, vector<32x128xbf16>, vector<2x128xf32> -> vector<2x128xf32>
    %128 = arith.addf %125, %127 : vector<2x128xf32>
    %129 = vector.extract_strided_slice %128 {offsets = [0, 0], sizes = [2, 32], strides = [1, 1]} : vector<2x128xf32> to vector<2x32xf32>
    %130 = arith.negf %129 : vector<2x32xf32>
    %131 = math.exp %130 : vector<2x32xf32>
    %cst_59 = arith.constant 1.000000e+00 : f32
    %132 = vector.broadcast %cst_59 : f32 to vector<2x32xf32>
    %133 = arith.addf %132, %131 : vector<2x32xf32>
    %134 = arith.divf %132, %133 : vector<2x32xf32>
    %135 = vector.extract_strided_slice %128 {offsets = [0, 32], sizes = [2, 32], strides = [1, 1]} : vector<2x128xf32> to vector<2x32xf32>
    %136 = arith.negf %135 : vector<2x32xf32>
    %137 = math.exp %136 : vector<2x32xf32>
    %cst_60 = arith.constant 1.000000e+00 : f32
    %138 = vector.broadcast %cst_60 : f32 to vector<2x32xf32>
    %139 = arith.addf %138, %137 : vector<2x32xf32>
    %140 = arith.divf %138, %139 : vector<2x32xf32>
    %141 = vector.extract_strided_slice %128 {offsets = [0, 64], sizes = [2, 32], strides = [1, 1]} : vector<2x128xf32> to vector<2x32xf32>
    %142 = math.tanh %141 : vector<2x32xf32>
    %143 = vector.extract_strided_slice %128 {offsets = [0, 96], sizes = [2, 32], strides = [1, 1]} : vector<2x128xf32> to vector<2x32xf32>
    %144 = arith.negf %143 : vector<2x32xf32>
    %145 = math.exp %144 : vector<2x32xf32>
    %cst_61 = arith.constant 1.000000e+00 : f32
    %146 = vector.broadcast %cst_61 : f32 to vector<2x32xf32>
    %147 = arith.addf %146, %145 : vector<2x32xf32>
    %148 = arith.divf %146, %147 : vector<2x32xf32>
    %c0_62 = arith.constant 0 : index
    %c0_63 = arith.constant 0 : index
    %149 = vector.load %arg4[%c0_62, %c0_63] : memref<2x32xf32, #tpu.memory_space<vmem>>, vector<2x32xf32>
    %150 = arith.mulf %140, %149 : vector<2x32xf32>
    %151 = arith.mulf %134, %142 : vector<2x32xf32>
    %152 = arith.addf %150, %151 : vector<2x32xf32>
    %153 = math.tanh %152 : vector<2x32xf32>
    %154 = arith.mulf %148, %153 : vector<2x32xf32>
    %c0_64 = arith.constant 0 : index
    %c0_65 = arith.constant 0 : index
    %155 = vector.load %arg4[%c0_64, %c0_65] : memref<2x32xf32, #tpu.memory_space<vmem>>, vector<2x32xf32>
    tpu.vector_store %arg4[%c0_64, %c0_65], %152 {strides = array<i32>} : memref<2x32xf32, #tpu.memory_space<vmem>>, vector<2x32xf32>,
    %c0_66 = arith.constant 0 : index
    %c0_67 = arith.constant 0 : index
    %156 = vector.load %arg3[%c0_66, %c0_67] : memref<2x32xf32, #tpu.memory_space<vmem>>, vector<2x32xf32>
    tpu.vector_store %arg3[%c0_66, %c0_67], %154 {strides = array<i32>} : memref<2x32xf32, #tpu.memory_space<vmem>>, vector<2x32xf32>,
    %157 = arith.index_cast %c3_i32 : i32 to index
    %c0_68 = arith.constant 0 : index
    %c0_69 = arith.constant 0 : index
    %158 = vector.load %arg2[%157, %c0_68, %c0_69] : memref<8x2x32xf32, #tpu.memory_space<vmem>>, vector<1x2x32xf32>
    %159 = vector.shape_cast %158 : vector<1x2x32xf32> to vector<2x32xf32>
    %160 = vector.shape_cast %154 : vector<2x32xf32> to vector<1x2x32xf32>
    tpu.vector_store %arg2[%157, %c0_68, %c0_69], %160 {strides = array<i32>} : memref<8x2x32xf32, #tpu.memory_space<vmem>>, vector<1x2x32xf32>,
    %c4_i32 = arith.constant 4 : i32
    %c0_70 = arith.constant 0 : index
    %c0_71 = arith.constant 0 : index
    %161 = vector.load %arg3[%c0_70, %c0_71] : memref<2x32xf32, #tpu.memory_space<vmem>>, vector<2x32xf32>
    %162 = arith.index_cast %c4_i32 : i32 to index
    %c0_72 = arith.constant 0 : index
    %c0_73 = arith.constant 0 : index
    %163 = vector.load %arg0[%162, %c0_72, %c0_73] : memref<8x2x128xf32, #tpu.memory_space<vmem>>, vector<1x2x128xf32>
    %164 = vector.shape_cast %163 : vector<1x2x128xf32> to vector<2x128xf32>
    %165 = arith.truncf %161 : vector<2x32xf32> to vector<2x32xbf16>
    %cst_74 = arith.constant dense<0.000000e+00> : vector<2x128xf32>
    %166 = tpu.matmul %165, %4, %cst_74 {dimension_numbers = #tpu.dot_dimension_numbers<[1], [0], [0], [1], [0, 0, 1, 1], [], []>} : vector<2x32xbf16>, vector<32x128xbf16>, vector<2x128xf32> -> vector<2x128xf32>
    %167 = arith.addf %164, %166 : vector<2x128xf32>
    %168 = vector.extract_strided_slice %167 {offsets = [0, 0], sizes = [2, 32], strides = [1, 1]} : vector<2x128xf32> to vector<2x32xf32>
    %169 = arith.negf %168 : vector<2x32xf32>
    %170 = math.exp %169 : vector<2x32xf32>
    %cst_75 = arith.constant 1.000000e+00 : f32
    %171 = vector.broadcast %cst_75 : f32 to vector<2x32xf32>
    %172 = arith.addf %171, %170 : vector<2x32xf32>
    %173 = arith.divf %171, %172 : vector<2x32xf32>
    %174 = vector.extract_strided_slice %167 {offsets = [0, 32], sizes = [2, 32], strides = [1, 1]} : vector<2x128xf32> to vector<2x32xf32>
    %175 = arith.negf %174 : vector<2x32xf32>
    %176 = math.exp %175 : vector<2x32xf32>
    %cst_76 = arith.constant 1.000000e+00 : f32
    %177 = vector.broadcast %cst_76 : f32 to vector<2x32xf32>
    %178 = arith.addf %177, %176 : vector<2x32xf32>
    %179 = arith.divf %177, %178 : vector<2x32xf32>
    %180 = vector.extract_strided_slice %167 {offsets = [0, 64], sizes = [2, 32], strides = [1, 1]} : vector<2x128xf32> to vector<2x32xf32>
    %181 = math.tanh %180 : vector<2x32xf32>
    %182 = vector.extract_strided_slice %167 {offsets = [0, 96], sizes = [2, 32], strides = [1, 1]} : vector<2x128xf32> to vector<2x32xf32>
    %183 = arith.negf %182 : vector<2x32xf32>
    %184 = math.exp %183 : vector<2x32xf32>
    %cst_77 = arith.constant 1.000000e+00 : f32
    %185 = vector.broadcast %cst_77 : f32 to vector<2x32xf32>
    %186 = arith.addf %185, %184 : vector<2x32xf32>
    %187 = arith.divf %185, %186 : vector<2x32xf32>
    %c0_78 = arith.constant 0 : index
    %c0_79 = arith.constant 0 : index
    %188 = vector.load %arg4[%c0_78, %c0_79] : memref<2x32xf32, #tpu.memory_space<vmem>>, vector<2x32xf32>
    %189 = arith.mulf %179, %188 : vector<2x32xf32>
    %190 = arith.mulf %173, %181 : vector<2x32xf32>
    %191 = arith.addf %189, %190 : vector<2x32xf32>
    %192 = math.tanh %191 : vector<2x32xf32>
    %193 = arith.mulf %187, %192 : vector<2x32xf32>
    %c0_80 = arith.constant 0 : index
    %c0_81 = arith.constant 0 : index
    %194 = vector.load %arg4[%c0_80, %c0_81] : memref<2x32xf32, #tpu.memory_space<vmem>>, vector<2x32xf32>
    tpu.vector_store %arg4[%c0_80, %c0_81], %191 {strides = array<i32>} : memref<2x32xf32, #tpu.memory_space<vmem>>, vector<2x32xf32>,
    %c0_82 = arith.constant 0 : index
    %c0_83 = arith.constant 0 : index
    %195 = vector.load %arg3[%c0_82, %c0_83] : memref<2x32xf32, #tpu.memory_space<vmem>>, vector<2x32xf32>
    tpu.vector_store %arg3[%c0_82, %c0_83], %193 {strides = array<i32>} : memref<2x32xf32, #tpu.memory_space<vmem>>, vector<2x32xf32>,
    %196 = arith.index_cast %c4_i32 : i32 to index
    %c0_84 = arith.constant 0 : index
    %c0_85 = arith.constant 0 : index
    %197 = vector.load %arg2[%196, %c0_84, %c0_85] : memref<8x2x32xf32, #tpu.memory_space<vmem>>, vector<1x2x32xf32>
    %198 = vector.shape_cast %197 : vector<1x2x32xf32> to vector<2x32xf32>
    %199 = vector.shape_cast %193 : vector<2x32xf32> to vector<1x2x32xf32>
    tpu.vector_store %arg2[%196, %c0_84, %c0_85], %199 {strides = array<i32>} : memref<8x2x32xf32, #tpu.memory_space<vmem>>, vector<1x2x32xf32>,
    %c5_i32 = arith.constant 5 : i32
    %c0_86 = arith.constant 0 : index
    %c0_87 = arith.constant 0 : index
    %200 = vector.load %arg3[%c0_86, %c0_87] : memref<2x32xf32, #tpu.memory_space<vmem>>, vector<2x32xf32>
    %201 = arith.index_cast %c5_i32 : i32 to index
    %c0_88 = arith.constant 0 : index
    %c0_89 = arith.constant 0 : index
    %202 = vector.load %arg0[%201, %c0_88, %c0_89] : memref<8x2x128xf32, #tpu.memory_space<vmem>>, vector<1x2x128xf32>
    %203 = vector.shape_cast %202 : vector<1x2x128xf32> to vector<2x128xf32>
    %204 = arith.truncf %200 : vector<2x32xf32> to vector<2x32xbf16>
    %cst_90 = arith.constant dense<0.000000e+00> : vector<2x128xf32>
    %205 = tpu.matmul %204, %4, %cst_90 {dimension_numbers = #tpu.dot_dimension_numbers<[1], [0], [0], [1], [0, 0, 1, 1], [], []>} : vector<2x32xbf16>, vector<32x128xbf16>, vector<2x128xf32> -> vector<2x128xf32>
    %206 = arith.addf %203, %205 : vector<2x128xf32>
    %207 = vector.extract_strided_slice %206 {offsets = [0, 0], sizes = [2, 32], strides = [1, 1]} : vector<2x128xf32> to vector<2x32xf32>
    %208 = arith.negf %207 : vector<2x32xf32>
    %209 = math.exp %208 : vector<2x32xf32>
    %cst_91 = arith.constant 1.000000e+00 : f32
    %210 = vector.broadcast %cst_91 : f32 to vector<2x32xf32>
    %211 = arith.addf %210, %209 : vector<2x32xf32>
    %212 = arith.divf %210, %211 : vector<2x32xf32>
    %213 = vector.extract_strided_slice %206 {offsets = [0, 32], sizes = [2, 32], strides = [1, 1]} : vector<2x128xf32> to vector<2x32xf32>
    %214 = arith.negf %213 : vector<2x32xf32>
    %215 = math.exp %214 : vector<2x32xf32>
    %cst_92 = arith.constant 1.000000e+00 : f32
    %216 = vector.broadcast %cst_92 : f32 to vector<2x32xf32>
    %217 = arith.addf %216, %215 : vector<2x32xf32>
    %218 = arith.divf %216, %217 : vector<2x32xf32>
    %219 = vector.extract_strided_slice %206 {offsets = [0, 64], sizes = [2, 32], strides = [1, 1]} : vector<2x128xf32> to vector<2x32xf32>
    %220 = math.tanh %219 : vector<2x32xf32>
    %221 = vector.extract_strided_slice %206 {offsets = [0, 96], sizes = [2, 32], strides = [1, 1]} : vector<2x128xf32> to vector<2x32xf32>
    %222 = arith.negf %221 : vector<2x32xf32>
    %223 = math.exp %222 : vector<2x32xf32>
    %cst_93 = arith.constant 1.000000e+00 : f32
    %224 = vector.broadcast %cst_93 : f32 to vector<2x32xf32>
    %225 = arith.addf %224, %223 : vector<2x32xf32>
    %226 = arith.divf %224, %225 : vector<2x32xf32>
    %c0_94 = arith.constant 0 : index
    %c0_95 = arith.constant 0 : index
    %227 = vector.load %arg4[%c0_94, %c0_95] : memref<2x32xf32, #tpu.memory_space<vmem>>, vector<2x32xf32>
    %228 = arith.mulf %218, %227 : vector<2x32xf32>
    %229 = arith.mulf %212, %220 : vector<2x32xf32>
    %230 = arith.addf %228, %229 : vector<2x32xf32>
    %231 = math.tanh %230 : vector<2x32xf32>
    %232 = arith.mulf %226, %231 : vector<2x32xf32>
    %c0_96 = arith.constant 0 : index
    %c0_97 = arith.constant 0 : index
    %233 = vector.load %arg4[%c0_96, %c0_97] : memref<2x32xf32, #tpu.memory_space<vmem>>, vector<2x32xf32>
    tpu.vector_store %arg4[%c0_96, %c0_97], %230 {strides = array<i32>} : memref<2x32xf32, #tpu.memory_space<vmem>>, vector<2x32xf32>,
    %c0_98 = arith.constant 0 : index
    %c0_99 = arith.constant 0 : index
    %234 = vector.load %arg3[%c0_98, %c0_99] : memref<2x32xf32, #tpu.memory_space<vmem>>, vector<2x32xf32>
    tpu.vector_store %arg3[%c0_98, %c0_99], %232 {strides = array<i32>} : memref<2x32xf32, #tpu.memory_space<vmem>>, vector<2x32xf32>,
    %235 = arith.index_cast %c5_i32 : i32 to index
    %c0_100 = arith.constant 0 : index
    %c0_101 = arith.constant 0 : index
    %236 = vector.load %arg2[%235, %c0_100, %c0_101] : memref<8x2x32xf32, #tpu.memory_space<vmem>>, vector<1x2x32xf32>
    %237 = vector.shape_cast %236 : vector<1x2x32xf32> to vector<2x32xf32>
    %238 = vector.shape_cast %232 : vector<2x32xf32> to vector<1x2x32xf32>
    tpu.vector_store %arg2[%235, %c0_100, %c0_101], %238 {strides = array<i32>} : memref<8x2x32xf32, #tpu.memory_space<vmem>>, vector<1x2x32xf32>,
    %c6_i32 = arith.constant 6 : i32
    %c0_102 = arith.constant 0 : index
    %c0_103 = arith.constant 0 : index
    %239 = vector.load %arg3[%c0_102, %c0_103] : memref<2x32xf32, #tpu.memory_space<vmem>>, vector<2x32xf32>
    %240 = arith.index_cast %c6_i32 : i32 to index
    %c0_104 = arith.constant 0 : index
    %c0_105 = arith.constant 0 : index
    %241 = vector.load %arg0[%240, %c0_104, %c0_105] : memref<8x2x128xf32, #tpu.memory_space<vmem>>, vector<1x2x128xf32>
    %242 = vector.shape_cast %241 : vector<1x2x128xf32> to vector<2x128xf32>
    %243 = arith.truncf %239 : vector<2x32xf32> to vector<2x32xbf16>
    %cst_106 = arith.constant dense<0.000000e+00> : vector<2x128xf32>
    %244 = tpu.matmul %243, %4, %cst_106 {dimension_numbers = #tpu.dot_dimension_numbers<[1], [0], [0], [1], [0, 0, 1, 1], [], []>} : vector<2x32xbf16>, vector<32x128xbf16>, vector<2x128xf32> -> vector<2x128xf32>
    %245 = arith.addf %242, %244 : vector<2x128xf32>
    %246 = vector.extract_strided_slice %245 {offsets = [0, 0], sizes = [2, 32], strides = [1, 1]} : vector<2x128xf32> to vector<2x32xf32>
    %247 = arith.negf %246 : vector<2x32xf32>
    %248 = math.exp %247 : vector<2x32xf32>
    %cst_107 = arith.constant 1.000000e+00 : f32
    %249 = vector.broadcast %cst_107 : f32 to vector<2x32xf32>
    %250 = arith.addf %249, %248 : vector<2x32xf32>
    %251 = arith.divf %249, %250 : vector<2x32xf32>
    %252 = vector.extract_strided_slice %245 {offsets = [0, 32], sizes = [2, 32], strides = [1, 1]} : vector<2x128xf32> to vector<2x32xf32>
    %253 = arith.negf %252 : vector<2x32xf32>
    %254 = math.exp %253 : vector<2x32xf32>
    %cst_108 = arith.constant 1.000000e+00 : f32
    %255 = vector.broadcast %cst_108 : f32 to vector<2x32xf32>
    %256 = arith.addf %255, %254 : vector<2x32xf32>
    %257 = arith.divf %255, %256 : vector<2x32xf32>
    %258 = vector.extract_strided_slice %245 {offsets = [0, 64], sizes = [2, 32], strides = [1, 1]} : vector<2x128xf32> to vector<2x32xf32>
    %259 = math.tanh %258 : vector<2x32xf32>
    %260 = vector.extract_strided_slice %245 {offsets = [0, 96], sizes = [2, 32], strides = [1, 1]} : vector<2x128xf32> to vector<2x32xf32>
    %261 = arith.negf %260 : vector<2x32xf32>
    %262 = math.exp %261 : vector<2x32xf32>
    %cst_109 = arith.constant 1.000000e+00 : f32
    %263 = vector.broadcast %cst_109 : f32 to vector<2x32xf32>
    %264 = arith.addf %263, %262 : vector<2x32xf32>
    %265 = arith.divf %263, %264 : vector<2x32xf32>
    %c0_110 = arith.constant 0 : index
    %c0_111 = arith.constant 0 : index
    %266 = vector.load %arg4[%c0_110, %c0_111] : memref<2x32xf32, #tpu.memory_space<vmem>>, vector<2x32xf32>
    %267 = arith.mulf %257, %266 : vector<2x32xf32>
    %268 = arith.mulf %251, %259 : vector<2x32xf32>
    %269 = arith.addf %267, %268 : vector<2x32xf32>
    %270 = math.tanh %269 : vector<2x32xf32>
    %271 = arith.mulf %265, %270 : vector<2x32xf32>
    %c0_112 = arith.constant 0 : index
    %c0_113 = arith.constant 0 : index
    %272 = vector.load %arg4[%c0_112, %c0_113] : memref<2x32xf32, #tpu.memory_space<vmem>>, vector<2x32xf32>
    tpu.vector_store %arg4[%c0_112, %c0_113], %269 {strides = array<i32>} : memref<2x32xf32, #tpu.memory_space<vmem>>, vector<2x32xf32>,
    %c0_114 = arith.constant 0 : index
    %c0_115 = arith.constant 0 : index
    %273 = vector.load %arg3[%c0_114, %c0_115] : memref<2x32xf32, #tpu.memory_space<vmem>>, vector<2x32xf32>
    tpu.vector_store %arg3[%c0_114, %c0_115], %271 {strides = array<i32>} : memref<2x32xf32, #tpu.memory_space<vmem>>, vector<2x32xf32>,
    %274 = arith.index_cast %c6_i32 : i32 to index
    %c0_116 = arith.constant 0 : index
    %c0_117 = arith.constant 0 : index
    %275 = vector.load %arg2[%274, %c0_116, %c0_117] : memref<8x2x32xf32, #tpu.memory_space<vmem>>, vector<1x2x32xf32>
    %276 = vector.shape_cast %275 : vector<1x2x32xf32> to vector<2x32xf32>
    %277 = vector.shape_cast %271 : vector<2x32xf32> to vector<1x2x32xf32>
    tpu.vector_store %arg2[%274, %c0_116, %c0_117], %277 {strides = array<i32>} : memref<8x2x32xf32, #tpu.memory_space<vmem>>, vector<1x2x32xf32>,
    %c7_i32 = arith.constant 7 : i32
    %c0_118 = arith.constant 0 : index
    %c0_119 = arith.constant 0 : index
    %278 = vector.load %arg3[%c0_118, %c0_119] : memref<2x32xf32, #tpu.memory_space<vmem>>, vector<2x32xf32>
    %279 = arith.index_cast %c7_i32 : i32 to index
    %c0_120 = arith.constant 0 : index
    %c0_121 = arith.constant 0 : index
    %280 = vector.load %arg0[%279, %c0_120, %c0_121] : memref<8x2x128xf32, #tpu.memory_space<vmem>>, vector<1x2x128xf32>
    %281 = vector.shape_cast %280 : vector<1x2x128xf32> to vector<2x128xf32>
    %282 = arith.truncf %278 : vector<2x32xf32> to vector<2x32xbf16>
    %cst_122 = arith.constant dense<0.000000e+00> : vector<2x128xf32>
    %283 = tpu.matmul %282, %4, %cst_122 {dimension_numbers = #tpu.dot_dimension_numbers<[1], [0], [0], [1], [0, 0, 1, 1], [], []>} : vector<2x32xbf16>, vector<32x128xbf16>, vector<2x128xf32> -> vector<2x128xf32>
    %284 = arith.addf %281, %283 : vector<2x128xf32>
    %285 = vector.extract_strided_slice %284 {offsets = [0, 0], sizes = [2, 32], strides = [1, 1]} : vector<2x128xf32> to vector<2x32xf32>
    %286 = arith.negf %285 : vector<2x32xf32>
    %287 = math.exp %286 : vector<2x32xf32>
    %cst_123 = arith.constant 1.000000e+00 : f32
    %288 = vector.broadcast %cst_123 : f32 to vector<2x32xf32>
    %289 = arith.addf %288, %287 : vector<2x32xf32>
    %290 = arith.divf %288, %289 : vector<2x32xf32>
    %291 = vector.extract_strided_slice %284 {offsets = [0, 32], sizes = [2, 32], strides = [1, 1]} : vector<2x128xf32> to vector<2x32xf32>
    %292 = arith.negf %291 : vector<2x32xf32>
    %293 = math.exp %292 : vector<2x32xf32>
    %cst_124 = arith.constant 1.000000e+00 : f32
    %294 = vector.broadcast %cst_124 : f32 to vector<2x32xf32>
    %295 = arith.addf %294, %293 : vector<2x32xf32>
    %296 = arith.divf %294, %295 : vector<2x32xf32>
    %297 = vector.extract_strided_slice %284 {offsets = [0, 64], sizes = [2, 32], strides = [1, 1]} : vector<2x128xf32> to vector<2x32xf32>
    %298 = math.tanh %297 : vector<2x32xf32>
    %299 = vector.extract_strided_slice %284 {offsets = [0, 96], sizes = [2, 32], strides = [1, 1]} : vector<2x128xf32> to vector<2x32xf32>
    %300 = arith.negf %299 : vector<2x32xf32>
    %301 = math.exp %300 : vector<2x32xf32>
    %cst_125 = arith.constant 1.000000e+00 : f32
    %302 = vector.broadcast %cst_125 : f32 to vector<2x32xf32>
    %303 = arith.addf %302, %301 : vector<2x32xf32>
    %304 = arith.divf %302, %303 : vector<2x32xf32>
    %c0_126 = arith.constant 0 : index
    %c0_127 = arith.constant 0 : index
    %305 = vector.load %arg4[%c0_126, %c0_127] : memref<2x32xf32, #tpu.memory_space<vmem>>, vector<2x32xf32>
    %306 = arith.mulf %296, %305 : vector<2x32xf32>
    %307 = arith.mulf %290, %298 : vector<2x32xf32>
    %308 = arith.addf %306, %307 : vector<2x32xf32>
    %309 = math.tanh %308 : vector<2x32xf32>
    %310 = arith.mulf %304, %309 : vector<2x32xf32>
    %c0_128 = arith.constant 0 : index
    %c0_129 = arith.constant 0 : index
    %311 = vector.load %arg4[%c0_128, %c0_129] : memref<2x32xf32, #tpu.memory_space<vmem>>, vector<2x32xf32>
    tpu.vector_store %arg4[%c0_128, %c0_129], %308 {strides = array<i32>} : memref<2x32xf32, #tpu.memory_space<vmem>>, vector<2x32xf32>,
    %c0_130 = arith.constant 0 : index
    %c0_131 = arith.constant 0 : index
    %312 = vector.load %arg3[%c0_130, %c0_131] : memref<2x32xf32, #tpu.memory_space<vmem>>, vector<2x32xf32>
    tpu.vector_store %arg3[%c0_130, %c0_131], %310 {strides = array<i32>} : memref<2x32xf32, #tpu.memory_space<vmem>>, vector<2x32xf32>,
    %313 = arith.index_cast %c7_i32 : i32 to index
    %c0_132 = arith.constant 0 : index
    %c0_133 = arith.constant 0 : index
    %314 = vector.load %arg2[%313, %c0_132, %c0_133] : memref<8x2x32xf32, #tpu.memory_space<vmem>>, vector<1x2x32xf32>
    %315 = vector.shape_cast %314 : vector<1x2x32xf32> to vector<2x32xf32>
    %316 = vector.shape_cast %310 : vector<2x32xf32> to vector<1x2x32xf32>
    tpu.vector_store %arg2[%313, %c0_132, %c0_133], %316 {strides = array<i32>} : memref<8x2x32xf32, #tpu.memory_space<vmem>>, vector<1x2x32xf32>,
    %c8_i32 = arith.constant 8 : i32
    return
  }
}

module attributes {stable_mosaic.version = 11 : i64} {
  func.func @_mha_kernel(%arg0: i32, %arg1: memref<1x8x32xf32, #tpu.memory_space<vmem>>, %arg2: memref<32x96xbf16, #tpu.memory_space<vmem>>, %arg3: memref<1x96xf32, #tpu.memory_space<vmem>>, %arg4: memref<32x32xbf16, #tpu.memory_space<vmem>>, %arg5: memref<1x32xf32, #tpu.memory_space<vmem>>, %arg6: memref<1x32xf32, #tpu.memory_space<vmem>>, %arg7: memref<1x32xf32, #tpu.memory_space<vmem>>, %arg8: memref<1x8x32xf32, #tpu.memory_space<vmem>>) attributes {dimension_semantics = [#tpu.dimension_semantics<parallel>], iteration_bounds = array<i64: 2>, scalar_prefetch = 0 : i64, scratch_operands = 0 : i64, tpu.core_type = #tpu.core_type<tc>, window_params = [{transform_indices = @transform_0, window_bounds = array<i64: 1, 8, 32>}, {pipeline_mode = #tpu.pipeline_mode<synchronous>, transform_indices = @transform_1, window_bounds = array<i64: 32, 96>}, {pipeline_mode = #tpu.pipeline_mode<synchronous>, transform_indices = @transform_2, window_bounds = array<i64: 1, 96>}, {pipeline_mode = #tpu.pipeline_mode<synchronous>, transform_indices = @transform_3, window_bounds = array<i64: 32, 32>}, {pipeline_mode = #tpu.pipeline_mode<synchronous>, transform_indices = @transform_4, window_bounds = array<i64: 1, 32>}, {pipeline_mode = #tpu.pipeline_mode<synchronous>, transform_indices = @transform_5, window_bounds = array<i64: 1, 32>}, {pipeline_mode = #tpu.pipeline_mode<synchronous>, transform_indices = @transform_6, window_bounds = array<i64: 1, 32>}, {transform_indices = @transform_7, window_bounds = array<i64: 1, 8, 32>}]} {
    %c0 = arith.constant 0 : index
    %c0_0 = arith.constant 0 : index
    %c0_1 = arith.constant 0 : index
    %0 = vector.load %arg1[%c0, %c0_0, %c0_1] : memref<1x8x32xf32, #tpu.memory_space<vmem>>, vector<1x8x32xf32>
    %1 = vector.shape_cast %0 : vector<1x8x32xf32> to vector<8x32xf32>
    %2 = arith.truncf %1 : vector<8x32xf32> to vector<8x32xbf16>
    %c0_2 = arith.constant 0 : index
    %c0_3 = arith.constant 0 : index
    %3 = vector.load %arg2[%c0_2, %c0_3] : memref<32x96xbf16, #tpu.memory_space<vmem>>, vector<32x96xbf16>
    %cst = arith.constant dense<0.000000e+00> : vector<8x96xf32>
    %4 = tpu.matmul %2, %3, %cst {dimension_numbers = #tpu.dot_dimension_numbers<[1], [0], [0], [1], [0, 0, 1, 1], [], []>} : vector<8x32xbf16>, vector<32x96xbf16>, vector<8x96xf32> -> vector<8x96xf32>
    %c0_4 = arith.constant 0 : index
    %c0_5 = arith.constant 0 : index
    %5 = vector.load %arg3[%c0_4, %c0_5] : memref<1x96xf32, #tpu.memory_space<vmem>>, vector<1x96xf32>
    %6 = vector.broadcast %5 : vector<1x96xf32> to vector<8x96xf32>
    %7 = arith.addf %4, %6 : vector<8x96xf32>
    %8 = vector.extract_strided_slice %7 {offsets = [0, 0], sizes = [8, 8], strides = [1, 1]} : vector<8x96xf32> to vector<8x8xf32>
    %9 = vector.extract_strided_slice %7 {offsets = [0, 32], sizes = [8, 8], strides = [1, 1]} : vector<8x96xf32> to vector<8x8xf32>
    %10 = vector.extract_strided_slice %7 {offsets = [0, 64], sizes = [8, 8], strides = [1, 1]} : vector<8x96xf32> to vector<8x8xf32>
    %11 = arith.truncf %8 : vector<8x8xf32> to vector<8x8xbf16>
    %12 = arith.truncf %9 : vector<8x8xf32> to vector<8x8xbf16>
    %cst_6 = arith.constant dense<0.000000e+00> : vector<8x8xf32>
    %13 = tpu.matmul %11, %12, %cst_6 {dimension_numbers = #tpu.dot_dimension_numbers<[1], [1], [0], [0], [0, 0, 1, 0], [], []>} : vector<8x8xbf16>, vector<8x8xbf16>, vector<8x8xf32> -> vector<8x8xf32>
    %cst_7 = arith.constant 0.353553385 : f32
    %14 = vector.broadcast %cst_7 : f32 to vector<8x8xf32>
    %15 = arith.mulf %13, %14 : vector<8x8xf32>
    %cst_8 = arith.constant dense<0xFF800000> : vector<8xf32>
    %16 = vector.multi_reduction <maximumf>, %15, %cst_8 [1] : vector<8x8xf32> to vector<8xf32>
    %17 = vector.shape_cast %16 : vector<8xf32> to vector<8x1xf32>
    %18 = vector.broadcast %17 : vector<8x1xf32> to vector<8x8xf32>
    %19 = arith.subf %15, %18 : vector<8x8xf32>
    %20 = math.exp %19 : vector<8x8xf32>
    %cst_9 = arith.constant dense<0.000000e+00> : vector<8xf32>
    %21 = vector.multi_reduction <add>, %20, %cst_9 [1] : vector<8x8xf32> to vector<8xf32>
    %22 = vector.shape_cast %21 : vector<8xf32> to vector<8x1xf32>
    %23 = tpu.reciprocal %22 {approx = true} : vector<8x1xf32> -> vector<8x1xf32>
    %24 = vector.broadcast %23 : vector<8x1xf32> to vector<8x8xf32>
    %25 = arith.mulf %20, %24 : vector<8x8xf32>
    %26 = arith.truncf %25 : vector<8x8xf32> to vector<8x8xbf16>
    %27 = arith.truncf %10 : vector<8x8xf32> to vector<8x8xbf16>
    %cst_10 = arith.constant dense<0.000000e+00> : vector<8x8xf32>
    %28 = tpu.matmul %26, %27, %cst_10 {dimension_numbers = #tpu.dot_dimension_numbers<[1], [0], [0], [1], [0, 0, 1, 1], [], []>} : vector<8x8xbf16>, vector<8x8xbf16>, vector<8x8xf32> -> vector<8x8xf32>
    %29 = vector.extract_strided_slice %7 {offsets = [0, 8], sizes = [8, 8], strides = [1, 1]} : vector<8x96xf32> to vector<8x8xf32>
    %30 = vector.extract_strided_slice %7 {offsets = [0, 40], sizes = [8, 8], strides = [1, 1]} : vector<8x96xf32> to vector<8x8xf32>
    %31 = vector.extract_strided_slice %7 {offsets = [0, 72], sizes = [8, 8], strides = [1, 1]} : vector<8x96xf32> to vector<8x8xf32>
    %32 = arith.truncf %29 : vector<8x8xf32> to vector<8x8xbf16>
    %33 = arith.truncf %30 : vector<8x8xf32> to vector<8x8xbf16>
    %cst_11 = arith.constant dense<0.000000e+00> : vector<8x8xf32>
    %34 = tpu.matmul %32, %33, %cst_11 {dimension_numbers = #tpu.dot_dimension_numbers<[1], [1], [0], [0], [0, 0, 1, 0], [], []>} : vector<8x8xbf16>, vector<8x8xbf16>, vector<8x8xf32> -> vector<8x8xf32>
    %cst_12 = arith.constant 0.353553385 : f32
    %35 = vector.broadcast %cst_12 : f32 to vector<8x8xf32>
    %36 = arith.mulf %34, %35 : vector<8x8xf32>
    %cst_13 = arith.constant dense<0xFF800000> : vector<8xf32>
    %37 = vector.multi_reduction <maximumf>, %36, %cst_13 [1] : vector<8x8xf32> to vector<8xf32>
    %38 = vector.shape_cast %37 : vector<8xf32> to vector<8x1xf32>
    %39 = vector.broadcast %38 : vector<8x1xf32> to vector<8x8xf32>
    %40 = arith.subf %36, %39 : vector<8x8xf32>
    %41 = math.exp %40 : vector<8x8xf32>
    %cst_14 = arith.constant dense<0.000000e+00> : vector<8xf32>
    %42 = vector.multi_reduction <add>, %41, %cst_14 [1] : vector<8x8xf32> to vector<8xf32>
    %43 = vector.shape_cast %42 : vector<8xf32> to vector<8x1xf32>
    %44 = tpu.reciprocal %43 {approx = true} : vector<8x1xf32> -> vector<8x1xf32>
    %45 = vector.broadcast %44 : vector<8x1xf32> to vector<8x8xf32>
    %46 = arith.mulf %41, %45 : vector<8x8xf32>
    %47 = arith.truncf %46 : vector<8x8xf32> to vector<8x8xbf16>
    %48 = arith.truncf %31 : vector<8x8xf32> to vector<8x8xbf16>
    %cst_15 = arith.constant dense<0.000000e+00> : vector<8x8xf32>
    %49 = tpu.matmul %47, %48, %cst_15 {dimension_numbers = #tpu.dot_dimension_numbers<[1], [0], [0], [1], [0, 0, 1, 1], [], []>} : vector<8x8xbf16>, vector<8x8xbf16>, vector<8x8xf32> -> vector<8x8xf32>
    %50 = vector.extract_strided_slice %7 {offsets = [0, 16], sizes = [8, 8], strides = [1, 1]} : vector<8x96xf32> to vector<8x8xf32>
    %51 = vector.extract_strided_slice %7 {offsets = [0, 48], sizes = [8, 8], strides = [1, 1]} : vector<8x96xf32> to vector<8x8xf32>
    %52 = vector.extract_strided_slice %7 {offsets = [0, 80], sizes = [8, 8], strides = [1, 1]} : vector<8x96xf32> to vector<8x8xf32>
    %53 = arith.truncf %50 : vector<8x8xf32> to vector<8x8xbf16>
    %54 = arith.truncf %51 : vector<8x8xf32> to vector<8x8xbf16>
    %cst_16 = arith.constant dense<0.000000e+00> : vector<8x8xf32>
    %55 = tpu.matmul %53, %54, %cst_16 {dimension_numbers = #tpu.dot_dimension_numbers<[1], [1], [0], [0], [0, 0, 1, 0], [], []>} : vector<8x8xbf16>, vector<8x8xbf16>, vector<8x8xf32> -> vector<8x8xf32>
    %cst_17 = arith.constant 0.353553385 : f32
    %56 = vector.broadcast %cst_17 : f32 to vector<8x8xf32>
    %57 = arith.mulf %55, %56 : vector<8x8xf32>
    %cst_18 = arith.constant dense<0xFF800000> : vector<8xf32>
    %58 = vector.multi_reduction <maximumf>, %57, %cst_18 [1] : vector<8x8xf32> to vector<8xf32>
    %59 = vector.shape_cast %58 : vector<8xf32> to vector<8x1xf32>
    %60 = vector.broadcast %59 : vector<8x1xf32> to vector<8x8xf32>
    %61 = arith.subf %57, %60 : vector<8x8xf32>
    %62 = math.exp %61 : vector<8x8xf32>
    %cst_19 = arith.constant dense<0.000000e+00> : vector<8xf32>
    %63 = vector.multi_reduction <add>, %62, %cst_19 [1] : vector<8x8xf32> to vector<8xf32>
    %64 = vector.shape_cast %63 : vector<8xf32> to vector<8x1xf32>
    %65 = tpu.reciprocal %64 {approx = true} : vector<8x1xf32> -> vector<8x1xf32>
    %66 = vector.broadcast %65 : vector<8x1xf32> to vector<8x8xf32>
    %67 = arith.mulf %62, %66 : vector<8x8xf32>
    %68 = arith.truncf %67 : vector<8x8xf32> to vector<8x8xbf16>
    %69 = arith.truncf %52 : vector<8x8xf32> to vector<8x8xbf16>
    %cst_20 = arith.constant dense<0.000000e+00> : vector<8x8xf32>
    %70 = tpu.matmul %68, %69, %cst_20 {dimension_numbers = #tpu.dot_dimension_numbers<[1], [0], [0], [1], [0, 0, 1, 1], [], []>} : vector<8x8xbf16>, vector<8x8xbf16>, vector<8x8xf32> -> vector<8x8xf32>
    %71 = vector.extract_strided_slice %7 {offsets = [0, 24], sizes = [8, 8], strides = [1, 1]} : vector<8x96xf32> to vector<8x8xf32>
    %72 = vector.extract_strided_slice %7 {offsets = [0, 56], sizes = [8, 8], strides = [1, 1]} : vector<8x96xf32> to vector<8x8xf32>
    %73 = vector.extract_strided_slice %7 {offsets = [0, 88], sizes = [8, 8], strides = [1, 1]} : vector<8x96xf32> to vector<8x8xf32>
    %74 = arith.truncf %71 : vector<8x8xf32> to vector<8x8xbf16>
    %75 = arith.truncf %72 : vector<8x8xf32> to vector<8x8xbf16>
    %cst_21 = arith.constant dense<0.000000e+00> : vector<8x8xf32>
    %76 = tpu.matmul %74, %75, %cst_21 {dimension_numbers = #tpu.dot_dimension_numbers<[1], [1], [0], [0], [0, 0, 1, 0], [], []>} : vector<8x8xbf16>, vector<8x8xbf16>, vector<8x8xf32> -> vector<8x8xf32>
    %cst_22 = arith.constant 0.353553385 : f32
    %77 = vector.broadcast %cst_22 : f32 to vector<8x8xf32>
    %78 = arith.mulf %76, %77 : vector<8x8xf32>
    %cst_23 = arith.constant dense<0xFF800000> : vector<8xf32>
    %79 = vector.multi_reduction <maximumf>, %78, %cst_23 [1] : vector<8x8xf32> to vector<8xf32>
    %80 = vector.shape_cast %79 : vector<8xf32> to vector<8x1xf32>
    %81 = vector.broadcast %80 : vector<8x1xf32> to vector<8x8xf32>
    %82 = arith.subf %78, %81 : vector<8x8xf32>
    %83 = math.exp %82 : vector<8x8xf32>
    %cst_24 = arith.constant dense<0.000000e+00> : vector<8xf32>
    %84 = vector.multi_reduction <add>, %83, %cst_24 [1] : vector<8x8xf32> to vector<8xf32>
    %85 = vector.shape_cast %84 : vector<8xf32> to vector<8x1xf32>
    %86 = tpu.reciprocal %85 {approx = true} : vector<8x1xf32> -> vector<8x1xf32>
    %87 = vector.broadcast %86 : vector<8x1xf32> to vector<8x8xf32>
    %88 = arith.mulf %83, %87 : vector<8x8xf32>
    %89 = arith.truncf %88 : vector<8x8xf32> to vector<8x8xbf16>
    %90 = arith.truncf %73 : vector<8x8xf32> to vector<8x8xbf16>
    %cst_25 = arith.constant dense<0.000000e+00> : vector<8x8xf32>
    %91 = tpu.matmul %89, %90, %cst_25 {dimension_numbers = #tpu.dot_dimension_numbers<[1], [0], [0], [1], [0, 0, 1, 1], [], []>} : vector<8x8xbf16>, vector<8x8xbf16>, vector<8x8xf32> -> vector<8x8xf32>
    %92 = tpu.concatenate %28, %49, %70, %91 in 1 : vector<8x8xf32>, vector<8x8xf32>, vector<8x8xf32>, vector<8x8xf32> -> vector<8x32xf32>
    %93 = arith.truncf %92 : vector<8x32xf32> to vector<8x32xbf16>
    %c0_26 = arith.constant 0 : index
    %c0_27 = arith.constant 0 : index
    %94 = vector.load %arg4[%c0_26, %c0_27] : memref<32x32xbf16, #tpu.memory_space<vmem>>, vector<32x32xbf16>
    %cst_28 = arith.constant dense<0.000000e+00> : vector<8x32xf32>
    %95 = tpu.matmul %93, %94, %cst_28 {dimension_numbers = #tpu.dot_dimension_numbers<[1], [0], [0], [1], [0, 0, 1, 1], [], []>} : vector<8x32xbf16>, vector<32x32xbf16>, vector<8x32xf32> -> vector<8x32xf32>
    %96 = arith.addf %1, %95 : vector<8x32xf32>
    %c0_29 = arith.constant 0 : index
    %c0_30 = arith.constant 0 : index
    %97 = vector.load %arg5[%c0_29, %c0_30] : memref<1x32xf32, #tpu.memory_space<vmem>>, vector<1x32xf32>
    %98 = vector.broadcast %97 : vector<1x32xf32> to vector<8x32xf32>
    %99 = arith.addf %96, %98 : vector<8x32xf32>
    %c0_31 = arith.constant 0 : index
    %c0_32 = arith.constant 0 : index
    %c0_33 = arith.constant 0 : index
    %100 = vector.load %arg8[%c0_31, %c0_32, %c0_33] : memref<1x8x32xf32, #tpu.memory_space<vmem>>, vector<1x8x32xf32>
    %101 = vector.shape_cast %100 : vector<1x8x32xf32> to vector<8x32xf32>
    %102 = vector.shape_cast %99 : vector<8x32xf32> to vector<1x8x32xf32>
    tpu.vector_store %arg8[%c0_31, %c0_32, %c0_33], %102 {strides = array<i32>} : memref<1x8x32xf32, #tpu.memory_space<vmem>>, vector<1x8x32xf32>,
    return
  }
  func.func @transform_0(%arg0: i32) -> (i32, i32, i32) {
    %c0_i32 = arith.constant 0 : i32
    %c0_i32_0 = arith.constant 0 : i32
    %c0_i32_1 = arith.constant 0 : i32
    return %arg0, %c0_i32, %c0_i32_0 : i32, i32, i32
  }
  func.func @transform_1(%arg0: i32) -> (i32, i32) {
    %c0_i32 = arith.constant 0 : i32
    %c0_i32_0 = arith.constant 0 : i32
    %c0_i32_1 = arith.constant 0 : i32
    return %c0_i32, %c0_i32_0 : i32, i32
  }
  func.func @transform_2(%arg0: i32) -> (i32, i32) {
    %c0_i32 = arith.constant 0 : i32
    %c0_i32_0 = arith.constant 0 : i32
    %c0_i32_1 = arith.constant 0 : i32
    return %c0_i32, %c0_i32_0 : i32, i32
  }
  func.func @transform_3(%arg0: i32) -> (i32, i32) {
    %c0_i32 = arith.constant 0 : i32
    %c0_i32_0 = arith.constant 0 : i32
    %c0_i32_1 = arith.constant 0 : i32
    return %c0_i32, %c0_i32_0 : i32, i32
  }
  func.func @transform_4(%arg0: i32) -> (i32, i32) {
    %c0_i32 = arith.constant 0 : i32
    %c0_i32_0 = arith.constant 0 : i32
    %c0_i32_1 = arith.constant 0 : i32
    return %c0_i32, %c0_i32_0 : i32, i32
  }
  func.func @transform_5(%arg0: i32) -> (i32, i32) {
    %c0_i32 = arith.constant 0 : i32
    %c0_i32_0 = arith.constant 0 : i32
    %c0_i32_1 = arith.constant 0 : i32
    return %c0_i32, %c0_i32_0 : i32, i32
  }
  func.func @transform_6(%arg0: i32) -> (i32, i32) {
    %c0_i32 = arith.constant 0 : i32
    %c0_i32_0 = arith.constant 0 : i32
    %c0_i32_1 = arith.constant 0 : i32
    return %c0_i32, %c0_i32_0 : i32, i32
  }
  func.func @transform_7(%arg0: i32) -> (i32, i32, i32) {
    %c0_i32 = arith.constant 0 : i32
    %c0_i32_0 = arith.constant 0 : i32
    %c0_i32_1 = arith.constant 0 : i32
    return %arg0, %c0_i32, %c0_i32_0 : i32, i32, i32
  }
}

module attributes {stable_mosaic.version = 11 : i64} {
  func.func @_mha_kernel(%arg0: i32, %arg1: memref<1x8x32xf32, #tpu.memory_space<vmem>>, %arg2: memref<32x96xbf16, #tpu.memory_space<vmem>>, %arg3: memref<1x96xf32, #tpu.memory_space<vmem>>, %arg4: memref<32x32xbf16, #tpu.memory_space<vmem>>, %arg5: memref<1x32xf32, #tpu.memory_space<vmem>>, %arg6: memref<1x32xf32, #tpu.memory_space<vmem>>, %arg7: memref<1x32xf32, #tpu.memory_space<vmem>>, %arg8: memref<1x8x32xf32, #tpu.memory_space<vmem>>) attributes {dimension_semantics = [#tpu.dimension_semantics<parallel>], iteration_bounds = array<i64: 2>, scalar_prefetch = 0 : i64, scratch_operands = 0 : i64, tpu.core_type = #tpu.core_type<tc>, window_params = [{transform_indices = @transform_0, window_bounds = array<i64: 1, 8, 32>}, {pipeline_mode = #tpu.pipeline_mode<synchronous>, transform_indices = @transform_1, window_bounds = array<i64: 32, 96>}, {pipeline_mode = #tpu.pipeline_mode<synchronous>, transform_indices = @transform_2, window_bounds = array<i64: 1, 96>}, {pipeline_mode = #tpu.pipeline_mode<synchronous>, transform_indices = @transform_3, window_bounds = array<i64: 32, 32>}, {pipeline_mode = #tpu.pipeline_mode<synchronous>, transform_indices = @transform_4, window_bounds = array<i64: 1, 32>}, {pipeline_mode = #tpu.pipeline_mode<synchronous>, transform_indices = @transform_5, window_bounds = array<i64: 1, 32>}, {pipeline_mode = #tpu.pipeline_mode<synchronous>, transform_indices = @transform_6, window_bounds = array<i64: 1, 32>}, {transform_indices = @transform_7, window_bounds = array<i64: 1, 8, 32>}]} {
    %c0 = arith.constant 0 : index
    %c0_0 = arith.constant 0 : index
    %c0_1 = arith.constant 0 : index
    %0 = vector.load %arg1[%c0, %c0_0, %c0_1] : memref<1x8x32xf32, #tpu.memory_space<vmem>>, vector<1x8x32xf32>
    %1 = vector.shape_cast %0 : vector<1x8x32xf32> to vector<8x32xf32>
    %2 = arith.truncf %1 : vector<8x32xf32> to vector<8x32xbf16>
    %c0_2 = arith.constant 0 : index
    %c0_3 = arith.constant 0 : index
    %3 = vector.load %arg2[%c0_2, %c0_3] : memref<32x96xbf16, #tpu.memory_space<vmem>>, vector<32x96xbf16>
    %cst = arith.constant dense<0.000000e+00> : vector<8x96xf32>
    %4 = tpu.matmul %2, %3, %cst {dimension_numbers = #tpu.dot_dimension_numbers<[1], [0], [0], [1], [0, 0, 1, 1], [], []>} : vector<8x32xbf16>, vector<32x96xbf16>, vector<8x96xf32> -> vector<8x96xf32>
    %c0_4 = arith.constant 0 : index
    %c0_5 = arith.constant 0 : index
    %5 = vector.load %arg3[%c0_4, %c0_5] : memref<1x96xf32, #tpu.memory_space<vmem>>, vector<1x96xf32>
    %6 = vector.broadcast %5 : vector<1x96xf32> to vector<8x96xf32>
    %7 = arith.addf %4, %6 : vector<8x96xf32>
    %8 = vector.extract_strided_slice %7 {offsets = [0, 0], sizes = [8, 8], strides = [1, 1]} : vector<8x96xf32> to vector<8x8xf32>
    %9 = vector.extract_strided_slice %7 {offsets = [0, 32], sizes = [8, 8], strides = [1, 1]} : vector<8x96xf32> to vector<8x8xf32>
    %10 = vector.extract_strided_slice %7 {offsets = [0, 64], sizes = [8, 8], strides = [1, 1]} : vector<8x96xf32> to vector<8x8xf32>
    %11 = arith.truncf %8 : vector<8x8xf32> to vector<8x8xbf16>
    %12 = arith.truncf %9 : vector<8x8xf32> to vector<8x8xbf16>
    %cst_6 = arith.constant dense<0.000000e+00> : vector<8x8xf32>
    %13 = tpu.matmul %11, %12, %cst_6 {dimension_numbers = #tpu.dot_dimension_numbers<[1], [1], [0], [0], [0, 0, 1, 0], [], []>} : vector<8x8xbf16>, vector<8x8xbf16>, vector<8x8xf32> -> vector<8x8xf32>
    %cst_7 = arith.constant 0.353553385 : f32
    %14 = vector.broadcast %cst_7 : f32 to vector<8x8xf32>
    %15 = arith.mulf %13, %14 : vector<8x8xf32>
    %cst_8 = arith.constant dense<0xFF800000> : vector<8xf32>
    %16 = vector.multi_reduction <maximumf>, %15, %cst_8 [1] : vector<8x8xf32> to vector<8xf32>
    %17 = vector.shape_cast %16 : vector<8xf32> to vector<8x1xf32>
    %18 = vector.broadcast %17 : vector<8x1xf32> to vector<8x8xf32>
    %19 = arith.subf %15, %18 : vector<8x8xf32>
    %20 = math.exp %19 : vector<8x8xf32>
    %cst_9 = arith.constant dense<0.000000e+00> : vector<8xf32>
    %21 = vector.multi_reduction <add>, %20, %cst_9 [1] : vector<8x8xf32> to vector<8xf32>
    %22 = vector.shape_cast %21 : vector<8xf32> to vector<8x1xf32>
    %23 = tpu.reciprocal %22 {approx = true} : vector<8x1xf32> -> vector<8x1xf32>
    %24 = vector.broadcast %23 : vector<8x1xf32> to vector<8x8xf32>
    %25 = arith.mulf %20, %24 : vector<8x8xf32>
    %26 = arith.truncf %25 : vector<8x8xf32> to vector<8x8xbf16>
    %27 = arith.truncf %10 : vector<8x8xf32> to vector<8x8xbf16>
    %cst_10 = arith.constant dense<0.000000e+00> : vector<8x8xf32>
    %28 = tpu.matmul %26, %27, %cst_10 {dimension_numbers = #tpu.dot_dimension_numbers<[1], [0], [0], [1], [0, 0, 1, 1], [], []>} : vector<8x8xbf16>, vector<8x8xbf16>, vector<8x8xf32> -> vector<8x8xf32>
    %29 = vector.extract_strided_slice %7 {offsets = [0, 8], sizes = [8, 8], strides = [1, 1]} : vector<8x96xf32> to vector<8x8xf32>
    %30 = vector.extract_strided_slice %7 {offsets = [0, 40], sizes = [8, 8], strides = [1, 1]} : vector<8x96xf32> to vector<8x8xf32>
    %31 = vector.extract_strided_slice %7 {offsets = [0, 72], sizes = [8, 8], strides = [1, 1]} : vector<8x96xf32> to vector<8x8xf32>
    %32 = arith.truncf %29 : vector<8x8xf32> to vector<8x8xbf16>
    %33 = arith.truncf %30 : vector<8x8xf32> to vector<8x8xbf16>
    %cst_11 = arith.constant dense<0.000000e+00> : vector<8x8xf32>
    %34 = tpu.matmul %32, %33, %cst_11 {dimension_numbers = #tpu.dot_dimension_numbers<[1], [1], [0], [0], [0, 0, 1, 0], [], []>} : vector<8x8xbf16>, vector<8x8xbf16>, vector<8x8xf32> -> vector<8x8xf32>
    %cst_12 = arith.constant 0.353553385 : f32
    %35 = vector.broadcast %cst_12 : f32 to vector<8x8xf32>
    %36 = arith.mulf %34, %35 : vector<8x8xf32>
    %cst_13 = arith.constant dense<0xFF800000> : vector<8xf32>
    %37 = vector.multi_reduction <maximumf>, %36, %cst_13 [1] : vector<8x8xf32> to vector<8xf32>
    %38 = vector.shape_cast %37 : vector<8xf32> to vector<8x1xf32>
    %39 = vector.broadcast %38 : vector<8x1xf32> to vector<8x8xf32>
    %40 = arith.subf %36, %39 : vector<8x8xf32>
    %41 = math.exp %40 : vector<8x8xf32>
    %cst_14 = arith.constant dense<0.000000e+00> : vector<8xf32>
    %42 = vector.multi_reduction <add>, %41, %cst_14 [1] : vector<8x8xf32> to vector<8xf32>
    %43 = vector.shape_cast %42 : vector<8xf32> to vector<8x1xf32>
    %44 = tpu.reciprocal %43 {approx = true} : vector<8x1xf32> -> vector<8x1xf32>
    %45 = vector.broadcast %44 : vector<8x1xf32> to vector<8x8xf32>
    %46 = arith.mulf %41, %45 : vector<8x8xf32>
    %47 = arith.truncf %46 : vector<8x8xf32> to vector<8x8xbf16>
    %48 = arith.truncf %31 : vector<8x8xf32> to vector<8x8xbf16>
    %cst_15 = arith.constant dense<0.000000e+00> : vector<8x8xf32>
    %49 = tpu.matmul %47, %48, %cst_15 {dimension_numbers = #tpu.dot_dimension_numbers<[1], [0], [0], [1], [0, 0, 1, 1], [], []>} : vector<8x8xbf16>, vector<8x8xbf16>, vector<8x8xf32> -> vector<8x8xf32>
    %50 = vector.extract_strided_slice %7 {offsets = [0, 16], sizes = [8, 8], strides = [1, 1]} : vector<8x96xf32> to vector<8x8xf32>
    %51 = vector.extract_strided_slice %7 {offsets = [0, 48], sizes = [8, 8], strides = [1, 1]} : vector<8x96xf32> to vector<8x8xf32>
    %52 = vector.extract_strided_slice %7 {offsets = [0, 80], sizes = [8, 8], strides = [1, 1]} : vector<8x96xf32> to vector<8x8xf32>
    %53 = arith.truncf %50 : vector<8x8xf32> to vector<8x8xbf16>
    %54 = arith.truncf %51 : vector<8x8xf32> to vector<8x8xbf16>
    %cst_16 = arith.constant dense<0.000000e+00> : vector<8x8xf32>
    %55 = tpu.matmul %53, %54, %cst_16 {dimension_numbers = #tpu.dot_dimension_numbers<[1], [1], [0], [0], [0, 0, 1, 0], [], []>} : vector<8x8xbf16>, vector<8x8xbf16>, vector<8x8xf32> -> vector<8x8xf32>
    %cst_17 = arith.constant 0.353553385 : f32
    %56 = vector.broadcast %cst_17 : f32 to vector<8x8xf32>
    %57 = arith.mulf %55, %56 : vector<8x8xf32>
    %cst_18 = arith.constant dense<0xFF800000> : vector<8xf32>
    %58 = vector.multi_reduction <maximumf>, %57, %cst_18 [1] : vector<8x8xf32> to vector<8xf32>
    %59 = vector.shape_cast %58 : vector<8xf32> to vector<8x1xf32>
    %60 = vector.broadcast %59 : vector<8x1xf32> to vector<8x8xf32>
    %61 = arith.subf %57, %60 : vector<8x8xf32>
    %62 = math.exp %61 : vector<8x8xf32>
    %cst_19 = arith.constant dense<0.000000e+00> : vector<8xf32>
    %63 = vector.multi_reduction <add>, %62, %cst_19 [1] : vector<8x8xf32> to vector<8xf32>
    %64 = vector.shape_cast %63 : vector<8xf32> to vector<8x1xf32>
    %65 = tpu.reciprocal %64 {approx = true} : vector<8x1xf32> -> vector<8x1xf32>
    %66 = vector.broadcast %65 : vector<8x1xf32> to vector<8x8xf32>
    %67 = arith.mulf %62, %66 : vector<8x8xf32>
    %68 = arith.truncf %67 : vector<8x8xf32> to vector<8x8xbf16>
    %69 = arith.truncf %52 : vector<8x8xf32> to vector<8x8xbf16>
    %cst_20 = arith.constant dense<0.000000e+00> : vector<8x8xf32>
    %70 = tpu.matmul %68, %69, %cst_20 {dimension_numbers = #tpu.dot_dimension_numbers<[1], [0], [0], [1], [0, 0, 1, 1], [], []>} : vector<8x8xbf16>, vector<8x8xbf16>, vector<8x8xf32> -> vector<8x8xf32>
    %71 = vector.extract_strided_slice %7 {offsets = [0, 24], sizes = [8, 8], strides = [1, 1]} : vector<8x96xf32> to vector<8x8xf32>
    %72 = vector.extract_strided_slice %7 {offsets = [0, 56], sizes = [8, 8], strides = [1, 1]} : vector<8x96xf32> to vector<8x8xf32>
    %73 = vector.extract_strided_slice %7 {offsets = [0, 88], sizes = [8, 8], strides = [1, 1]} : vector<8x96xf32> to vector<8x8xf32>
    %74 = arith.truncf %71 : vector<8x8xf32> to vector<8x8xbf16>
    %75 = arith.truncf %72 : vector<8x8xf32> to vector<8x8xbf16>
    %cst_21 = arith.constant dense<0.000000e+00> : vector<8x8xf32>
    %76 = tpu.matmul %74, %75, %cst_21 {dimension_numbers = #tpu.dot_dimension_numbers<[1], [1], [0], [0], [0, 0, 1, 0], [], []>} : vector<8x8xbf16>, vector<8x8xbf16>, vector<8x8xf32> -> vector<8x8xf32>
    %cst_22 = arith.constant 0.353553385 : f32
    %77 = vector.broadcast %cst_22 : f32 to vector<8x8xf32>
    %78 = arith.mulf %76, %77 : vector<8x8xf32>
    %cst_23 = arith.constant dense<0xFF800000> : vector<8xf32>
    %79 = vector.multi_reduction <maximumf>, %78, %cst_23 [1] : vector<8x8xf32> to vector<8xf32>
    %80 = vector.shape_cast %79 : vector<8xf32> to vector<8x1xf32>
    %81 = vector.broadcast %80 : vector<8x1xf32> to vector<8x8xf32>
    %82 = arith.subf %78, %81 : vector<8x8xf32>
    %83 = math.exp %82 : vector<8x8xf32>
    %cst_24 = arith.constant dense<0.000000e+00> : vector<8xf32>
    %84 = vector.multi_reduction <add>, %83, %cst_24 [1] : vector<8x8xf32> to vector<8xf32>
    %85 = vector.shape_cast %84 : vector<8xf32> to vector<8x1xf32>
    %86 = tpu.reciprocal %85 {approx = true} : vector<8x1xf32> -> vector<8x1xf32>
    %87 = vector.broadcast %86 : vector<8x1xf32> to vector<8x8xf32>
    %88 = arith.mulf %83, %87 : vector<8x8xf32>
    %89 = arith.truncf %88 : vector<8x8xf32> to vector<8x8xbf16>
    %90 = arith.truncf %73 : vector<8x8xf32> to vector<8x8xbf16>
    %cst_25 = arith.constant dense<0.000000e+00> : vector<8x8xf32>
    %91 = tpu.matmul %89, %90, %cst_25 {dimension_numbers = #tpu.dot_dimension_numbers<[1], [0], [0], [1], [0, 0, 1, 1], [], []>} : vector<8x8xbf16>, vector<8x8xbf16>, vector<8x8xf32> -> vector<8x8xf32>
    %92 = tpu.concatenate %28, %49, %70, %91 in 1 : vector<8x8xf32>, vector<8x8xf32>, vector<8x8xf32>, vector<8x8xf32> -> vector<8x32xf32>
    %93 = arith.truncf %92 : vector<8x32xf32> to vector<8x32xbf16>
    %c0_26 = arith.constant 0 : index
    %c0_27 = arith.constant 0 : index
    %94 = vector.load %arg4[%c0_26, %c0_27] : memref<32x32xbf16, #tpu.memory_space<vmem>>, vector<32x32xbf16>
    %cst_28 = arith.constant dense<0.000000e+00> : vector<8x32xf32>
    %95 = tpu.matmul %93, %94, %cst_28 {dimension_numbers = #tpu.dot_dimension_numbers<[1], [0], [0], [1], [0, 0, 1, 1], [], []>} : vector<8x32xbf16>, vector<32x32xbf16>, vector<8x32xf32> -> vector<8x32xf32>
    %96 = arith.addf %1, %95 : vector<8x32xf32>
    %c0_29 = arith.constant 0 : index
    %c0_30 = arith.constant 0 : index
    %97 = vector.load %arg5[%c0_29, %c0_30] : memref<1x32xf32, #tpu.memory_space<vmem>>, vector<1x32xf32>
    %98 = vector.broadcast %97 : vector<1x32xf32> to vector<8x32xf32>
    %99 = arith.addf %96, %98 : vector<8x32xf32>
    %cst_31 = arith.constant dense<0.000000e+00> : vector<8xf32>
    %100 = vector.multi_reduction <add>, %99, %cst_31 [1] : vector<8x32xf32> to vector<8xf32>
    %101 = vector.shape_cast %100 : vector<8xf32> to vector<8x1xf32>
    %cst_32 = arith.constant 3.200000e+01 : f32
    %102 = vector.broadcast %cst_32 : f32 to vector<8x1xf32>
    %103 = arith.divf %101, %102 : vector<8x1xf32>
    %104 = vector.broadcast %103 : vector<8x1xf32> to vector<8x32xf32>
    %105 = arith.subf %99, %104 : vector<8x32xf32>
    %106 = arith.mulf %105, %105 : vector<8x32xf32>
    %cst_33 = arith.constant dense<0.000000e+00> : vector<8xf32>
    %107 = vector.multi_reduction <add>, %106, %cst_33 [1] : vector<8x32xf32> to vector<8xf32>
    %108 = vector.shape_cast %107 : vector<8xf32> to vector<8x1xf32>
    %cst_34 = arith.constant 3.200000e+01 : f32
    %109 = vector.broadcast %cst_34 : f32 to vector<8x1xf32>
    %110 = arith.divf %108, %109 : vector<8x1xf32>
    %111 = vector.broadcast %103 : vector<8x1xf32> to vector<8x32xf32>
    %112 = arith.subf %99, %111 : vector<8x32xf32>
    %cst_35 = arith.constant 9.99999974E-6 : f32
    %113 = vector.broadcast %cst_35 : f32 to vector<8x1xf32>
    %114 = arith.addf %110, %113 : vector<8x1xf32>
    %115 = math.rsqrt %114 : vector<8x1xf32>
    %116 = vector.broadcast %115 : vector<8x1xf32> to vector<8x32xf32>
    %117 = arith.mulf %112, %116 : vector<8x32xf32>
    %c0_36 = arith.constant 0 : index
    %c0_37 = arith.constant 0 : index
    %118 = vector.load %arg6[%c0_36, %c0_37] : memref<1x32xf32, #tpu.memory_space<vmem>>, vector<1x32xf32>
    %119 = vector.broadcast %118 : vector<1x32xf32> to vector<8x32xf32>
    %120 = arith.mulf %117, %119 : vector<8x32xf32>
    %c0_38 = arith.constant 0 : index
    %c0_39 = arith.constant 0 : index
    %121 = vector.load %arg7[%c0_38, %c0_39] : memref<1x32xf32, #tpu.memory_space<vmem>>, vector<1x32xf32>
    %122 = vector.broadcast %121 : vector<1x32xf32> to vector<8x32xf32>
    %123 = arith.addf %120, %122 : vector<8x32xf32>
    %c0_40 = arith.constant 0 : index
    %c0_41 = arith.constant 0 : index
    %c0_42 = arith.constant 0 : index
    %124 = vector.load %arg8[%c0_40, %c0_41, %c0_42] : memref<1x8x32xf32, #tpu.memory_space<vmem>>, vector<1x8x32xf32>
    %125 = vector.shape_cast %124 : vector<1x8x32xf32> to vector<8x32xf32>
    %126 = vector.shape_cast %123 : vector<8x32xf32> to vector<1x8x32xf32>
    tpu.vector_store %arg8[%c0_40, %c0_41, %c0_42], %126 {strides = array<i32>} : memref<1x8x32xf32, #tpu.memory_space<vmem>>, vector<1x8x32xf32>,
    return
  }
  func.func @transform_0(%arg0: i32) -> (i32, i32, i32) {
    %c0_i32 = arith.constant 0 : i32
    %c0_i32_0 = arith.constant 0 : i32
    %c0_i32_1 = arith.constant 0 : i32
    return %arg0, %c0_i32, %c0_i32_0 : i32, i32, i32
  }
  func.func @transform_1(%arg0: i32) -> (i32, i32) {
    %c0_i32 = arith.constant 0 : i32
    %c0_i32_0 = arith.constant 0 : i32
    %c0_i32_1 = arith.constant 0 : i32
    return %c0_i32, %c0_i32_0 : i32, i32
  }
  func.func @transform_2(%arg0: i32) -> (i32, i32) {
    %c0_i32 = arith.constant 0 : i32
    %c0_i32_0 = arith.constant 0 : i32
    %c0_i32_1 = arith.constant 0 : i32
    return %c0_i32, %c0_i32_0 : i32, i32
  }
  func.func @transform_3(%arg0: i32) -> (i32, i32) {
    %c0_i32 = arith.constant 0 : i32
    %c0_i32_0 = arith.constant 0 : i32
    %c0_i32_1 = arith.constant 0 : i32
    return %c0_i32, %c0_i32_0 : i32, i32
  }
  func.func @transform_4(%arg0: i32) -> (i32, i32) {
    %c0_i32 = arith.constant 0 : i32
    %c0_i32_0 = arith.constant 0 : i32
    %c0_i32_1 = arith.constant 0 : i32
    return %c0_i32, %c0_i32_0 : i32, i32
  }
  func.func @transform_5(%arg0: i32) -> (i32, i32) {
    %c0_i32 = arith.constant 0 : i32
    %c0_i32_0 = arith.constant 0 : i32
    %c0_i32_1 = arith.constant 0 : i32
    return %c0_i32, %c0_i32_0 : i32, i32
  }
  func.func @transform_6(%arg0: i32) -> (i32, i32) {
    %c0_i32 = arith.constant 0 : i32
    %c0_i32_0 = arith.constant 0 : i32
    %c0_i32_1 = arith.constant 0 : i32
    return %c0_i32, %c0_i32_0 : i32, i32
  }
  func.func @transform_7(%arg0: i32) -> (i32, i32, i32) {
    %c0_i32 = arith.constant 0 : i32
    %c0_i32_0 = arith.constant 0 : i32
    %c0_i32_1 = arith.constant 0 : i32
    return %arg0, %c0_i32, %c0_i32_0 : i32, i32, i32
  }
}

module attributes {stable_mosaic.version = 11 : i64} {
  func.func @_ffn_kernel(%arg0: i32, %arg1: i32, %arg2: memref<16x32xf32, #tpu.memory_space<vmem>>, %arg3: memref<32x512xbf16, #tpu.memory_space<vmem>>, %arg4: memref<1x512xf32, #tpu.memory_space<vmem>>, %arg5: memref<512x32xbf16, #tpu.memory_space<vmem>>, %arg6: memref<1x32xf32, #tpu.memory_space<vmem>>, %arg7: memref<1x32xf32, #tpu.memory_space<vmem>>, %arg8: memref<1x32xf32, #tpu.memory_space<vmem>>, %arg9: memref<16x32xf32, #tpu.memory_space<vmem>>, %arg10: memref<16x32xf32, #tpu.memory_space<vmem>>) attributes {dimension_semantics = [#tpu.dimension_semantics<parallel>, #tpu.dimension_semantics<arbitrary>], iteration_bounds = array<i64: 1, 4>, scalar_prefetch = 0 : i64, scratch_operands = 1 : i64, tpu.core_type = #tpu.core_type<tc>, window_params = [{transform_indices = @transform_0, window_bounds = array<i64: 16, 32>}, {transform_indices = @transform_1, window_bounds = array<i64: 32, 512>}, {transform_indices = @transform_2, window_bounds = array<i64: 1, 512>}, {transform_indices = @transform_3, window_bounds = array<i64: 512, 32>}, {pipeline_mode = #tpu.pipeline_mode<synchronous>, transform_indices = @transform_4, window_bounds = array<i64: 1, 32>}, {pipeline_mode = #tpu.pipeline_mode<synchronous>, transform_indices = @transform_5, window_bounds = array<i64: 1, 32>}, {pipeline_mode = #tpu.pipeline_mode<synchronous>, transform_indices = @transform_6, window_bounds = array<i64: 1, 32>}, {transform_indices = @transform_7, window_bounds = array<i64: 16, 32>}]} {
    %c0_i32 = arith.constant 0 : i32
    %0 = arith.cmpi eq, %arg1, %c0_i32 : i32
    %1 = arith.extui %0 : i1 to i32
    %c0_i32_0 = arith.constant 0 : i32
    %2 = arith.cmpi ne, %1, %c0_i32_0 : i32
    scf.if %2 {
      %cst_15 = arith.constant 0.000000e+00 : f32
      %21 = vector.broadcast %cst_15 : f32 to vector<16x32xf32>
      %c0_16 = arith.constant 0 : index
      %c0_17 = arith.constant 0 : index
      %22 = vector.load %arg10[%c0_16, %c0_17] : memref<16x32xf32, #tpu.memory_space<vmem>>, vector<16x32xf32>
      tpu.vector_store %arg10[%c0_16, %c0_17], %21 {strides = array<i32>} : memref<16x32xf32, #tpu.memory_space<vmem>>, vector<16x32xf32>,
    } else {
    }
    %c0 = arith.constant 0 : index
    %c0_1 = arith.constant 0 : index
    %3 = vector.load %arg2[%c0, %c0_1] : memref<16x32xf32, #tpu.memory_space<vmem>>, vector<16x32xf32>
    %4 = arith.truncf %3 : vector<16x32xf32> to vector<16x32xbf16>
    %c0_2 = arith.constant 0 : index
    %c0_3 = arith.constant 0 : index
    %5 = vector.load %arg3[%c0_2, %c0_3] : memref<32x512xbf16, #tpu.memory_space<vmem>>, vector<32x512xbf16>
    %cst = arith.constant dense<0.000000e+00> : vector<16x512xf32>
    %6 = tpu.matmul %4, %5, %cst {dimension_numbers = #tpu.dot_dimension_numbers<[1], [0], [0], [1], [0, 0, 1, 1], [], []>} : vector<16x32xbf16>, vector<32x512xbf16>, vector<16x512xf32> -> vector<16x512xf32>
    %c0_4 = arith.constant 0 : index
    %c0_5 = arith.constant 0 : index
    %7 = vector.load %arg4[%c0_4, %c0_5] : memref<1x512xf32, #tpu.memory_space<vmem>>, vector<1x512xf32>
    %8 = vector.broadcast %7 : vector<1x512xf32> to vector<16x512xf32>
    %9 = arith.addf %6, %8 : vector<16x512xf32>
    %cst_6 = arith.constant 0.000000e+00 : f32
    %10 = vector.broadcast %cst_6 : f32 to vector<16x512xf32>
    %11 = arith.maximumf %9, %10 : vector<16x512xf32>
    %c0_7 = arith.constant 0 : index
    %c0_8 = arith.constant 0 : index
    %12 = vector.load %arg10[%c0_7, %c0_8] : memref<16x32xf32, #tpu.memory_space<vmem>>, vector<16x32xf32>
    %13 = arith.truncf %11 : vector<16x512xf32> to vector<16x512xbf16>
    %c0_9 = arith.constant 0 : index
    %c0_10 = arith.constant 0 : index
    %14 = vector.load %arg5[%c0_9, %c0_10] : memref<512x32xbf16, #tpu.memory_space<vmem>>, vector<512x32xbf16>
    %cst_11 = arith.constant dense<0.000000e+00> : vector<16x32xf32>
    %15 = tpu.matmul %13, %14, %cst_11 {dimension_numbers = #tpu.dot_dimension_numbers<[1], [0], [0], [1], [0, 0, 1, 1], [], []>} : vector<16x512xbf16>, vector<512x32xbf16>, vector<16x32xf32> -> vector<16x32xf32>
    %16 = arith.addf %12, %15 : vector<16x32xf32>
    %c0_12 = arith.constant 0 : index
    %c0_13 = arith.constant 0 : index
    %17 = vector.load %arg10[%c0_12, %c0_13] : memref<16x32xf32, #tpu.memory_space<vmem>>, vector<16x32xf32>
    tpu.vector_store %arg10[%c0_12, %c0_13], %16 {strides = array<i32>} : memref<16x32xf32, #tpu.memory_space<vmem>>, vector<16x32xf32>,
    %c3_i32 = arith.constant 3 : i32
    %18 = arith.cmpi eq, %arg1, %c3_i32 : i32
    %19 = arith.extui %18 : i1 to i32
    %c0_i32_14 = arith.constant 0 : i32
    %20 = arith.cmpi ne, %19, %c0_i32_14 : i32
    scf.if %20 {
      %c0_15 = arith.constant 0 : index
      %c0_16 = arith.constant 0 : index
      %21 = vector.load %arg10[%c0_15, %c0_16] : memref<16x32xf32, #tpu.memory_space<vmem>>, vector<16x32xf32>
      %c0_17 = arith.constant 0 : index
      %c0_18 = arith.constant 0 : index
      %22 = vector.load %arg6[%c0_17, %c0_18] : memref<1x32xf32, #tpu.memory_space<vmem>>, vector<1x32xf32>
      %23 = vector.broadcast %22 : vector<1x32xf32> to vector<16x32xf32>
      %24 = arith.addf %21, %23 : vector<16x32xf32>
      %25 = arith.addf %24, %3 : vector<16x32xf32>
      %cst_19 = arith.constant dense<0.000000e+00> : vector<16xf32>
      %26 = vector.multi_reduction <add>, %25, %cst_19 [1] : vector<16x32xf32> to vector<16xf32>
      %27 = vector.shape_cast %26 : vector<16xf32> to vector<16x1xf32>
      %cst_20 = arith.constant 3.200000e+01 : f32
      %28 = vector.broadcast %cst_20 : f32 to vector<16x1xf32>
      %29 = arith.divf %27, %28 : vector<16x1xf32>
      %30 = vector.broadcast %29 : vector<16x1xf32> to vector<16x32xf32>
      %31 = arith.subf %25, %30 : vector<16x32xf32>
      %32 = arith.mulf %31, %31 : vector<16x32xf32>
      %cst_21 = arith.constant dense<0.000000e+00> : vector<16xf32>
      %33 = vector.multi_reduction <add>, %32, %cst_21 [1] : vector<16x32xf32> to vector<16xf32>
      %34 = vector.shape_cast %33 : vector<16xf32> to vector<16x1xf32>
      %cst_22 = arith.constant 3.200000e+01 : f32
      %35 = vector.broadcast %cst_22 : f32 to vector<16x1xf32>
      %36 = arith.divf %34, %35 : vector<16x1xf32>
      %37 = vector.broadcast %29 : vector<16x1xf32> to vector<16x32xf32>
      %38 = arith.subf %25, %37 : vector<16x32xf32>
      %cst_23 = arith.constant 9.99999974E-6 : f32
      %39 = vector.broadcast %cst_23 : f32 to vector<16x1xf32>
      %40 = arith.addf %36, %39 : vector<16x1xf32>
      %41 = math.rsqrt %40 : vector<16x1xf32>
      %42 = vector.broadcast %41 : vector<16x1xf32> to vector<16x32xf32>
      %43 = arith.mulf %38, %42 : vector<16x32xf32>
      %c0_24 = arith.constant 0 : index
      %c0_25 = arith.constant 0 : index
      %44 = vector.load %arg7[%c0_24, %c0_25] : memref<1x32xf32, #tpu.memory_space<vmem>>, vector<1x32xf32>
      %45 = vector.broadcast %44 : vector<1x32xf32> to vector<16x32xf32>
      %46 = arith.mulf %43, %45 : vector<16x32xf32>
      %c0_26 = arith.constant 0 : index
      %c0_27 = arith.constant 0 : index
      %47 = vector.load %arg8[%c0_26, %c0_27] : memref<1x32xf32, #tpu.memory_space<vmem>>, vector<1x32xf32>
      %48 = vector.broadcast %47 : vector<1x32xf32> to vector<16x32xf32>
      %49 = arith.addf %46, %48 : vector<16x32xf32>
      %c0_28 = arith.constant 0 : index
      %c0_29 = arith.constant 0 : index
      %50 = vector.load %arg9[%c0_28, %c0_29] : memref<16x32xf32, #tpu.memory_space<vmem>>, vector<16x32xf32>
      tpu.vector_store %arg9[%c0_28, %c0_29], %49 {strides = array<i32>} : memref<16x32xf32, #tpu.memory_space<vmem>>, vector<16x32xf32>,
    } else {
    }
    return
  }
  func.func @transform_0(%arg0: i32, %arg1: i32) -> (i32, i32) {
    %c0_i32 = arith.constant 0 : i32
    %c0_i32_0 = arith.constant 0 : i32
    return %arg0, %c0_i32 : i32, i32
  }
  func.func @transform_1(%arg0: i32, %arg1: i32) -> (i32, i32) {
    %c0_i32 = arith.constant 0 : i32
    %c0_i32_0 = arith.constant 0 : i32
    return %c0_i32, %arg1 : i32, i32
  }
  func.func @transform_2(%arg0: i32, %arg1: i32) -> (i32, i32) {
    %c0_i32 = arith.constant 0 : i32
    %c0_i32_0 = arith.constant 0 : i32
    return %c0_i32, %arg1 : i32, i32
  }
  func.func @transform_3(%arg0: i32, %arg1: i32) -> (i32, i32) {
    %c0_i32 = arith.constant 0 : i32
    %c0_i32_0 = arith.constant 0 : i32
    return %arg1, %c0_i32 : i32, i32
  }
  func.func @transform_4(%arg0: i32, %arg1: i32) -> (i32, i32) {
    %c0_i32 = arith.constant 0 : i32
    %c0_i32_0 = arith.constant 0 : i32
    %c0_i32_1 = arith.constant 0 : i32
    return %c0_i32, %c0_i32_0 : i32, i32
  }
  func.func @transform_5(%arg0: i32, %arg1: i32) -> (i32, i32) {
    %c0_i32 = arith.constant 0 : i32
    %c0_i32_0 = arith.constant 0 : i32
    %c0_i32_1 = arith.constant 0 : i32
    return %c0_i32, %c0_i32_0 : i32, i32
  }
  func.func @transform_6(%arg0: i32, %arg1: i32) -> (i32, i32) {
    %c0_i32 = arith.constant 0 : i32
    %c0_i32_0 = arith.constant 0 : i32
    %c0_i32_1 = arith.constant 0 : i32
    return %c0_i32, %c0_i32_0 : i32, i32
  }
  func.func @transform_7(%arg0: i32, %arg1: i32) -> (i32, i32) {
    %c0_i32 = arith.constant 0 : i32
    %c0_i32_0 = arith.constant 0 : i32
    return %arg0, %c0_i32 : i32, i32
  }
}

module attributes {stable_mosaic.version = 11 : i64} {
  func.func @_matmul_kernel(%arg0: i32, %arg1: i32, %arg2: i32, %arg3: memref<8x128xbf16, #tpu.memory_space<vmem>>, %arg4: memref<128x128xbf16, #tpu.memory_space<vmem>>, %arg5: memref<1x128xf32, #tpu.memory_space<vmem>>, %arg6: memref<8x128xf32, #tpu.memory_space<vmem>>, %arg7: memref<8x128xf32, #tpu.memory_space<vmem>>) attributes {dimension_semantics = [#tpu.dimension_semantics<parallel>, #tpu.dimension_semantics<parallel>, #tpu.dimension_semantics<arbitrary>], iteration_bounds = array<i64: 1, 1, 1>, scalar_prefetch = 0 : i64, scratch_operands = 1 : i64, tpu.core_type = #tpu.core_type<tc>, window_params = [{transform_indices = @transform_0, window_bounds = array<i64: 8, 128>}, {transform_indices = @transform_1, window_bounds = array<i64: 128, 128>}, {transform_indices = @transform_2, window_bounds = array<i64: 1, 128>}, {transform_indices = @transform_3, window_bounds = array<i64: 8, 128>}]} {
    %c0_i32 = arith.constant 0 : i32
    %0 = arith.cmpi eq, %arg2, %c0_i32 : i32
    %1 = arith.extui %0 : i1 to i32
    %c0_i32_0 = arith.constant 0 : i32
    %2 = arith.cmpi ne, %1, %c0_i32_0 : i32
    scf.if %2 {
      %cst_10 = arith.constant 0.000000e+00 : f32
      %12 = vector.broadcast %cst_10 : f32 to vector<8x128xf32>
      %c0_11 = arith.constant 0 : index
      %c0_12 = arith.constant 0 : index
      %13 = vector.load %arg7[%c0_11, %c0_12] : memref<8x128xf32, #tpu.memory_space<vmem>>, vector<8x128xf32>
      tpu.vector_store %arg7[%c0_11, %c0_12], %12 {strides = array<i32>} : memref<8x128xf32, #tpu.memory_space<vmem>>, vector<8x128xf32>,
    } else {
    }
    %c0 = arith.constant 0 : index
    %c0_1 = arith.constant 0 : index
    %3 = vector.load %arg7[%c0, %c0_1] : memref<8x128xf32, #tpu.memory_space<vmem>>, vector<8x128xf32>
    %c0_2 = arith.constant 0 : index
    %c0_3 = arith.constant 0 : index
    %4 = vector.load %arg3[%c0_2, %c0_3] : memref<8x128xbf16, #tpu.memory_space<vmem>>, vector<8x128xbf16>
    %c0_4 = arith.constant 0 : index
    %c0_5 = arith.constant 0 : index
    %5 = vector.load %arg4[%c0_4, %c0_5] : memref<128x128xbf16, #tpu.memory_space<vmem>>, vector<128x128xbf16>
    %cst = arith.constant dense<0.000000e+00> : vector<8x128xf32>
    %6 = tpu.matmul %4, %5, %cst {dimension_numbers = #tpu.dot_dimension_numbers<[1], [0], [0], [1], [0, 0, 1, 1], [], []>} : vector<8x128xbf16>, vector<128x128xbf16>, vector<8x128xf32> -> vector<8x128xf32>
    %7 = arith.addf %3, %6 : vector<8x128xf32>
    %c0_6 = arith.constant 0 : index
    %c0_7 = arith.constant 0 : index
    %8 = vector.load %arg7[%c0_6, %c0_7] : memref<8x128xf32, #tpu.memory_space<vmem>>, vector<8x128xf32>
    tpu.vector_store %arg7[%c0_6, %c0_7], %7 {strides = array<i32>} : memref<8x128xf32, #tpu.memory_space<vmem>>, vector<8x128xf32>,
    %c0_i32_8 = arith.constant 0 : i32
    %9 = arith.cmpi eq, %arg2, %c0_i32_8 : i32
    %10 = arith.extui %9 : i1 to i32
    %c0_i32_9 = arith.constant 0 : i32
    %11 = arith.cmpi ne, %10, %c0_i32_9 : i32
    scf.if %11 {
      %c0_10 = arith.constant 0 : index
      %c0_11 = arith.constant 0 : index
      %12 = vector.load %arg7[%c0_10, %c0_11] : memref<8x128xf32, #tpu.memory_space<vmem>>, vector<8x128xf32>
      %c0_12 = arith.constant 0 : index
      %c0_13 = arith.constant 0 : index
      %13 = vector.load %arg5[%c0_12, %c0_13] : memref<1x128xf32, #tpu.memory_space<vmem>>, vector<1x128xf32>
      %14 = vector.broadcast %13 : vector<1x128xf32> to vector<8x128xf32>
      %15 = arith.addf %12, %14 : vector<8x128xf32>
      %c0_14 = arith.constant 0 : index
      %c0_15 = arith.constant 0 : index
      %16 = vector.load %arg6[%c0_14, %c0_15] : memref<8x128xf32, #tpu.memory_space<vmem>>, vector<8x128xf32>
      tpu.vector_store %arg6[%c0_14, %c0_15], %15 {strides = array<i32>} : memref<8x128xf32, #tpu.memory_space<vmem>>, vector<8x128xf32>,
    } else {
    }
    return
  }
  func.func @transform_0(%arg0: i32, %arg1: i32, %arg2: i32) -> (i32, i32) {
    %c0_i32 = arith.constant 0 : i32
    return %arg0, %arg2 : i32, i32
  }
  func.func @transform_1(%arg0: i32, %arg1: i32, %arg2: i32) -> (i32, i32) {
    %c0_i32 = arith.constant 0 : i32
    return %arg2, %arg1 : i32, i32
  }
  func.func @transform_2(%arg0: i32, %arg1: i32, %arg2: i32) -> (i32, i32) {
    %c0_i32 = arith.constant 0 : i32
    %c0_i32_0 = arith.constant 0 : i32
    return %c0_i32, %arg1 : i32, i32
  }
  func.func @transform_3(%arg0: i32, %arg1: i32, %arg2: i32) -> (i32, i32) {
    %c0_i32 = arith.constant 0 : i32
    return %arg0, %arg1 : i32, i32
  }
}

</mosaic_0001>

<llo_original>
// kernel: forward.10
$region0: #{forward.10}
  #allocation0 [shape = 'u32[]', space=smem, size = 0x4, offset = 0x4, fixed_abs, tag = 'smem constant byte address 0x4 - core index']
  #allocation1 [shape = 'u32[144,128]{1,0:T(1,128)}', space=vmem, size = 0x12000, scoped, tag = 'internal scratch']
  #allocation2 [shape = 'f32[16,128]{1,0:T(8,128)}', space=vmem, size = 0x2000, scoped, tag = 'scratch operand']
  %s0 = inlined_call_operand.vmem [shape: bf16[16,128], index: 0, kind: input, shape index: {}]
  %s1 = inlined_call_operand.vmem [shape: bf16[128,128], index: 1, kind: input, shape index: {}]
  %s2 = inlined_call_operand.vmem [shape: f32[1,128], index: 2, kind: input, shape index: {}]
  %s3 = inlined_call_operand.vmem [shape: f32[16,128], index: 3, kind: output, shape index: {}]
  %s4 = sld [smem:[#allocation0]]
  $region30: #{forward.10} parent=0
    _
  %s6 = ssub.s32 1, %s4
  %s7 = scalar_select 0, %s6, %s4
  // Predicated region
  $region2: #{forward.10} parent=0 // pred_check
    _
  $region3: #{forward.10} parent=0 // pred_check_branch
    %9 = sbr.rel (0) target = $region5
  $region4: #{forward.10} parent=0 // pred_region
    _
  $region5: #{forward.10} parent=0 // pred_fallthru
    _
  // Predicated region
  $region6: #{forward.10} parent=0 // pred_check
    _
  $region7: #{forward.10} parent=0 // pred_check_branch
    %11 = sbr.rel (0) target = $region9
  $region8: #{forward.10} parent=0 // pred_region
    _
  $region9: #{forward.10} parent=0 // pred_fallthru
    _
  // Predicated region
  $region10: #{forward.10} parent=0 // pred_check
    _
  $region11: #{forward.10} parent=0 // pred_check_branch
    %13 = sbr.rel (0) target = $region13
  $region12: #{forward.10} parent=0 // pred_region
    _
  $region13: #{forward.10} parent=0 // pred_fallthru
    _
  %p15 = scmp.eq.s32.totalorder 0, 0
  // Predicated region
  $region14: #{forward.10} parent=0 // pred_check
    %p16 = pneg %p15
  $region15: #{forward.10} parent=0 // pred_check_branch
    %18 = sbr.rel (%p16) target = $region17
  $region16: #{forward.10} parent=0 // pred_region
    %19 = vst [vmem:[#allocation2] sm:$0xff] 0.0
    %20 = vst [vmem:[#allocation2 + $0x8] sm:$0xff] 0.0
  $region17: #{forward.10} parent=0 // pred_fallthru
    _
  %v21 = vld [vmem:[#allocation2] sm:$0xff]
  %v22 = vld [vmem:[#allocation2 + $0x8] sm:$0xff]
  %v23 = vld [vmem:[%s0] sm:$0xf]
  %v24 = vld [vmem:[%s0 + $0x4] sm:$0xf]
  %v25 = vld [vmem:[%s1] sm:$0xf]
  %v26 = vld [vmem:[%s1 + $0x4] sm:$0xf]
  %v27 = vld [vmem:[%s1 + $0x8] sm:$0xf]
  %v28 = vld [vmem:[%s1 + $0xc] sm:$0xf]
  %v29 = vld [vmem:[%s1 + $0x10] sm:$0xf]
  %v30 = vld [vmem:[%s1 + $0x14] sm:$0xf]
  %v31 = vld [vmem:[%s1 + $0x18] sm:$0xf]
  %v32 = vld [vmem:[%s1 + $0x1c] sm:$0xf]
  %v33 = vld [vmem:[%s1 + $0x20] sm:$0xf]
  %v34 = vld [vmem:[%s1 + $0x24] sm:$0xf]
  %v35 = vld [vmem:[%s1 + $0x28] sm:$0xf]
  %v36 = vld [vmem:[%s1 + $0x2c] sm:$0xf]
  %v37 = vld [vmem:[%s1 + $0x30] sm:$0xf]
  %v38 = vld [vmem:[%s1 + $0x34] sm:$0xf]
  %v39 = vld [vmem:[%s1 + $0x38] sm:$0xf]
  %v40 = vld [vmem:[%s1 + $0x3c] sm:$0xf]
  %v43 = vunpack.c.l.b16 %v23
  %v44 = vunpack.c.l.b16 %v24
  %v45 = vpack.c.b16 %v44, %v43
  %v63 = vunpack.c.l.b16 %v25
  %v64 = vunpack.c.l.b16 %v26
  %v65 = vunpack.c.l.b16 %v27
  %v66 = vunpack.c.l.b16 %v28
  %v67 = vunpack.c.l.b16 %v29
  %v68 = vunpack.c.l.b16 %v30
  %v69 = vunpack.c.l.b16 %v31
  %v70 = vunpack.c.l.b16 %v32
  %v71 = vunpack.c.l.b16 %v33
  %v72 = vunpack.c.l.b16 %v34
  %v73 = vunpack.c.l.b16 %v35
  %v74 = vunpack.c.l.b16 %v36
  %v75 = vunpack.c.l.b16 %v37
  %v76 = vunpack.c.l.b16 %v38
  %v77 = vunpack.c.l.b16 %v39
  %v78 = vunpack.c.l.b16 %v40
  %v79 = vpack.c.b16 %v64, %v63
  %v80 = vpack.c.b16 %v66, %v65
  %v81 = vpack.c.b16 %v68, %v67
  %v82 = vpack.c.b16 %v70, %v69
  %v83 = vpack.c.b16 %v72, %v71
  %v84 = vpack.c.b16 %v74, %v73
  %v85 = vpack.c.b16 %v76, %v75
  %v86 = vpack.c.b16 %v78, %v77
  %95 = vmatprep.subr.bf16.mxu0 0
  %96 = vmatpush1.bf16.msra.mxu0 %v79
  %97 = vmatprep.subr.bf16.mxu0 0
  %98 = vmatpush1.bf16.msra.mxu0 %v80
  %99 = vmatprep.subr.bf16.mxu0 0
  %100 = vmatpush1.bf16.msra.mxu0 %v81
  %101 = vmatprep.subr.bf16.mxu0 0
  %102 = vmatpush1.bf16.msra.mxu0 %v82
  %103 = vmatprep.subr.bf16.mxu0 0
  %104 = vmatpush1.bf16.msra.mxu0 %v83
  %105 = vmatprep.subr.bf16.mxu0 0
  %106 = vmatpush1.bf16.msra.mxu0 %v84
  %107 = vmatprep.subr.bf16.mxu0 0
  %108 = vmatpush1.bf16.msra.mxu0 %v85
  %109 = vmatprep.subr.bf16.mxu0 0
  %110 = vmatpush1.bf16.msra.mxu0 %v86
  %111 = vmatprep.subr.bf16.mxu0 0
  %112 = vmatpush1.bf16.msra.mxu0 0
  %113 = vmatprep.subr.bf16.mxu0 0
  %114 = vmatpush1.bf16.msra.mxu0 0
  %115 = vmatprep.subr.bf16.mxu0 0
  %116 = vmatpush1.bf16.msra.mxu0 0
  %117 = vmatprep.subr.bf16.mxu0 0
  %118 = vmatpush1.bf16.msra.mxu0 0
  %119 = vmatprep.subr.bf16.mxu0 0
  %120 = vmatpush1.bf16.msra.mxu0 0
  %121 = vmatprep.subr.bf16.mxu0 0
  %122 = vmatpush1.bf16.msra.mxu0 0
  %123 = vmatprep.subr.bf16.mxu0 0
  %124 = vmatpush1.bf16.msra.mxu0 0
  %125 = vmatprep.subr.bf16.mxu0 0
  %126 = vmatpush1.bf16.msra.mxu0 0
  %127 = vmatprep.mubr.bf16.mxu0 0
  %128 = vmatmul.mubr.bf16.gmra.mrb[0].mxu0 %v45
  %v129 = vpop.f32.mrb[0].mxu0
  %v130 = vadd.f32 0.0, %v129
  %v131 = vpop.f32.mrb[0].mxu0
  %v132 = vpop.f32.mrb[0].mxu0
  %v133 = vadd.f32 0.0, %v132
  %v134 = vpop.f32.mrb[0].mxu0
  %135 = vdwg.mxu0
  %v136 = vadd.f32 %v21, %v130
  %v137 = vadd.f32 %v22, %v133
  %138 = vst [vmem:[#allocation2] sm:$0xff] %v136
  %139 = vst [vmem:[#allocation2 + $0x8] sm:$0xff] %v137
  // Predicated region
  $region18: #{forward.10} parent=0 // pred_check
    %p140 = pneg %p15
  $region19: #{forward.10} parent=0 // pred_check_branch
    %142 = sbr.rel (%p140) target = $region21
  $region20: #{forward.10} parent=0 // pred_region
    %v143 = vld [vmem:[#allocation2] sm:$0xff]
    %v144 = vld [vmem:[#allocation2 + $0x8] sm:$0xff]
    %v145 = vld [vmem:[%s2] sm:$0x1]
    %v147 = vlaneseq
    %v148 = vshrl.u32 %v147, 7
    %v149 = vsub.s32 0, %v148
    %v150 = vrot.slane %v145, %v149
    %v152 = vadd.f32 %v143, %v150
    %v153 = vadd.f32 %v144, %v150
    %154 = vst [vmem:[%s3] sm:$0xff] %v152
    %155 = vst [vmem:[%s3 + $0x8] sm:$0xff] %v153
  $region21: #{forward.10} parent=0 // pred_fallthru
    _
  // Predicated region
  $region22: #{forward.10} parent=0 // pred_check
    _
  $region23: #{forward.10} parent=0 // pred_check_branch
    %157 = sbr.rel (0) target = $region25
  $region24: #{forward.10} parent=0 // pred_region
    _
  $region25: #{forward.10} parent=0 // pred_fallthru
    _
  // Predicated region
  $region26: #{forward.10} parent=0 // pred_check
    _
  $region27: #{forward.10} parent=0 // pred_check_branch
    %159 = sbr.rel (0) target = $region29
  $region28: #{forward.10} parent=0 // pred_region
    _
  $region29: #{forward.10} parent=0 // pred_fallthru
    _

// kernel: forward.14
$region0: #{forward.14}
  #allocation0 [shape = 'u32[]', space=smem, size = 0x4, offset = 0x4, fixed_abs, tag = 'smem constant byte address 0x4 - core index']
  #allocation1 [shape = 'u32[144,128]{1,0:T(1,128)}', space=vmem, size = 0x12000, scoped, tag = 'internal scratch']
  %s0 = inlined_call_operand.vmem [shape: f32[2,8,32], index: 0, kind: input, shape index: {}]
  %s1 = inlined_call_operand.vmem [shape: bf16[32,96], index: 1, kind: input, shape index: {}]
  %s2 = inlined_call_operand.vmem [shape: f32[1,96], index: 2, kind: input, shape index: {}]
  %s3 = inlined_call_operand.vmem [shape: bf16[32,32], index: 3, kind: input, shape index: {}]
  %s4 = inlined_call_operand.vmem [shape: f32[1,32], index: 4, kind: input, shape index: {}]
  %s5 = inlined_call_operand.vmem [shape: f32[1,32], index: 5, kind: input, shape index: {}]
  %s6 = inlined_call_operand.vmem [shape: f32[1,32], index: 6, kind: input, shape index: {}]
  %s7 = inlined_call_operand.vmem [shape: f32[2,8,32], index: 7, kind: output, shape index: {}]
  %s8 = sld [smem:[#allocation0]]
  $region61: #{forward.14} parent=0
    _
  %s10 = ssub.s32 1, %s8
  %s11 = scalar_select 0, %s10, %s8
  loop: start=0, step=1, limit=4
  $region2: #{forward.14} parent=0 // loop_pre_header
    _
  $region3: #{forward.14} parent=0 // loop_header
    %s13 = sphi 0, %s17
    %p14 = scmp.ge.s32.totalorder %s13, 4
    %s23 = sphi 0, %s25
    %s26 = sphi 0, %s23
    %s27 = sphi 0, %s26
    %s43 = sphi 0, %s27
    %s47 = sphi 0, %s47
    %s49 = sphi 0, %s47
    %s50 = sphi 0, %s49
    %s64 = sphi 0, %s50
    %s68 = sphi 0, %s68
    %s70 = sphi 0, %s68
    %s71 = sphi 0, %s70
    %s85 = sphi 0, %s71
    %s89 = sphi 0, %s89
    %s91 = sphi 0, %s89
    %s92 = sphi 0, %s91
    %s106 = sphi 0, %s92
    %s110 = sphi 0, %s110
    %s112 = sphi 0, %s110
    %s113 = sphi 0, %s112
    %s127 = sphi 0, %s113
    %s131 = sphi 0, %s131
    %s133 = sphi 0, %s131
    %s134 = sphi 0, %s133
    %s148 = sphi 0, %s134
    %s152 = sphi 0, %s152
    %s154 = sphi 0, %s152
    %s155 = sphi 0, %s154
    %s169 = sphi 0, %s155
    %s175 = sphi 0, %s177
    %s178 = sphi 0, %s175
    %s179 = sphi 0, %s178
    %s195 = sphi 0, %s179
  $region4: #{forward.14} parent=0 // loop_header_branch
    %16 = sbr.rel (%p14) target = $region8
  $region5: #{forward.14} parent=0 // loop_body
    %s18 = ssub.s32 %s13, 1
    %s19 = ssub.s32 %s13, 2
    %s20 = sadd.s32 %s13, 1
    %s21 = ssub.s32 %s13, %s20
    %p22 = scmp.eq.s32.totalorder %s21, 0
    %s24 = sadd.s32 %s23, 1
    %s25 = scalar_select %p22, %s23, %s24
    %p28 = pneg %p22
    %p29 = scmp.eq.s32.totalorder %s13, 1
    %p30 = por %p28, %p29
    %p31 = scmp.ne.s32.totalorder %s23, %s26
    %p32 = scmp.eq.s32.totalorder %s13, 0
    %p33 = por %p31, %p32
    %p34 = scmp.ne.s32.totalorder %s23, %s26
    %p35 = scmp.eq.s32.totalorder %s18, 1
    %p36 = por %p34, %p35
    %p37 = scmp.ne.s32.totalorder %s26, %s27
    %p38 = scmp.eq.s32.totalorder %s18, 0
    %p39 = por %p37, %p38
    %p40 = scmp.ne.s32.totalorder %s26, %s27
    %p41 = scmp.eq.s32.totalorder %s19, 1
    %p42 = por %p40, %p41
    %p44 = scmp.ne.s32.totalorder %s27, %s43
    %p45 = scmp.eq.s32.totalorder %s19, 0
    %p46 = por %p44, %p45
    %s48 = sadd.s32 %s47, 1
    %p51 = scmp.eq.s32.totalorder %s13, 1
    %p52 = scmp.ne.s32.totalorder %s47, %s49
    %p53 = scmp.eq.s32.totalorder %s13, 0
    %p54 = por %p52, %p53
    %p55 = scmp.ne.s32.totalorder %s47, %s49
    %p56 = scmp.eq.s32.totalorder %s18, 1
    %p57 = por %p55, %p56
    %p58 = scmp.ne.s32.totalorder %s49, %s50
    %p59 = scmp.eq.s32.totalorder %s18, 0
    %p60 = por %p58, %p59
    %p61 = scmp.ne.s32.totalorder %s49, %s50
    %p62 = scmp.eq.s32.totalorder %s19, 1
    %p63 = por %p61, %p62
    %p65 = scmp.ne.s32.totalorder %s50, %s64
    %p66 = scmp.eq.s32.totalorder %s19, 0
    %p67 = por %p65, %p66
    %s69 = sadd.s32 %s68, 1
    %p72 = scmp.eq.s32.totalorder %s13, 1
    %p73 = scmp.ne.s32.totalorder %s68, %s70
    %p74 = scmp.eq.s32.totalorder %s13, 0
    %p75 = por %p73, %p74
    %p76 = scmp.ne.s32.totalorder %s68, %s70
    %p77 = scmp.eq.s32.totalorder %s18, 1
    %p78 = por %p76, %p77
    %p79 = scmp.ne.s32.totalorder %s70, %s71
    %p80 = scmp.eq.s32.totalorder %s18, 0
    %p81 = por %p79, %p80
    %p82 = scmp.ne.s32.totalorder %s70, %s71
    %p83 = scmp.eq.s32.totalorder %s19, 1
    %p84 = por %p82, %p83
    %p86 = scmp.ne.s32.totalorder %s71, %s85
    %p87 = scmp.eq.s32.totalorder %s19, 0
    %p88 = por %p86, %p87
    %s90 = sadd.s32 %s89, 1
    %p93 = scmp.eq.s32.totalorder %s13, 1
    %p94 = scmp.ne.s32.totalorder %s89, %s91
    %p95 = scmp.eq.s32.totalorder %s13, 0
    %p96 = por %p94, %p95
    %p97 = scmp.ne.s32.totalorder %s89, %s91
    %p98 = scmp.eq.s32.totalorder %s18, 1
    %p99 = por %p97, %p98
    %p100 = scmp.ne.s32.totalorder %s91, %s92
    %p101 = scmp.eq.s32.totalorder %s18, 0
    %p102 = por %p100, %p101
    %p103 = scmp.ne.s32.totalorder %s91, %s92
    %p104 = scmp.eq.s32.totalorder %s19, 1
    %p105 = por %p103, %p104
    %p107 = scmp.ne.s32.totalorder %s92, %s106
    %p108 = scmp.eq.s32.totalorder %s19, 0
    %p109 = por %p107, %p108
    %s111 = sadd.s32 %s110, 1
    %p114 = scmp.eq.s32.totalorder %s13, 1
    %p115 = scmp.ne.s32.totalorder %s110, %s112
    %p116 = scmp.eq.s32.totalorder %s13, 0
    %p117 = por %p115, %p116
    %p118 = scmp.ne.s32.totalorder %s110, %s112
    %p119 = scmp.eq.s32.totalorder %s18, 1
    %p120 = por %p118, %p119
    %p121 = scmp.ne.s32.totalorder %s112, %s113
    %p122 = scmp.eq.s32.totalorder %s18, 0
    %p123 = por %p121, %p122
    %p124 = scmp.ne.s32.totalorder %s112, %s113
    %p125 = scmp.eq.s32.totalorder %s19, 1
    %p126 = por %p124, %p125
    %p128 = scmp.ne.s32.totalorder %s113, %s127
    %p129 = scmp.eq.s32.totalorder %s19, 0
    %p130 = por %p128, %p129
    %s132 = sadd.s32 %s131, 1
    %p135 = scmp.eq.s32.totalorder %s13, 1
    %p136 = scmp.ne.s32.totalorder %s131, %s133
    %p137 = scmp.eq.s32.totalorder %s13, 0
    %p138 = por %p136, %p137
    %p139 = scmp.ne.s32.totalorder %s131, %s133
    %p140 = scmp.eq.s32.totalorder %s18, 1
    %p141 = por %p139, %p140
    %p142 = scmp.ne.s32.totalorder %s133, %s134
    %p143 = scmp.eq.s32.totalorder %s18, 0
    %p144 = por %p142, %p143
    %p145 = scmp.ne.s32.totalorder %s133, %s134
    %p146 = scmp.eq.s32.totalorder %s19, 1
    %p147 = por %p145, %p146
    %p149 = scmp.ne.s32.totalorder %s134, %s148
    %p150 = scmp.eq.s32.totalorder %s19, 0
    %p151 = por %p149, %p150
    %s153 = sadd.s32 %s152, 1
    %p156 = scmp.eq.s32.totalorder %s13, 1
    %p157 = scmp.ne.s32.totalorder %s152, %s154
    %p158 = scmp.eq.s32.totalorder %s13, 0
    %p159 = por %p157, %p158
    %p160 = scmp.ne.s32.totalorder %s152, %s154
    %p161 = scmp.eq.s32.totalorder %s18, 1
    %p162 = por %p160, %p161
    %p163 = scmp.ne.s32.totalorder %s154, %s155
    %p164 = scmp.eq.s32.totalorder %s18, 0
    %p165 = por %p163, %p164
    %p166 = scmp.ne.s32.totalorder %s154, %s155
    %p167 = scmp.eq.s32.totalorder %s19, 1
    %p168 = por %p166, %p167
    %p170 = scmp.ne.s32.totalorder %s155, %s169
    %p171 = scmp.eq.s32.totalorder %s19, 0
    %p172 = por %p170, %p171
    %s173 = ssub.s32 %s13, %s20
    %p174 = scmp.eq.s32.totalorder %s173, 0
    %s176 = sadd.s32 %s175, 1
    %s177 = scalar_select %p174, %s175, %s176
    %p180 = pneg %p174
    %p181 = scmp.eq.s32.totalorder %s13, 1
    %p182 = por %p180, %p181
    %p183 = scmp.ne.s32.totalorder %s175, %s178
    %p184 = scmp.eq.s32.totalorder %s13, 0
    %p185 = por %p183, %p184
    %p186 = scmp.ne.s32.totalorder %s175, %s178
    %p187 = scmp.eq.s32.totalorder %s18, 1
    %p188 = por %p186, %p187
    %p189 = scmp.ne.s32.totalorder %s178, %s179
    %p190 = scmp.eq.s32.totalorder %s18, 0
    %p191 = por %p189, %p190
    %p192 = scmp.ne.s32.totalorder %s178, %s179
    %p193 = scmp.eq.s32.totalorder %s19, 1
    %p194 = por %p192, %p193
    %p196 = scmp.ne.s32.totalorder %s179, %s195
    %p197 = scmp.eq.s32.totalorder %s19, 0
    %p198 = por %p196, %p197
    %p199 = scmp.le.s32.totalorder 1, %s13
    %p200 = scmp.lt.s32.totalorder %s13, 3
    %p201 = pnand %p199, %p200
    %p202 = pneg %p201
    // Predicated region
    $region9: #{forward.14} parent=5 // pred_check
      _
    $region10: #{forward.14} parent=5 // pred_check_branch
      %204 = sbr.rel (%p201) target = $region12
    $region11: #{forward.14} parent=5 // pred_region
      %s205 = ssub.s32 %s13, 1
      // Predicated region
      $region13: #{forward.14} parent=11 // pred_check
        %p206 = pneg %p60
      $region14: #{forward.14} parent=11 // pred_check_branch
        %208 = sbr.rel (%p206) target = $region16
      $region15: #{forward.14} parent=11 // pred_region
        _
      $region16: #{forward.14} parent=11 // pred_fallthru
        _
      // Predicated region
      $region17: #{forward.14} parent=11 // pred_check
        %p209 = pneg %p81
      $region18: #{forward.14} parent=11 // pred_check_branch
        %211 = sbr.rel (%p209) target = $region20
      $region19: #{forward.14} parent=11 // pred_region
        _
      $region20: #{forward.14} parent=11 // pred_fallthru
        _
      // Predicated region
      $region21: #{forward.14} parent=11 // pred_check
        %p212 = pneg %p102
      $region22: #{forward.14} parent=11 // pred_check_branch
        %214 = sbr.rel (%p212) target = $region24
      $region23: #{forward.14} parent=11 // pred_region
        _
      $region24: #{forward.14} parent=11 // pred_fallthru
        _
      // Predicated region
      $region25: #{forward.14} parent=11 // pred_check
        %p215 = pneg %p123
      $region26: #{forward.14} parent=11 // pred_check_branch
        %217 = sbr.rel (%p215) target = $region28
      $region27: #{forward.14} parent=11 // pred_region
        _
      $region28: #{forward.14} parent=11 // pred_fallthru
        _
      // Predicated region
      $region29: #{forward.14} parent=11 // pred_check
        %p218 = pneg %p144
      $region30: #{forward.14} parent=11 // pred_check_branch
        %220 = sbr.rel (%p218) target = $region32
      $region31: #{forward.14} parent=11 // pred_region
        _
      $region32: #{forward.14} parent=11 // pred_fallthru
        _
      // Predicated region
      $region33: #{forward.14} parent=11 // pred_check
        %p221 = pneg %p165
      $region34: #{forward.14} parent=11 // pred_check_branch
        %223 = sbr.rel (%p221) target = $region36
      $region35: #{forward.14} parent=11 // pred_region
        _
      $region36: #{forward.14} parent=11 // pred_fallthru
        _
    $region12: #{forward.14} parent=5 // pred_fallthru
      _
    %p224 = scmp.lt.s32.totalorder %s13, 2
    // Predicated region
    $region37: #{forward.14} parent=5 // pred_check
      %p225 = pneg %p224
    $region38: #{forward.14} parent=5 // pred_check_branch
      %227 = sbr.rel (%p225) target = $region40
    $region39: #{forward.14} parent=5 // pred_region
      // Predicated region
      $region41: #{forward.14} parent=39 // pred_check
        %p228 = pneg %p33
      $region42: #{forward.14} parent=39 // pred_check_branch
        %230 = sbr.rel (%p228) target = $region44
      $region43: #{forward.14} parent=39 // pred_region
        %p231 = scmp.lt.s32.totalorder %s13, 1
        %s232 = scalar_select %p231, %s13, 1
        %s233 = smul.addr %s232, 8
        %s234 = scalar_lea.vmem %s0, %s233
      $region44: #{forward.14} parent=39 // pred_fallthru
        _
    $region40: #{forward.14} parent=5 // pred_fallthru
      _
    %p235 = scmp.le.s32.totalorder 1, %s13
    %p236 = scmp.lt.s32.totalorder %s13, 3
    %p237 = pnand %p235, %p236
    %p238 = pneg %p237
    // Predicated region
    $region45: #{forward.14} parent=5 // pred_check
      _
    $region46: #{forward.14} parent=5 // pred_check_branch
      %240 = sbr.rel (%p237) target = $region48
    $region47: #{forward.14} parent=5 // pred_region
      %s241 = ssub.s32 %s13, 1
      %p242 = scmp.lt.s32.totalorder %s18, 1
      %s243 = scalar_select %p242, %s18, 1
      %s244 = smul.addr %s243, 8
      %s245 = scalar_lea.vmem %s0, %s244
      %p246 = pneg %p39
      %p247 = pneg %p36
      %p248 = pneg %p60
      %p249 = pneg %p57
      %p250 = pneg %p81
      %p251 = pneg %p78
      %p252 = pneg %p102
      %p253 = pneg %p99
      %p254 = pneg %p123
      %p255 = pneg %p120
      %p256 = pneg %p144
      %p257 = pneg %p141
      %p258 = pneg %p165
      %p259 = pneg %p162
      %p260 = pneg %p191
      %p261 = pneg %p188
      %p262 = scmp.lt.s32.totalorder %s18, 1
      %s263 = scalar_select %p262, %s18, 1
      %s264 = smul.addr %s263, 8
      %s265 = scalar_lea.vmem %s7, %s264
      %p266 = scmp.lt.s32.totalorder %s18, 1
      %s267 = scalar_select %p266, %s18, 1
      %s268 = smul.addr %s267, 8
      %s269 = scalar_lea.vmem %s0, %s268
      %p270 = scmp.lt.s32.totalorder %s18, 1
      %s271 = scalar_select %p270, %s18, 1
      %s272 = smul.addr %s271, 8
      %s273 = scalar_lea.vmem %s7, %s272
      %v275 = vld [vmem:[%s269] sm:$0xff]
      %v276 = vpack.c.bf16 %v275, %v275
      %v277 = vld [vmem:[%s1] sm:$0xf]
      %v278 = vld [vmem:[%s1 + $0x4] sm:$0xf]
      %v279 = vld [vmem:[%s1 + $0x8] sm:$0xf]
      %v280 = vld [vmem:[%s1 + $0xc] sm:$0xf]
      %v281 = vld [vmem:[%s2] sm:$0x1]
      %v283 = vlaneseq
      %v284 = vshrl.u32 %v283, 7
      %v285 = vsub.s32 0, %v284
      %v286 = vrot.slane %v281, %v285
      %v292 = vunpack.c.l.b16 %v277
      %v293 = vunpack.c.l.b16 %v278
      %v294 = vunpack.c.l.b16 %v279
      %v295 = vunpack.c.l.b16 %v280
      %v296 = vpack.c.b16 %v293, %v292
      %v297 = vpack.c.b16 %v295, %v294
      %vm300 = vcmask 261120
      %v302 = vsel %vm300, %v276, 0
      %304 = vmatprep.subr.bf16.mxu0 0
      %305 = vmatpush1.bf16.msra.mxu0 %v296
      %306 = vmatprep.subr.bf16.mxu0 0
      %307 = vmatpush1.bf16.msra.mxu0 %v297
      %308 = vmatprep.subr.bf16.mxu0 0
      %309 = vmatpush1.bf16.msra.mxu0 0
      %310 = vmatprep.subr.bf16.mxu0 0
      %311 = vmatpush1.bf16.msra.mxu0 0
      %312 = vmatprep.subr.bf16.mxu0 0
      %313 = vmatpush1.bf16.msra.mxu0 0
      %314 = vmatprep.subr.bf16.mxu0 0
      %315 = vmatpush1.bf16.msra.mxu0 0
      %316 = vmatprep.subr.bf16.mxu0 0
      %317 = vmatpush1.bf16.msra.mxu0 0
      %318 = vmatprep.subr.bf16.mxu0 0
      %319 = vmatpush1.bf16.msra.mxu0 0
      %320 = vmatprep.subr.bf16.mxu0 0
      %321 = vmatpush1.bf16.msra.mxu0 0
      %322 = vmatprep.subr.bf16.mxu0 0
      %323 = vmatpush1.bf16.msra.mxu0 0
      %324 = vmatprep.subr.bf16.mxu0 0
      %325 = vmatpush1.bf16.msra.mxu0 0
      %326 = vmatprep.subr.bf16.mxu0 0
      %327 = vmatpush1.bf16.msra.mxu0 0
      %328 = vmatprep.subr.bf16.mxu0 0
      %329 = vmatpush1.bf16.msra.mxu0 0
      %330 = vmatprep.subr.bf16.mxu0 0
      %331 = vmatpush1.bf16.msra.mxu0 0
      %332 = vmatprep.subr.bf16.mxu0 0
      %333 = vmatpush1.bf16.msra.mxu0 0
      %334 = vmatprep.subr.bf16.mxu0 0
      %335 = vmatpush1.bf16.msra.mxu0 0
      %336 = vmatprep.mubr.bf16.mxu0 0
      %337 = vmatmul.mubr.bf16.gmra.mrb[0].mxu0 %v302
      %v338 = vpop.f32.mrb[0].mxu0
      %v339 = vadd.f32 %v286, %v338
      %v340 = vpop.f32.mrb[0].mxu0
      %v341 = vpop.f32.mrb[0].mxu0
      %v342 = vpop.f32.mrb[0].mxu0
      %343 = vdwg.mxu0
      %v344 = vpack.c.bf16 %v339, %v339
      %346 = vrot.lane.b32.xlu0 %v344, 96
      %v347 = vpop.permute.xlu0 %346
      %vm348 = vcmask 64512
      %v350 = vsel %vm348, %v344, 0
      %v353 = vsel %vm348, %v347, 0
      %355 = vmatprep.subr.bf16.mxu0 0
      %356 = vmatpush1.bf16.xpose.msra.mxu0 %v353
      %357 = vmatprep.subr.bf16.mxu0 0
      %358 = vmatpush1.bf16.xpose.msra.mxu0 0
      %359 = vmatprep.subr.bf16.mxu0 0
      %360 = vmatpush1.bf16.xpose.msra.mxu0 0
      %361 = vmatprep.subr.bf16.mxu0 0
      %362 = vmatpush1.bf16.xpose.msra.mxu0 0
      %363 = vmatprep.subr.bf16.mxu0 0
      %364 = vmatpush1.bf16.xpose.msra.mxu0 0
      %365 = vmatprep.subr.bf16.mxu0 0
      %366 = vmatpush1.bf16.xpose.msra.mxu0 0
      %367 = vmatprep.subr.bf16.mxu0 0
      %368 = vmatpush1.bf16.xpose.msra.mxu0 0
      %369 = vmatprep.subr.bf16.mxu0 0
      %370 = vmatpush1.bf16.xpose.msra.mxu0 0
      %371 = vmatprep.subr.bf16.mxu0 0
      %372 = vmatpush1.bf16.xpose.msra.mxu0 0
      %373 = vmatprep.subr.bf16.mxu0 0
      %374 = vmatpush1.bf16.xpose.msra.mxu0 0
      %375 = vmatprep.subr.bf16.mxu0 0
      %376 = vmatpush1.bf16.xpose.msra.mxu0 0
      %377 = vmatprep.subr.bf16.mxu0 0
      %378 = vmatpush1.bf16.xpose.msra.mxu0 0
      %379 = vmatprep.subr.bf16.mxu0 0
      %380 = vmatpush1.bf16.xpose.msra.mxu0 0
      %381 = vmatprep.subr.bf16.mxu0 0
      %382 = vmatpush1.bf16.xpose.msra.mxu0 0
      %383 = vmatprep.subr.bf16.mxu0 0
      %384 = vmatpush1.bf16.xpose.msra.mxu0 0
      %385 = vmatprep.subr.bf16.mxu0 0
      %386 = vmatpush1.bf16.xpose.msra.mxu0 0
      %387 = vmatprep.mubr.bf16.mxu0 0
      %388 = vmatmul.mubr.bf16.gmra.mrb[0].mxu0 %v350
      %v389 = vpop.f32.mrb[0].mxu0
      %v390 = vadd.f32 0.0, %v389
      %v391 = vpop.f32.mrb[0].mxu0
      %v392 = vpop.f32.mrb[0].mxu0
      %v393 = vpop.f32.mrb[0].mxu0
      %394 = vdwg.mxu0
      %v395 = vmul.f32 %v390, 0.35355338
      %v396 = vsel %vm348, %v395, -inf
      %397 = vmax.xlane.f32.xlu0 %v396
      %v398 = vpop.xlane.xlu0 %397
      %v399 = vsub.f32 %v395, %v398
      %v400 = vmul.f32 %v399, 1.442695
      %v401 = vpow.pop %v400
      %v402 = vsel %vm348, %v401, 0.0
      %403 = vadd.xlane.f32.xlu0 %v402
      %v404 = vpop.xlane.xlu0 %403
      %v405 = vrcp.pop %v404
      %v406 = vmul.f32 %v401, %v405
      %v407 = vpack.c.bf16 %v406, %v406
      %408 = vrot.lane.b32.xlu0 %v344, 64
      %v409 = vpop.permute.xlu0 %408
      %v411 = vsel %vm348, %v407, 0
      %vm413 = vcmask 1043456
      %v415 = vsel %vm413, %v409, 0
      %417 = vmatprep.subr.bf16.mxu0 0
      %418 = vmatpush1.bf16.msra.mxu0 %v415
      %419 = vmatprep.subr.bf16.mxu0 0
      %420 = vmatpush1.bf16.msra.mxu0 0
      %421 = vmatprep.subr.bf16.mxu0 0
      %422 = vmatpush1.bf16.msra.mxu0 0
      %423 = vmatprep.subr.bf16.mxu0 0
      %424 = vmatpush1.bf16.msra.mxu0 0
      %425 = vmatprep.subr.bf16.mxu0 0
      %426 = vmatpush1.bf16.msra.mxu0 0
      %427 = vmatprep.subr.bf16.mxu0 0
      %428 = vmatpush1.bf16.msra.mxu0 0
      %429 = vmatprep.subr.bf16.mxu0 0
      %430 = vmatpush1.bf16.msra.mxu0 0
      %431 = vmatprep.subr.bf16.mxu0 0
      %432 = vmatpush1.bf16.msra.mxu0 0
      %433 = vmatprep.subr.bf16.mxu0 0
      %434 = vmatpush1.bf16.msra.mxu0 0
      %435 = vmatprep.subr.bf16.mxu0 0
      %436 = vmatpush1.bf16.msra.mxu0 0
      %437 = vmatprep.subr.bf16.mxu0 0
      %438 = vmatpush1.bf16.msra.mxu0 0
      %439 = vmatprep.subr.bf16.mxu0 0
      %440 = vmatpush1.bf16.msra.mxu0 0
      %441 = vmatprep.subr.bf16.mxu0 0
      %442 = vmatpush1.bf16.msra.mxu0 0
      %443 = vmatprep.subr.bf16.mxu0 0
      %444 = vmatpush1.bf16.msra.mxu0 0
      %445 = vmatprep.subr.bf16.mxu0 0
      %446 = vmatpush1.bf16.msra.mxu0 0
      %447 = vmatprep.subr.bf16.mxu0 0
      %448 = vmatpush1.bf16.msra.mxu0 0
      %449 = vmatprep.mubr.bf16.mxu0 0
      %450 = vmatmul.mubr.bf16.gmra.mrb[0].mxu0 %v411
      %v451 = vpop.f32.mrb[0].mxu0
      %v452 = vadd.f32 0.0, %v451
      %v453 = vpop.f32.mrb[0].mxu0
      %v454 = vpop.f32.mrb[0].mxu0
      %v455 = vpop.f32.mrb[0].mxu0
      %456 = vdwg.mxu0
      %457 = vrot.lane.b32.xlu0 %v344, 120
      %v458 = vpop.permute.xlu0 %457
      %459 = vrot.lane.b32.xlu0 %v344, 88
      %v460 = vpop.permute.xlu0 %459
      %v462 = vsel %vm348, %v458, 0
      %v465 = vsel %vm348, %v460, 0
      %467 = vmatprep.subr.bf16.mxu0 0
      %468 = vmatpush1.bf16.xpose.msra.mxu0 %v465
      %469 = vmatprep.subr.bf16.mxu0 0
      %470 = vmatpush1.bf16.xpose.msra.mxu0 0
      %471 = vmatprep.subr.bf16.mxu0 0
      %472 = vmatpush1.bf16.xpose.msra.mxu0 0
      %473 = vmatprep.subr.bf16.mxu0 0
      %474 = vmatpush1.bf16.xpose.msra.mxu0 0
      %475 = vmatprep.subr.bf16.mxu0 0
      %476 = vmatpush1.bf16.xpose.msra.mxu0 0
      %477 = vmatprep.subr.bf16.mxu0 0
      %478 = vmatpush1.bf16.xpose.msra.mxu0 0
      %479 = vmatprep.subr.bf16.mxu0 0
      %480 = vmatpush1.bf16.xpose.msra.mxu0 0
      %481 = vmatprep.subr.bf16.mxu0 0
      %482 = vmatpush1.bf16.xpose.msra.mxu0 0
      %483 = vmatprep.subr.bf16.mxu0 0
      %484 = vmatpush1.bf16.xpose.msra.mxu0 0
      %485 = vmatprep.subr.bf16.mxu0 0
      %486 = vmatpush1.bf16.xpose.msra.mxu0 0
      %487 = vmatprep.subr.bf16.mxu0 0
      %488 = vmatpush1.bf16.xpose.msra.mxu0 0
      %489 = vmatprep.subr.bf16.mxu0 0
      %490 = vmatpush1.bf16.xpose.msra.mxu0 0
      %491 = vmatprep.subr.bf16.mxu0 0
      %492 = vmatpush1.bf16.xpose.msra.mxu0 0
      %493 = vmatprep.subr.bf16.mxu0 0
      %494 = vmatpush1.bf16.xpose.msra.mxu0 0
      %495 = vmatprep.subr.bf16.mxu0 0
      %496 = vmatpush1.bf16.xpose.msra.mxu0 0
      %497 = vmatprep.subr.bf16.mxu0 0
      %498 = vmatpush1.bf16.xpose.msra.mxu0 0
      %499 = vmatprep.mubr.bf16.mxu0 0
      %500 = vmatmul.mubr.bf16.gmra.mrb[0].mxu0 %v462
      %v501 = vpop.f32.mrb[0].mxu0
      %v502 = vadd.f32 0.0, %v501
      %v503 = vpop.f32.mrb[0].mxu0
      %v504 = vpop.f32.mrb[0].mxu0
      %v505 = vpop.f32.mrb[0].mxu0
      %506 = vdwg.mxu0
      %v507 = vmul.f32 %v502, 0.35355338
      %v508 = vsel %vm348, %v507, -inf
      %509 = vmax.xlane.f32.xlu0 %v508
      %v510 = vpop.xlane.xlu0 %509
      %v511 = vsub.f32 %v507, %v510
      %v512 = vmul.f32 %v511, 1.442695
      %v513 = vpow.pop %v512
      %v514 = vsel %vm348, %v513, 0.0
      %515 = vadd.xlane.f32.xlu0 %v514
      %v516 = vpop.xlane.xlu0 %515
      %v517 = vrcp.pop %v516
      %v518 = vmul.f32 %v513, %v517
      %v519 = vpack.c.bf16 %v518, %v518
      %520 = vrot.lane.b32.xlu0 %v344, 56
      %v521 = vpop.permute.xlu0 %520
      %v523 = vsel %vm348, %v519, 0
      %v526 = vsel %vm413, %v521, 0
      %528 = vmatprep.subr.bf16.mxu0 0
      %529 = vmatpush1.bf16.msra.mxu0 %v526
      %530 = vmatprep.subr.bf16.mxu0 0
      %531 = vmatpush1.bf16.msra.mxu0 0
      %532 = vmatprep.subr.bf16.mxu0 0
      %533 = vmatpush1.bf16.msra.mxu0 0
      %534 = vmatprep.subr.bf16.mxu0 0
      %535 = vmatpush1.bf16.msra.mxu0 0
      %536 = vmatprep.subr.bf16.mxu0 0
      %537 = vmatpush1.bf16.msra.mxu0 0
      %538 = vmatprep.subr.bf16.mxu0 0
      %539 = vmatpush1.bf16.msra.mxu0 0
      %540 = vmatprep.subr.bf16.mxu0 0
      %541 = vmatpush1.bf16.msra.mxu0 0
      %542 = vmatprep.subr.bf16.mxu0 0
      %543 = vmatpush1.bf16.msra.mxu0 0
      %544 = vmatprep.subr.bf16.mxu0 0
      %545 = vmatpush1.bf16.msra.mxu0 0
      %546 = vmatprep.subr.bf16.mxu0 0
      %547 = vmatpush1.bf16.msra.mxu0 0
      %548 = vmatprep.subr.bf16.mxu0 0
      %549 = vmatpush1.bf16.msra.mxu0 0
      %550 = vmatprep.subr.bf16.mxu0 0
      %551 = vmatpush1.bf16.msra.mxu0 0
      %552 = vmatprep.subr.bf16.mxu0 0
      %553 = vmatpush1.bf16.msra.mxu0 0
      %554 = vmatprep.subr.bf16.mxu0 0
      %555 = vmatpush1.bf16.msra.mxu0 0
      %556 = vmatprep.subr.bf16.mxu0 0
      %557 = vmatpush1.bf16.msra.mxu0 0
      %558 = vmatprep.subr.bf16.mxu0 0
      %559 = vmatpush1.bf16.msra.mxu0 0
      %560 = vmatprep.mubr.bf16.mxu0 0
      %561 = vmatmul.mubr.bf16.gmra.mrb[0].mxu0 %v523
      %v562 = vpop.f32.mrb[0].mxu0
      %v563 = vadd.f32 0.0, %v562
      %v564 = vpop.f32.mrb[0].mxu0
      %v565 = vpop.f32.mrb[0].mxu0
      %v566 = vpop.f32.mrb[0].mxu0
      %567 = vdwg.mxu0
      %568 = vrot.lane.b32.xlu0 %v344, 112
      %v569 = vpop.permute.xlu0 %568
      %570 = vrot.lane.b32.xlu0 %v344, 80
      %v571 = vpop.permute.xlu0 %570
      %v573 = vsel %vm348, %v569, 0
      %v576 = vsel %vm348, %v571, 0
      %578 = vmatprep.subr.bf16.mxu0 0
      %579 = vmatpush1.bf16.xpose.msra.mxu0 %v576
      %580 = vmatprep.subr.bf16.mxu0 0
      %581 = vmatpush1.bf16.xpose.msra.mxu0 0
      %582 = vmatprep.subr.bf16.mxu0 0
      %583 = vmatpush1.bf16.xpose.msra.mxu0 0
      %584 = vmatprep.subr.bf16.mxu0 0
      %585 = vmatpush1.bf16.xpose.msra.mxu0 0
      %586 = vmatprep.subr.bf16.mxu0 0
      %587 = vmatpush1.bf16.xpose.msra.mxu0 0
      %588 = vmatprep.subr.bf16.mxu0 0
      %589 = vmatpush1.bf16.xpose.msra.mxu0 0
      %590 = vmatprep.subr.bf16.mxu0 0
      %591 = vmatpush1.bf16.xpose.msra.mxu0 0
      %592 = vmatprep.subr.bf16.mxu0 0
      %593 = vmatpush1.bf16.xpose.msra.mxu0 0
      %594 = vmatprep.subr.bf16.mxu0 0
      %595 = vmatpush1.bf16.xpose.msra.mxu0 0
      %596 = vmatprep.subr.bf16.mxu0 0
      %597 = vmatpush1.bf16.xpose.msra.mxu0 0
      %598 = vmatprep.subr.bf16.mxu0 0
      %599 = vmatpush1.bf16.xpose.msra.mxu0 0
      %600 = vmatprep.subr.bf16.mxu0 0
      %601 = vmatpush1.bf16.xpose.msra.mxu0 0
      %602 = vmatprep.subr.bf16.mxu0 0
      %603 = vmatpush1.bf16.xpose.msra.mxu0 0
      %604 = vmatprep.subr.bf16.mxu0 0
      %605 = vmatpush1.bf16.xpose.msra.mxu0 0
      %606 = vmatprep.subr.bf16.mxu0 0
      %607 = vmatpush1.bf16.xpose.msra.mxu0 0
      %608 = vmatprep.subr.bf16.mxu0 0
      %609 = vmatpush1.bf16.xpose.msra.mxu0 0
      %610 = vmatprep.mubr.bf16.mxu0 0
      %611 = vmatmul.mubr.bf16.gmra.mrb[0].mxu0 %v573
      %v612 = vpop.f32.mrb[0].mxu0
      %v613 = vadd.f32 0.0, %v612
      %v614 = vpop.f32.mrb[0].mxu0
      %v615 = vpop.f32.mrb[0].mxu0
      %v616 = vpop.f32.mrb[0].mxu0
      %617 = vdwg.mxu0
      %v618 = vmul.f32 %v613, 0.35355338
      %v619 = vsel %vm348, %v618, -inf
      %620 = vmax.xlane.f32.xlu0 %v619
      %v621 = vpop.xlane.xlu0 %620
      %v622 = vsub.f32 %v618, %v621
      %v623 = vmul.f32 %v622, 1.442695
      %v624 = vpow.pop %v623
      %v625 = vsel %vm348, %v624, 0.0
      %626 = vadd.xlane.f32.xlu0 %v625
      %v627 = vpop.xlane.xlu0 %626
      %v628 = vrcp.pop %v627
      %v629 = vmul.f32 %v624, %v628
      %v630 = vpack.c.bf16 %v629, %v629
      %631 = vrot.lane.b32.xlu0 %v344, 48
      %v632 = vpop.permute.xlu0 %631
      %v634 = vsel %vm348, %v630, 0
      %v637 = vsel %vm413, %v632, 0
      %639 = vmatprep.subr.bf16.mxu0 0
      %640 = vmatpush1.bf16.msra.mxu0 %v637
      %641 = vmatprep.subr.bf16.mxu0 0
      %642 = vmatpush1.bf16.msra.mxu0 0
      %643 = vmatprep.subr.bf16.mxu0 0
      %644 = vmatpush1.bf16.msra.mxu0 0
      %645 = vmatprep.subr.bf16.mxu0 0
      %646 = vmatpush1.bf16.msra.mxu0 0
      %647 = vmatprep.subr.bf16.mxu0 0
      %648 = vmatpush1.bf16.msra.mxu0 0
      %649 = vmatprep.subr.bf16.mxu0 0
      %650 = vmatpush1.bf16.msra.mxu0 0
      %651 = vmatprep.subr.bf16.mxu0 0
      %652 = vmatpush1.bf16.msra.mxu0 0
      %653 = vmatprep.subr.bf16.mxu0 0
      %654 = vmatpush1.bf16.msra.mxu0 0
      %655 = vmatprep.subr.bf16.mxu0 0
      %656 = vmatpush1.bf16.msra.mxu0 0
      %657 = vmatprep.subr.bf16.mxu0 0
      %658 = vmatpush1.bf16.msra.mxu0 0
      %659 = vmatprep.subr.bf16.mxu0 0
      %660 = vmatpush1.bf16.msra.mxu0 0
      %661 = vmatprep.subr.bf16.mxu0 0
      %662 = vmatpush1.bf16.msra.mxu0 0
      %663 = vmatprep.subr.bf16.mxu0 0
      %664 = vmatpush1.bf16.msra.mxu0 0
      %665 = vmatprep.subr.bf16.mxu0 0
      %666 = vmatpush1.bf16.msra.mxu0 0
      %667 = vmatprep.subr.bf16.mxu0 0
      %668 = vmatpush1.bf16.msra.mxu0 0
      %669 = vmatprep.subr.bf16.mxu0 0
      %670 = vmatpush1.bf16.msra.mxu0 0
      %671 = vmatprep.mubr.bf16.mxu0 0
      %672 = vmatmul.mubr.bf16.gmra.mrb[0].mxu0 %v634
      %v673 = vpop.f32.mrb[0].mxu0
      %v674 = vadd.f32 0.0, %v673
      %v675 = vpop.f32.mrb[0].mxu0
      %v676 = vpop.f32.mrb[0].mxu0
      %v677 = vpop.f32.mrb[0].mxu0
      %678 = vdwg.mxu0
      %679 = vrot.lane.b32.xlu0 %v344, 104
      %v680 = vpop.permute.xlu0 %679
      %681 = vrot.lane.b32.xlu0 %v344, 72
      %v682 = vpop.permute.xlu0 %681
      %v684 = vsel %vm348, %v680, 0
      %v687 = vsel %vm348, %v682, 0
      %689 = vmatprep.subr.bf16.mxu0 0
      %690 = vmatpush1.bf16.xpose.msra.mxu0 %v687
      %691 = vmatprep.subr.bf16.mxu0 0
      %692 = vmatpush1.bf16.xpose.msra.mxu0 0
      %693 = vmatprep.subr.bf16.mxu0 0
      %694 = vmatpush1.bf16.xpose.msra.mxu0 0
      %695 = vmatprep.subr.bf16.mxu0 0
      %696 = vmatpush1.bf16.xpose.msra.mxu0 0
      %697 = vmatprep.subr.bf16.mxu0 0
      %698 = vmatpush1.bf16.xpose.msra.mxu0 0
      %699 = vmatprep.subr.bf16.mxu0 0
      %700 = vmatpush1.bf16.xpose.msra.mxu0 0
      %701 = vmatprep.subr.bf16.mxu0 0
      %702 = vmatpush1.bf16.xpose.msra.mxu0 0
      %703 = vmatprep.subr.bf16.mxu0 0
      %704 = vmatpush1.bf16.xpose.msra.mxu0 0
      %705 = vmatprep.subr.bf16.mxu0 0
      %706 = vmatpush1.bf16.xpose.msra.mxu0 0
      %707 = vmatprep.subr.bf16.mxu0 0
      %708 = vmatpush1.bf16.xpose.msra.mxu0 0
      %709 = vmatprep.subr.bf16.mxu0 0
      %710 = vmatpush1.bf16.xpose.msra.mxu0 0
      %711 = vmatprep.subr.bf16.mxu0 0
      %712 = vmatpush1.bf16.xpose.msra.mxu0 0
      %713 = vmatprep.subr.bf16.mxu0 0
      %714 = vmatpush1.bf16.xpose.msra.mxu0 0
      %715 = vmatprep.subr.bf16.mxu0 0
      %716 = vmatpush1.bf16.xpose.msra.mxu0 0
      %717 = vmatprep.subr.bf16.mxu0 0
      %718 = vmatpush1.bf16.xpose.msra.mxu0 0
      %719 = vmatprep.subr.bf16.mxu0 0
      %720 = vmatpush1.bf16.xpose.msra.mxu0 0
      %721 = vmatprep.mubr.bf16.mxu0 0
      %722 = vmatmul.mubr.bf16.gmra.mrb[0].mxu0 %v684
      %v723 = vpop.f32.mrb[0].mxu0
      %v724 = vadd.f32 0.0, %v723
      %v725 = vpop.f32.mrb[0].mxu0
      %v726 = vpop.f32.mrb[0].mxu0
      %v727 = vpop.f32.mrb[0].mxu0
      %728 = vdwg.mxu0
      %v729 = vmul.f32 %v724, 0.35355338
      %v730 = vsel %vm348, %v729, -inf
      %731 = vmax.xlane.f32.xlu0 %v730
      %v732 = vpop.xlane.xlu0 %731
      %v733 = vsub.f32 %v729, %v732
      %v734 = vmul.f32 %v733, 1.442695
      %v735 = vpow.pop %v734
      %v736 = vsel %vm348, %v735, 0.0
      %737 = vadd.xlane.f32.xlu0 %v736
      %v738 = vpop.xlane.xlu0 %737
      %v739 = vrcp.pop %v738
      %v740 = vmul.f32 %v735, %v739
      %v741 = vpack.c.bf16 %v740, %v740
      %742 = vrot.lane.b32.xlu0 %v344, 40
      %v743 = vpop.permute.xlu0 %742
      %v745 = vsel %vm348, %v741, 0
      %v748 = vsel %vm413, %v743, 0
      %750 = vmatprep.subr.bf16.mxu0 0
      %751 = vmatpush1.bf16.msra.mxu0 %v748
      %752 = vmatprep.subr.bf16.mxu0 0
      %753 = vmatpush1.bf16.msra.mxu0 0
      %754 = vmatprep.subr.bf16.mxu0 0
      %755 = vmatpush1.bf16.msra.mxu0 0
      %756 = vmatprep.subr.bf16.mxu0 0
      %757 = vmatpush1.bf16.msra.mxu0 0
      %758 = vmatprep.subr.bf16.mxu0 0
      %759 = vmatpush1.bf16.msra.mxu0 0
      %760 = vmatprep.subr.bf16.mxu0 0
      %761 = vmatpush1.bf16.msra.mxu0 0
      %762 = vmatprep.subr.bf16.mxu0 0
      %763 = vmatpush1.bf16.msra.mxu0 0
      %764 = vmatprep.subr.bf16.mxu0 0
      %765 = vmatpush1.bf16.msra.mxu0 0
      %766 = vmatprep.subr.bf16.mxu0 0
      %767 = vmatpush1.bf16.msra.mxu0 0
      %768 = vmatprep.subr.bf16.mxu0 0
      %769 = vmatpush1.bf16.msra.mxu0 0
      %770 = vmatprep.subr.bf16.mxu0 0
      %771 = vmatpush1.bf16.msra.mxu0 0
      %772 = vmatprep.subr.bf16.mxu0 0
      %773 = vmatpush1.bf16.msra.mxu0 0
      %774 = vmatprep.subr.bf16.mxu0 0
      %775 = vmatpush1.bf16.msra.mxu0 0
      %776 = vmatprep.subr.bf16.mxu0 0
      %777 = vmatpush1.bf16.msra.mxu0 0
      %778 = vmatprep.subr.bf16.mxu0 0
      %779 = vmatpush1.bf16.msra.mxu0 0
      %780 = vmatprep.subr.bf16.mxu0 0
      %781 = vmatpush1.bf16.msra.mxu0 0
      %782 = vmatprep.mubr.bf16.mxu0 0
      %783 = vmatmul.mubr.bf16.gmra.mrb[0].mxu0 %v745
      %v784 = vpop.f32.mrb[0].mxu0
      %v785 = vadd.f32 0.0, %v784
      %v786 = vpop.f32.mrb[0].mxu0
      %v787 = vpop.f32.mrb[0].mxu0
      %v788 = vpop.f32.mrb[0].mxu0
      %789 = vdwg.mxu0
      %791 = vrot.lane.b32.xlu0 %v563, 8
      %v792 = vpop.permute.xlu0 %791
      %795 = vrot.lane.b32.xlu0 %v674, 16
      %v796 = vpop.permute.xlu0 %795
      %799 = vrot.lane.b32.xlu0 %v785, 24
      %v800 = vpop.permute.xlu0 %799
      %v802 = vsel %vm348, %v452, %v792
      %vm803 = vcmask 130048
      %v804 = vsel %vm803, %v802, %v796
      %vm805 = vcmask 195584
      %v806 = vsel %vm805, %v804, %v800
      %v807 = vpack.c.bf16 %v806, %v806
      %v808 = vld [vmem:[%s3] sm:$0xf]
      %v809 = vld [vmem:[%s3 + $0x4] sm:$0xf]
      %v810 = vld [vmem:[%s3 + $0x8] sm:$0xf]
      %v811 = vld [vmem:[%s3 + $0xc] sm:$0xf]
      %v816 = vunpack.c.l.b16 %v808
      %v817 = vunpack.c.l.b16 %v809
      %v818 = vunpack.c.l.b16 %v810
      %v819 = vunpack.c.l.b16 %v811
      %v820 = vpack.c.b16 %v817, %v816
      %v821 = vpack.c.b16 %v819, %v818
      %v825 = vsel %vm300, %v807, 0
      %827 = vmatprep.subr.bf16.mxu0 0
      %828 = vmatpush1.bf16.msra.mxu0 %v820
      %829 = vmatprep.subr.bf16.mxu0 0
      %830 = vmatpush1.bf16.msra.mxu0 %v821
      %831 = vmatprep.subr.bf16.mxu0 0
      %832 = vmatpush1.bf16.msra.mxu0 0
      %833 = vmatprep.subr.bf16.mxu0 0
      %834 = vmatpush1.bf16.msra.mxu0 0
      %835 = vmatprep.subr.bf16.mxu0 0
      %836 = vmatpush1.bf16.msra.mxu0 0
      %837 = vmatprep.subr.bf16.mxu0 0
      %838 = vmatpush1.bf16.msra.mxu0 0
      %839 = vmatprep.subr.bf16.mxu0 0
      %840 = vmatpush1.bf16.msra.mxu0 0
      %841 = vmatprep.subr.bf16.mxu0 0
      %842 = vmatpush1.bf16.msra.mxu0 0
      %843 = vmatprep.subr.bf16.mxu0 0
      %844 = vmatpush1.bf16.msra.mxu0 0
      %845 = vmatprep.subr.bf16.mxu0 0
      %846 = vmatpush1.bf16.msra.mxu0 0
      %847 = vmatprep.subr.bf16.mxu0 0
      %848 = vmatpush1.bf16.msra.mxu0 0
      %849 = vmatprep.subr.bf16.mxu0 0
      %850 = vmatpush1.bf16.msra.mxu0 0
      %851 = vmatprep.subr.bf16.mxu0 0
      %852 = vmatpush1.bf16.msra.mxu0 0
      %853 = vmatprep.subr.bf16.mxu0 0
      %854 = vmatpush1.bf16.msra.mxu0 0
      %855 = vmatprep.subr.bf16.mxu0 0
      %856 = vmatpush1.bf16.msra.mxu0 0
      %857 = vmatprep.subr.bf16.mxu0 0
      %858 = vmatpush1.bf16.msra.mxu0 0
      %859 = vmatprep.mubr.bf16.mxu0 0
      %860 = vmatmul.mubr.bf16.gmra.mrb[0].mxu0 %v825
      %v861 = vpop.f32.mrb[0].mxu0
      %v862 = vadd.f32 0.0, %v861
      %v863 = vpop.f32.mrb[0].mxu0
      %v864 = vpop.f32.mrb[0].mxu0
      %v865 = vpop.f32.mrb[0].mxu0
      %866 = vdwg.mxu0
      %v867 = vadd.f32 %v275, %v862
      %v868 = vld [vmem:[%s4] sm:$0x1]
      %v870 = vlaneseq
      %v871 = vshrl.u32 %v870, 7
      %v872 = vsub.s32 0, %v871
      %v873 = vrot.slane %v868, %v872
      %v875 = vadd.f32 %v867, %v873
      %876 = vst.msk [vmem:[%s273] sm:$0xff] %vm300, %v875
      %p877 = scmp.lt.s32.totalorder %s18, 1
      %s878 = scalar_select %p877, %s18, 1
      %s879 = smul.addr %s878, 8
      %s880 = scalar_lea.vmem %s7, %s879
      // Predicated region
      $region49: #{forward.14} parent=47 // pred_check
        %p881 = pneg %p188
      $region50: #{forward.14} parent=47 // pred_check_branch
        %883 = sbr.rel (%p881) target = $region52
      $region51: #{forward.14} parent=47 // pred_region
        _
      $region52: #{forward.14} parent=47 // pred_fallthru
        _
    $region48: #{forward.14} parent=5 // pred_fallthru
      _
    %p884 = scmp.le.s32.totalorder 2, %s13
    // Predicated region
    $region53: #{forward.14} parent=5 // pred_check
      %p885 = pneg %p884
    $region54: #{forward.14} parent=5 // pred_check_branch
      %887 = sbr.rel (%p885) target = $region56
    $region55: #{forward.14} parent=5 // pred_region
      %s888 = ssub.s32 %s13, 2
      // Predicated region
      $region57: #{forward.14} parent=55 // pred_check
        %p889 = pneg %p194
      $region58: #{forward.14} parent=55 // pred_check_branch
        %891 = sbr.rel (%p889) target = $region60
      $region59: #{forward.14} parent=55 // pred_region
        %p892 = scmp.lt.s32.totalorder %s19, 1
        %s893 = scalar_select %p892, %s19, 1
        %s894 = smul.addr %s893, 8
        %s895 = scalar_lea.vmem %s7, %s894
      $region60: #{forward.14} parent=55 // pred_fallthru
        _
    $region56: #{forward.14} parent=5 // pred_fallthru
      _
  $region6: #{forward.14} parent=0 // loop_footer
    %s17 = sadd.s32 1, %s13
  $region7: #{forward.14} parent=0 // loop_footer_branch
    %12 = sbr.rel target = $region3
  $region8: #{forward.14} parent=0 // loop_exit
    _

// kernel: forward.15
$region0: #{forward.15}
  #allocation0 [shape = 'u32[]', space=smem, size = 0x4, offset = 0x4, fixed_abs, tag = 'smem constant byte address 0x4 - core index']
  #allocation1 [shape = 'u32[144,128]{1,0:T(1,128)}', space=vmem, size = 0x12000, scoped, tag = 'internal scratch']
  %s0 = inlined_call_operand.vmem [shape: f32[2,8,32], index: 0, kind: input, shape index: {}]
  %s1 = inlined_call_operand.vmem [shape: bf16[32,96], index: 1, kind: input, shape index: {}]
  %s2 = inlined_call_operand.vmem [shape: f32[1,96], index: 2, kind: input, shape index: {}]
  %s3 = inlined_call_operand.vmem [shape: bf16[32,32], index: 3, kind: input, shape index: {}]
  %s4 = inlined_call_operand.vmem [shape: f32[1,32], index: 4, kind: input, shape index: {}]
  %s5 = inlined_call_operand.vmem [shape: f32[1,32], index: 5, kind: input, shape index: {}]
  %s6 = inlined_call_operand.vmem [shape: f32[1,32], index: 6, kind: input, shape index: {}]
  %s7 = inlined_call_operand.vmem [shape: f32[2,8,32], index: 7, kind: output, shape index: {}]
  %s8 = sld [smem:[#allocation0]]
  $region61: #{forward.15} parent=0
    _
  %s10 = ssub.s32 1, %s8
  %s11 = scalar_select 0, %s10, %s8
  loop: start=0, step=1, limit=4
  $region2: #{forward.15} parent=0 // loop_pre_header
    _
  $region3: #{forward.15} parent=0 // loop_header
    %s13 = sphi 0, %s17
    %p14 = scmp.ge.s32.totalorder %s13, 4
    %s23 = sphi 0, %s25
    %s26 = sphi 0, %s23
    %s27 = sphi 0, %s26
    %s43 = sphi 0, %s27
    %s47 = sphi 0, %s47
    %s49 = sphi 0, %s47
    %s50 = sphi 0, %s49
    %s64 = sphi 0, %s50
    %s68 = sphi 0, %s68
    %s70 = sphi 0, %s68
    %s71 = sphi 0, %s70
    %s85 = sphi 0, %s71
    %s89 = sphi 0, %s89
    %s91 = sphi 0, %s89
    %s92 = sphi 0, %s91
    %s106 = sphi 0, %s92
    %s110 = sphi 0, %s110
    %s112 = sphi 0, %s110
    %s113 = sphi 0, %s112
    %s127 = sphi 0, %s113
    %s131 = sphi 0, %s131
    %s133 = sphi 0, %s131
    %s134 = sphi 0, %s133
    %s148 = sphi 0, %s134
    %s152 = sphi 0, %s152
    %s154 = sphi 0, %s152
    %s155 = sphi 0, %s154
    %s169 = sphi 0, %s155
    %s175 = sphi 0, %s177
    %s178 = sphi 0, %s175
    %s179 = sphi 0, %s178
    %s195 = sphi 0, %s179
  $region4: #{forward.15} parent=0 // loop_header_branch
    %16 = sbr.rel (%p14) target = $region8
  $region5: #{forward.15} parent=0 // loop_body
    %s18 = ssub.s32 %s13, 1
    %s19 = ssub.s32 %s13, 2
    %s20 = sadd.s32 %s13, 1
    %s21 = ssub.s32 %s13, %s20
    %p22 = scmp.eq.s32.totalorder %s21, 0
    %s24 = sadd.s32 %s23, 1
    %s25 = scalar_select %p22, %s23, %s24
    %p28 = pneg %p22
    %p29 = scmp.eq.s32.totalorder %s13, 1
    %p30 = por %p28, %p29
    %p31 = scmp.ne.s32.totalorder %s23, %s26
    %p32 = scmp.eq.s32.totalorder %s13, 0
    %p33 = por %p31, %p32
    %p34 = scmp.ne.s32.totalorder %s23, %s26
    %p35 = scmp.eq.s32.totalorder %s18, 1
    %p36 = por %p34, %p35
    %p37 = scmp.ne.s32.totalorder %s26, %s27
    %p38 = scmp.eq.s32.totalorder %s18, 0
    %p39 = por %p37, %p38
    %p40 = scmp.ne.s32.totalorder %s26, %s27
    %p41 = scmp.eq.s32.totalorder %s19, 1
    %p42 = por %p40, %p41
    %p44 = scmp.ne.s32.totalorder %s27, %s43
    %p45 = scmp.eq.s32.totalorder %s19, 0
    %p46 = por %p44, %p45
    %s48 = sadd.s32 %s47, 1
    %p51 = scmp.eq.s32.totalorder %s13, 1
    %p52 = scmp.ne.s32.totalorder %s47, %s49
    %p53 = scmp.eq.s32.totalorder %s13, 0
    %p54 = por %p52, %p53
    %p55 = scmp.ne.s32.totalorder %s47, %s49
    %p56 = scmp.eq.s32.totalorder %s18, 1
    %p57 = por %p55, %p56
    %p58 = scmp.ne.s32.totalorder %s49, %s50
    %p59 = scmp.eq.s32.totalorder %s18, 0
    %p60 = por %p58, %p59
    %p61 = scmp.ne.s32.totalorder %s49, %s50
    %p62 = scmp.eq.s32.totalorder %s19, 1
    %p63 = por %p61, %p62
    %p65 = scmp.ne.s32.totalorder %s50, %s64
    %p66 = scmp.eq.s32.totalorder %s19, 0
    %p67 = por %p65, %p66
    %s69 = sadd.s32 %s68, 1
    %p72 = scmp.eq.s32.totalorder %s13, 1
    %p73 = scmp.ne.s32.totalorder %s68, %s70
    %p74 = scmp.eq.s32.totalorder %s13, 0
    %p75 = por %p73, %p74
    %p76 = scmp.ne.s32.totalorder %s68, %s70
    %p77 = scmp.eq.s32.totalorder %s18, 1
    %p78 = por %p76, %p77
    %p79 = scmp.ne.s32.totalorder %s70, %s71
    %p80 = scmp.eq.s32.totalorder %s18, 0
    %p81 = por %p79, %p80
    %p82 = scmp.ne.s32.totalorder %s70, %s71
    %p83 = scmp.eq.s32.totalorder %s19, 1
    %p84 = por %p82, %p83
    %p86 = scmp.ne.s32.totalorder %s71, %s85
    %p87 = scmp.eq.s32.totalorder %s19, 0
    %p88 = por %p86, %p87
    %s90 = sadd.s32 %s89, 1
    %p93 = scmp.eq.s32.totalorder %s13, 1
    %p94 = scmp.ne.s32.totalorder %s89, %s91
    %p95 = scmp.eq.s32.totalorder %s13, 0
    %p96 = por %p94, %p95
    %p97 = scmp.ne.s32.totalorder %s89, %s91
    %p98 = scmp.eq.s32.totalorder %s18, 1
    %p99 = por %p97, %p98
    %p100 = scmp.ne.s32.totalorder %s91, %s92
    %p101 = scmp.eq.s32.totalorder %s18, 0
    %p102 = por %p100, %p101
    %p103 = scmp.ne.s32.totalorder %s91, %s92
    %p104 = scmp.eq.s32.totalorder %s19, 1
    %p105 = por %p103, %p104
    %p107 = scmp.ne.s32.totalorder %s92, %s106
    %p108 = scmp.eq.s32.totalorder %s19, 0
    %p109 = por %p107, %p108
    %s111 = sadd.s32 %s110, 1
    %p114 = scmp.eq.s32.totalorder %s13, 1
    %p115 = scmp.ne.s32.totalorder %s110, %s112
    %p116 = scmp.eq.s32.totalorder %s13, 0
    %p117 = por %p115, %p116
    %p118 = scmp.ne.s32.totalorder %s110, %s112
    %p119 = scmp.eq.s32.totalorder %s18, 1
    %p120 = por %p118, %p119
    %p121 = scmp.ne.s32.totalorder %s112, %s113
    %p122 = scmp.eq.s32.totalorder %s18, 0
    %p123 = por %p121, %p122
    %p124 = scmp.ne.s32.totalorder %s112, %s113
    %p125 = scmp.eq.s32.totalorder %s19, 1
    %p126 = por %p124, %p125
    %p128 = scmp.ne.s32.totalorder %s113, %s127
    %p129 = scmp.eq.s32.totalorder %s19, 0
    %p130 = por %p128, %p129
    %s132 = sadd.s32 %s131, 1
    %p135 = scmp.eq.s32.totalorder %s13, 1
    %p136 = scmp.ne.s32.totalorder %s131, %s133
    %p137 = scmp.eq.s32.totalorder %s13, 0
    %p138 = por %p136, %p137
    %p139 = scmp.ne.s32.totalorder %s131, %s133
    %p140 = scmp.eq.s32.totalorder %s18, 1
    %p141 = por %p139, %p140
    %p142 = scmp.ne.s32.totalorder %s133, %s134
    %p143 = scmp.eq.s32.totalorder %s18, 0
    %p144 = por %p142, %p143
    %p145 = scmp.ne.s32.totalorder %s133, %s134
    %p146 = scmp.eq.s32.totalorder %s19, 1
    %p147 = por %p145, %p146
    %p149 = scmp.ne.s32.totalorder %s134, %s148
    %p150 = scmp.eq.s32.totalorder %s19, 0
    %p151 = por %p149, %p150
    %s153 = sadd.s32 %s152, 1
    %p156 = scmp.eq.s32.totalorder %s13, 1
    %p157 = scmp.ne.s32.totalorder %s152, %s154
    %p158 = scmp.eq.s32.totalorder %s13, 0
    %p159 = por %p157, %p158
    %p160 = scmp.ne.s32.totalorder %s152, %s154
    %p161 = scmp.eq.s32.totalorder %s18, 1
    %p162 = por %p160, %p161
    %p163 = scmp.ne.s32.totalorder %s154, %s155
    %p164 = scmp.eq.s32.totalorder %s18, 0
    %p165 = por %p163, %p164
    %p166 = scmp.ne.s32.totalorder %s154, %s155
    %p167 = scmp.eq.s32.totalorder %s19, 1
    %p168 = por %p166, %p167
    %p170 = scmp.ne.s32.totalorder %s155, %s169
    %p171 = scmp.eq.s32.totalorder %s19, 0
    %p172 = por %p170, %p171
    %s173 = ssub.s32 %s13, %s20
    %p174 = scmp.eq.s32.totalorder %s173, 0
    %s176 = sadd.s32 %s175, 1
    %s177 = scalar_select %p174, %s175, %s176
    %p180 = pneg %p174
    %p181 = scmp.eq.s32.totalorder %s13, 1
    %p182 = por %p180, %p181
    %p183 = scmp.ne.s32.totalorder %s175, %s178
    %p184 = scmp.eq.s32.totalorder %s13, 0
    %p185 = por %p183, %p184
    %p186 = scmp.ne.s32.totalorder %s175, %s178
    %p187 = scmp.eq.s32.totalorder %s18, 1
    %p188 = por %p186, %p187
    %p189 = scmp.ne.s32.totalorder %s178, %s179
    %p190 = scmp.eq.s32.totalorder %s18, 0
    %p191 = por %p189, %p190
    %p192 = scmp.ne.s32.totalorder %s178, %s179
    %p193 = scmp.eq.s32.totalorder %s19, 1
    %p194 = por %p192, %p193
    %p196 = scmp.ne.s32.totalorder %s179, %s195
    %p197 = scmp.eq.s32.totalorder %s19, 0
    %p198 = por %p196, %p197
    %p199 = scmp.le.s32.totalorder 1, %s13
    %p200 = scmp.lt.s32.totalorder %s13, 3
    %p201 = pnand %p199, %p200
    %p202 = pneg %p201
    // Predicated region
    $region9: #{forward.15} parent=5 // pred_check
      _
    $region10: #{forward.15} parent=5 // pred_check_branch
      %204 = sbr.rel (%p201) target = $region12
    $region11: #{forward.15} parent=5 // pred_region
      %s205 = ssub.s32 %s13, 1
      // Predicated region
      $region13: #{forward.15} parent=11 // pred_check
        %p206 = pneg %p60
      $region14: #{forward.15} parent=11 // pred_check_branch
        %208 = sbr.rel (%p206) target = $region16
      $region15: #{forward.15} parent=11 // pred_region
        _
      $region16: #{forward.15} parent=11 // pred_fallthru
        _
      // Predicated region
      $region17: #{forward.15} parent=11 // pred_check
        %p209 = pneg %p81
      $region18: #{forward.15} parent=11 // pred_check_branch
        %211 = sbr.rel (%p209) target = $region20
      $region19: #{forward.15} parent=11 // pred_region
        _
      $region20: #{forward.15} parent=11 // pred_fallthru
        _
      // Predicated region
      $region21: #{forward.15} parent=11 // pred_check
        %p212 = pneg %p102
      $region22: #{forward.15} parent=11 // pred_check_branch
        %214 = sbr.rel (%p212) target = $region24
      $region23: #{forward.15} parent=11 // pred_region
        _
      $region24: #{forward.15} parent=11 // pred_fallthru
        _
      // Predicated region
      $region25: #{forward.15} parent=11 // pred_check
        %p215 = pneg %p123
      $region26: #{forward.15} parent=11 // pred_check_branch
        %217 = sbr.rel (%p215) target = $region28
      $region27: #{forward.15} parent=11 // pred_region
        _
      $region28: #{forward.15} parent=11 // pred_fallthru
        _
      // Predicated region
      $region29: #{forward.15} parent=11 // pred_check
        %p218 = pneg %p144
      $region30: #{forward.15} parent=11 // pred_check_branch
        %220 = sbr.rel (%p218) target = $region32
      $region31: #{forward.15} parent=11 // pred_region
        _
      $region32: #{forward.15} parent=11 // pred_fallthru
        _
      // Predicated region
      $region33: #{forward.15} parent=11 // pred_check
        %p221 = pneg %p165
      $region34: #{forward.15} parent=11 // pred_check_branch
        %223 = sbr.rel (%p221) target = $region36
      $region35: #{forward.15} parent=11 // pred_region
        _
      $region36: #{forward.15} parent=11 // pred_fallthru
        _
    $region12: #{forward.15} parent=5 // pred_fallthru
      _
    %p224 = scmp.lt.s32.totalorder %s13, 2
    // Predicated region
    $region37: #{forward.15} parent=5 // pred_check
      %p225 = pneg %p224
    $region38: #{forward.15} parent=5 // pred_check_branch
      %227 = sbr.rel (%p225) target = $region40
    $region39: #{forward.15} parent=5 // pred_region
      // Predicated region
      $region41: #{forward.15} parent=39 // pred_check
        %p228 = pneg %p33
      $region42: #{forward.15} parent=39 // pred_check_branch
        %230 = sbr.rel (%p228) target = $region44
      $region43: #{forward.15} parent=39 // pred_region
        %p231 = scmp.lt.s32.totalorder %s13, 1
        %s232 = scalar_select %p231, %s13, 1
        %s233 = smul.addr %s232, 8
        %s234 = scalar_lea.vmem %s0, %s233
      $region44: #{forward.15} parent=39 // pred_fallthru
        _
    $region40: #{forward.15} parent=5 // pred_fallthru
      _
    %p235 = scmp.le.s32.totalorder 1, %s13
    %p236 = scmp.lt.s32.totalorder %s13, 3
    %p237 = pnand %p235, %p236
    %p238 = pneg %p237
    // Predicated region
    $region45: #{forward.15} parent=5 // pred_check
      _
    $region46: #{forward.15} parent=5 // pred_check_branch
      %240 = sbr.rel (%p237) target = $region48
    $region47: #{forward.15} parent=5 // pred_region
      %s241 = ssub.s32 %s13, 1
      %p242 = scmp.lt.s32.totalorder %s18, 1
      %s243 = scalar_select %p242, %s18, 1
      %s244 = smul.addr %s243, 8
      %s245 = scalar_lea.vmem %s0, %s244
      %p246 = pneg %p39
      %p247 = pneg %p36
      %p248 = pneg %p60
      %p249 = pneg %p57
      %p250 = pneg %p81
      %p251 = pneg %p78
      %p252 = pneg %p102
      %p253 = pneg %p99
      %p254 = pneg %p123
      %p255 = pneg %p120
      %p256 = pneg %p144
      %p257 = pneg %p141
      %p258 = pneg %p165
      %p259 = pneg %p162
      %p260 = pneg %p191
      %p261 = pneg %p188
      %p262 = scmp.lt.s32.totalorder %s18, 1
      %s263 = scalar_select %p262, %s18, 1
      %s264 = smul.addr %s263, 8
      %s265 = scalar_lea.vmem %s7, %s264
      %p266 = scmp.lt.s32.totalorder %s18, 1
      %s267 = scalar_select %p266, %s18, 1
      %s268 = smul.addr %s267, 8
      %s269 = scalar_lea.vmem %s0, %s268
      %p270 = scmp.lt.s32.totalorder %s18, 1
      %s271 = scalar_select %p270, %s18, 1
      %s272 = smul.addr %s271, 8
      %s273 = scalar_lea.vmem %s7, %s272
      %v275 = vld [vmem:[%s269] sm:$0xff]
      %v276 = vpack.c.bf16 %v275, %v275
      %v277 = vld [vmem:[%s1] sm:$0xf]
      %v278 = vld [vmem:[%s1 + $0x4] sm:$0xf]
      %v279 = vld [vmem:[%s1 + $0x8] sm:$0xf]
      %v280 = vld [vmem:[%s1 + $0xc] sm:$0xf]
      %v281 = vld [vmem:[%s2] sm:$0x1]
      %v283 = vlaneseq
      %v284 = vshrl.u32 %v283, 7
      %v285 = vsub.s32 0, %v284
      %v286 = vrot.slane %v281, %v285
      %v292 = vunpack.c.l.b16 %v277
      %v293 = vunpack.c.l.b16 %v278
      %v294 = vunpack.c.l.b16 %v279
      %v295 = vunpack.c.l.b16 %v280
      %v296 = vpack.c.b16 %v293, %v292
      %v297 = vpack.c.b16 %v295, %v294
      %vm300 = vcmask 261120
      %v302 = vsel %vm300, %v276, 0
      %304 = vmatprep.subr.bf16.mxu0 0
      %305 = vmatpush1.bf16.msra.mxu0 %v296
      %306 = vmatprep.subr.bf16.mxu0 0
      %307 = vmatpush1.bf16.msra.mxu0 %v297
      %308 = vmatprep.subr.bf16.mxu0 0
      %309 = vmatpush1.bf16.msra.mxu0 0
      %310 = vmatprep.subr.bf16.mxu0 0
      %311 = vmatpush1.bf16.msra.mxu0 0
      %312 = vmatprep.subr.bf16.mxu0 0
      %313 = vmatpush1.bf16.msra.mxu0 0
      %314 = vmatprep.subr.bf16.mxu0 0
      %315 = vmatpush1.bf16.msra.mxu0 0
      %316 = vmatprep.subr.bf16.mxu0 0
      %317 = vmatpush1.bf16.msra.mxu0 0
      %318 = vmatprep.subr.bf16.mxu0 0
      %319 = vmatpush1.bf16.msra.mxu0 0
      %320 = vmatprep.subr.bf16.mxu0 0
      %321 = vmatpush1.bf16.msra.mxu0 0
      %322 = vmatprep.subr.bf16.mxu0 0
      %323 = vmatpush1.bf16.msra.mxu0 0
      %324 = vmatprep.subr.bf16.mxu0 0
      %325 = vmatpush1.bf16.msra.mxu0 0
      %326 = vmatprep.subr.bf16.mxu0 0
      %327 = vmatpush1.bf16.msra.mxu0 0
      %328 = vmatprep.subr.bf16.mxu0 0
      %329 = vmatpush1.bf16.msra.mxu0 0
      %330 = vmatprep.subr.bf16.mxu0 0
      %331 = vmatpush1.bf16.msra.mxu0 0
      %332 = vmatprep.subr.bf16.mxu0 0
      %333 = vmatpush1.bf16.msra.mxu0 0
      %334 = vmatprep.subr.bf16.mxu0 0
      %335 = vmatpush1.bf16.msra.mxu0 0
      %336 = vmatprep.mubr.bf16.mxu0 0
      %337 = vmatmul.mubr.bf16.gmra.mrb[0].mxu0 %v302
      %v338 = vpop.f32.mrb[0].mxu0
      %v339 = vadd.f32 %v286, %v338
      %v340 = vpop.f32.mrb[0].mxu0
      %v341 = vpop.f32.mrb[0].mxu0
      %v342 = vpop.f32.mrb[0].mxu0
      %343 = vdwg.mxu0
      %v344 = vpack.c.bf16 %v339, %v339
      %346 = vrot.lane.b32.xlu0 %v344, 96
      %v347 = vpop.permute.xlu0 %346
      %vm348 = vcmask 64512
      %v350 = vsel %vm348, %v344, 0
      %v353 = vsel %vm348, %v347, 0
      %355 = vmatprep.subr.bf16.mxu0 0
      %356 = vmatpush1.bf16.xpose.msra.mxu0 %v353
      %357 = vmatprep.subr.bf16.mxu0 0
      %358 = vmatpush1.bf16.xpose.msra.mxu0 0
      %359 = vmatprep.subr.bf16.mxu0 0
      %360 = vmatpush1.bf16.xpose.msra.mxu0 0
      %361 = vmatprep.subr.bf16.mxu0 0
      %362 = vmatpush1.bf16.xpose.msra.mxu0 0
      %363 = vmatprep.subr.bf16.mxu0 0
      %364 = vmatpush1.bf16.xpose.msra.mxu0 0
      %365 = vmatprep.subr.bf16.mxu0 0
      %366 = vmatpush1.bf16.xpose.msra.mxu0 0
      %367 = vmatprep.subr.bf16.mxu0 0
      %368 = vmatpush1.bf16.xpose.msra.mxu0 0
      %369 = vmatprep.subr.bf16.mxu0 0
      %370 = vmatpush1.bf16.xpose.msra.mxu0 0
      %371 = vmatprep.subr.bf16.mxu0 0
      %372 = vmatpush1.bf16.xpose.msra.mxu0 0
      %373 = vmatprep.subr.bf16.mxu0 0
      %374 = vmatpush1.bf16.xpose.msra.mxu0 0
      %375 = vmatprep.subr.bf16.mxu0 0
      %376 = vmatpush1.bf16.xpose.msra.mxu0 0
      %377 = vmatprep.subr.bf16.mxu0 0
      %378 = vmatpush1.bf16.xpose.msra.mxu0 0
      %379 = vmatprep.subr.bf16.mxu0 0
      %380 = vmatpush1.bf16.xpose.msra.mxu0 0
      %381 = vmatprep.subr.bf16.mxu0 0
      %382 = vmatpush1.bf16.xpose.msra.mxu0 0
      %383 = vmatprep.subr.bf16.mxu0 0
      %384 = vmatpush1.bf16.xpose.msra.mxu0 0
      %385 = vmatprep.subr.bf16.mxu0 0
      %386 = vmatpush1.bf16.xpose.msra.mxu0 0
      %387 = vmatprep.mubr.bf16.mxu0 0
      %388 = vmatmul.mubr.bf16.gmra.mrb[0].mxu0 %v350
      %v389 = vpop.f32.mrb[0].mxu0
      %v390 = vadd.f32 0.0, %v389
      %v391 = vpop.f32.mrb[0].mxu0
      %v392 = vpop.f32.mrb[0].mxu0
      %v393 = vpop.f32.mrb[0].mxu0
      %394 = vdwg.mxu0
      %v395 = vmul.f32 %v390, 0.35355338
      %v396 = vsel %vm348, %v395, -inf
      %397 = vmax.xlane.f32.xlu0 %v396
      %v398 = vpop.xlane.xlu0 %397
      %v399 = vsub.f32 %v395, %v398
      %v400 = vmul.f32 %v399, 1.442695
      %v401 = vpow.pop %v400
      %v402 = vsel %vm348, %v401, 0.0
      %403 = vadd.xlane.f32.xlu0 %v402
      %v404 = vpop.xlane.xlu0 %403
      %v405 = vrcp.pop %v404
      %v406 = vmul.f32 %v401, %v405
      %v407 = vpack.c.bf16 %v406, %v406
      %408 = vrot.lane.b32.xlu0 %v344, 64
      %v409 = vpop.permute.xlu0 %408
      %v411 = vsel %vm348, %v407, 0
      %vm413 = vcmask 1043456
      %v415 = vsel %vm413, %v409, 0
      %417 = vmatprep.subr.bf16.mxu0 0
      %418 = vmatpush1.bf16.msra.mxu0 %v415
      %419 = vmatprep.subr.bf16.mxu0 0
      %420 = vmatpush1.bf16.msra.mxu0 0
      %421 = vmatprep.subr.bf16.mxu0 0
      %422 = vmatpush1.bf16.msra.mxu0 0
      %423 = vmatprep.subr.bf16.mxu0 0
      %424 = vmatpush1.bf16.msra.mxu0 0
      %425 = vmatprep.subr.bf16.mxu0 0
      %426 = vmatpush1.bf16.msra.mxu0 0
      %427 = vmatprep.subr.bf16.mxu0 0
      %428 = vmatpush1.bf16.msra.mxu0 0
      %429 = vmatprep.subr.bf16.mxu0 0
      %430 = vmatpush1.bf16.msra.mxu0 0
      %431 = vmatprep.subr.bf16.mxu0 0
      %432 = vmatpush1.bf16.msra.mxu0 0
      %433 = vmatprep.subr.bf16.mxu0 0
      %434 = vmatpush1.bf16.msra.mxu0 0
      %435 = vmatprep.subr.bf16.mxu0 0
      %436 = vmatpush1.bf16.msra.mxu0 0
      %437 = vmatprep.subr.bf16.mxu0 0
      %438 = vmatpush1.bf16.msra.mxu0 0
      %439 = vmatprep.subr.bf16.mxu0 0
      %440 = vmatpush1.bf16.msra.mxu0 0
      %441 = vmatprep.subr.bf16.mxu0 0
      %442 = vmatpush1.bf16.msra.mxu0 0
      %443 = vmatprep.subr.bf16.mxu0 0
      %444 = vmatpush1.bf16.msra.mxu0 0
      %445 = vmatprep.subr.bf16.mxu0 0
      %446 = vmatpush1.bf16.msra.mxu0 0
      %447 = vmatprep.subr.bf16.mxu0 0
      %448 = vmatpush1.bf16.msra.mxu0 0
      %449 = vmatprep.mubr.bf16.mxu0 0
      %450 = vmatmul.mubr.bf16.gmra.mrb[0].mxu0 %v411
      %v451 = vpop.f32.mrb[0].mxu0
      %v452 = vadd.f32 0.0, %v451
      %v453 = vpop.f32.mrb[0].mxu0
      %v454 = vpop.f32.mrb[0].mxu0
      %v455 = vpop.f32.mrb[0].mxu0
      %456 = vdwg.mxu0
      %457 = vrot.lane.b32.xlu0 %v344, 120
      %v458 = vpop.permute.xlu0 %457
      %459 = vrot.lane.b32.xlu0 %v344, 88
      %v460 = vpop.permute.xlu0 %459
      %v462 = vsel %vm348, %v458, 0
      %v465 = vsel %vm348, %v460, 0
      %467 = vmatprep.subr.bf16.mxu0 0
      %468 = vmatpush1.bf16.xpose.msra.mxu0 %v465
      %469 = vmatprep.subr.bf16.mxu0 0
      %470 = vmatpush1.bf16.xpose.msra.mxu0 0
      %471 = vmatprep.subr.bf16.mxu0 0
      %472 = vmatpush1.bf16.xpose.msra.mxu0 0
      %473 = vmatprep.subr.bf16.mxu0 0
      %474 = vmatpush1.bf16.xpose.msra.mxu0 0
      %475 = vmatprep.subr.bf16.mxu0 0
      %476 = vmatpush1.bf16.xpose.msra.mxu0 0
      %477 = vmatprep.subr.bf16.mxu0 0
      %478 = vmatpush1.bf16.xpose.msra.mxu0 0
      %479 = vmatprep.subr.bf16.mxu0 0
      %480 = vmatpush1.bf16.xpose.msra.mxu0 0
      %481 = vmatprep.subr.bf16.mxu0 0
      %482 = vmatpush1.bf16.xpose.msra.mxu0 0
      %483 = vmatprep.subr.bf16.mxu0 0
      %484 = vmatpush1.bf16.xpose.msra.mxu0 0
      %485 = vmatprep.subr.bf16.mxu0 0
      %486 = vmatpush1.bf16.xpose.msra.mxu0 0
      %487 = vmatprep.subr.bf16.mxu0 0
      %488 = vmatpush1.bf16.xpose.msra.mxu0 0
      %489 = vmatprep.subr.bf16.mxu0 0
      %490 = vmatpush1.bf16.xpose.msra.mxu0 0
      %491 = vmatprep.subr.bf16.mxu0 0
      %492 = vmatpush1.bf16.xpose.msra.mxu0 0
      %493 = vmatprep.subr.bf16.mxu0 0
      %494 = vmatpush1.bf16.xpose.msra.mxu0 0
      %495 = vmatprep.subr.bf16.mxu0 0
      %496 = vmatpush1.bf16.xpose.msra.mxu0 0
      %497 = vmatprep.subr.bf16.mxu0 0
      %498 = vmatpush1.bf16.xpose.msra.mxu0 0
      %499 = vmatprep.mubr.bf16.mxu0 0
      %500 = vmatmul.mubr.bf16.gmra.mrb[0].mxu0 %v462
      %v501 = vpop.f32.mrb[0].mxu0
      %v502 = vadd.f32 0.0, %v501
      %v503 = vpop.f32.mrb[0].mxu0
      %v504 = vpop.f32.mrb[0].mxu0
      %v505 = vpop.f32.mrb[0].mxu0
      %506 = vdwg.mxu0
      %v507 = vmul.f32 %v502, 0.35355338
      %v508 = vsel %vm348, %v507, -inf
      %509 = vmax.xlane.f32.xlu0 %v508
      %v510 = vpop.xlane.xlu0 %509
      %v511 = vsub.f32 %v507, %v510
      %v512 = vmul.f32 %v511, 1.442695
      %v513 = vpow.pop %v512
      %v514 = vsel %vm348, %v513, 0.0
      %515 = vadd.xlane.f32.xlu0 %v514
      %v516 = vpop.xlane.xlu0 %515
      %v517 = vrcp.pop %v516
      %v518 = vmul.f32 %v513, %v517
      %v519 = vpack.c.bf16 %v518, %v518
      %520 = vrot.lane.b32.xlu0 %v344, 56
      %v521 = vpop.permute.xlu0 %520
      %v523 = vsel %vm348, %v519, 0
      %v526 = vsel %vm413, %v521, 0
      %528 = vmatprep.subr.bf16.mxu0 0
      %529 = vmatpush1.bf16.msra.mxu0 %v526
      %530 = vmatprep.subr.bf16.mxu0 0
      %531 = vmatpush1.bf16.msra.mxu0 0
      %532 = vmatprep.subr.bf16.mxu0 0
      %533 = vmatpush1.bf16.msra.mxu0 0
      %534 = vmatprep.subr.bf16.mxu0 0
      %535 = vmatpush1.bf16.msra.mxu0 0
      %536 = vmatprep.subr.bf16.mxu0 0
      %537 = vmatpush1.bf16.msra.mxu0 0
      %538 = vmatprep.subr.bf16.mxu0 0
      %539 = vmatpush1.bf16.msra.mxu0 0
      %540 = vmatprep.subr.bf16.mxu0 0
      %541 = vmatpush1.bf16.msra.mxu0 0
      %542 = vmatprep.subr.bf16.mxu0 0
      %543 = vmatpush1.bf16.msra.mxu0 0
      %544 = vmatprep.subr.bf16.mxu0 0
      %545 = vmatpush1.bf16.msra.mxu0 0
      %546 = vmatprep.subr.bf16.mxu0 0
      %547 = vmatpush1.bf16.msra.mxu0 0
      %548 = vmatprep.subr.bf16.mxu0 0
      %549 = vmatpush1.bf16.msra.mxu0 0
      %550 = vmatprep.subr.bf16.mxu0 0
      %551 = vmatpush1.bf16.msra.mxu0 0
      %552 = vmatprep.subr.bf16.mxu0 0
      %553 = vmatpush1.bf16.msra.mxu0 0
      %554 = vmatprep.subr.bf16.mxu0 0
      %555 = vmatpush1.bf16.msra.mxu0 0
      %556 = vmatprep.subr.bf16.mxu0 0
      %557 = vmatpush1.bf16.msra.mxu0 0
      %558 = vmatprep.subr.bf16.mxu0 0
      %559 = vmatpush1.bf16.msra.mxu0 0
      %560 = vmatprep.mubr.bf16.mxu0 0
      %561 = vmatmul.mubr.bf16.gmra.mrb[0].mxu0 %v523
      %v562 = vpop.f32.mrb[0].mxu0
      %v563 = vadd.f32 0.0, %v562
      %v564 = vpop.f32.mrb[0].mxu0
      %v565 = vpop.f32.mrb[0].mxu0
      %v566 = vpop.f32.mrb[0].mxu0
      %567 = vdwg.mxu0
      %568 = vrot.lane.b32.xlu0 %v344, 112
      %v569 = vpop.permute.xlu0 %568
      %570 = vrot.lane.b32.xlu0 %v344, 80
      %v571 = vpop.permute.xlu0 %570
      %v573 = vsel %vm348, %v569, 0
      %v576 = vsel %vm348, %v571, 0
      %578 = vmatprep.subr.bf16.mxu0 0
      %579 = vmatpush1.bf16.xpose.msra.mxu0 %v576
      %580 = vmatprep.subr.bf16.mxu0 0
      %581 = vmatpush1.bf16.xpose.msra.mxu0 0
      %582 = vmatprep.subr.bf16.mxu0 0
      %583 = vmatpush1.bf16.xpose.msra.mxu0 0
      %584 = vmatprep.subr.bf16.mxu0 0
      %585 = vmatpush1.bf16.xpose.msra.mxu0 0
      %586 = vmatprep.subr.bf16.mxu0 0
      %587 = vmatpush1.bf16.xpose.msra.mxu0 0
      %588 = vmatprep.subr.bf16.mxu0 0
      %589 = vmatpush1.bf16.xpose.msra.mxu0 0
      %590 = vmatprep.subr.bf16.mxu0 0
      %591 = vmatpush1.bf16.xpose.msra.mxu0 0
      %592 = vmatprep.subr.bf16.mxu0 0
      %593 = vmatpush1.bf16.xpose.msra.mxu0 0
      %594 = vmatprep.subr.bf16.mxu0 0
      %595 = vmatpush1.bf16.xpose.msra.mxu0 0
      %596 = vmatprep.subr.bf16.mxu0 0
      %597 = vmatpush1.bf16.xpose.msra.mxu0 0
      %598 = vmatprep.subr.bf16.mxu0 0
      %599 = vmatpush1.bf16.xpose.msra.mxu0 0
      %600 = vmatprep.subr.bf16.mxu0 0
      %601 = vmatpush1.bf16.xpose.msra.mxu0 0
      %602 = vmatprep.subr.bf16.mxu0 0
      %603 = vmatpush1.bf16.xpose.msra.mxu0 0
      %604 = vmatprep.subr.bf16.mxu0 0
      %605 = vmatpush1.bf16.xpose.msra.mxu0 0
      %606 = vmatprep.subr.bf16.mxu0 0
      %607 = vmatpush1.bf16.xpose.msra.mxu0 0
      %608 = vmatprep.subr.bf16.mxu0 0
      %609 = vmatpush1.bf16.xpose.msra.mxu0 0
      %610 = vmatprep.mubr.bf16.mxu0 0
      %611 = vmatmul.mubr.bf16.gmra.mrb[0].mxu0 %v573
      %v612 = vpop.f32.mrb[0].mxu0
      %v613 = vadd.f32 0.0, %v612
      %v614 = vpop.f32.mrb[0].mxu0
      %v615 = vpop.f32.mrb[0].mxu0
      %v616 = vpop.f32.mrb[0].mxu0
      %617 = vdwg.mxu0
      %v618 = vmul.f32 %v613, 0.35355338
      %v619 = vsel %vm348, %v618, -inf
      %620 = vmax.xlane.f32.xlu0 %v619
      %v621 = vpop.xlane.xlu0 %620
      %v622 = vsub.f32 %v618, %v621
      %v623 = vmul.f32 %v622, 1.442695
      %v624 = vpow.pop %v623
      %v625 = vsel %vm348, %v624, 0.0
      %626 = vadd.xlane.f32.xlu0 %v625
      %v627 = vpop.xlane.xlu0 %626
      %v628 = vrcp.pop %v627
      %v629 = vmul.f32 %v624, %v628
      %v630 = vpack.c.bf16 %v629, %v629
      %631 = vrot.lane.b32.xlu0 %v344, 48
      %v632 = vpop.permute.xlu0 %631
      %v634 = vsel %vm348, %v630, 0
      %v637 = vsel %vm413, %v632, 0
      %639 = vmatprep.subr.bf16.mxu0 0
      %640 = vmatpush1.bf16.msra.mxu0 %v637
      %641 = vmatprep.subr.bf16.mxu0 0
      %642 = vmatpush1.bf16.msra.mxu0 0
      %643 = vmatprep.subr.bf16.mxu0 0
      %644 = vmatpush1.bf16.msra.mxu0 0
      %645 = vmatprep.subr.bf16.mxu0 0
      %646 = vmatpush1.bf16.msra.mxu0 0
      %647 = vmatprep.subr.bf16.mxu0 0
      %648 = vmatpush1.bf16.msra.mxu0 0
      %649 = vmatprep.subr.bf16.mxu0 0
      %650 = vmatpush1.bf16.msra.mxu0 0
      %651 = vmatprep.subr.bf16.mxu0 0
      %652 = vmatpush1.bf16.msra.mxu0 0
      %653 = vmatprep.subr.bf16.mxu0 0
      %654 = vmatpush1.bf16.msra.mxu0 0
      %655 = vmatprep.subr.bf16.mxu0 0
      %656 = vmatpush1.bf16.msra.mxu0 0
      %657 = vmatprep.subr.bf16.mxu0 0
      %658 = vmatpush1.bf16.msra.mxu0 0
      %659 = vmatprep.subr.bf16.mxu0 0
      %660 = vmatpush1.bf16.msra.mxu0 0
      %661 = vmatprep.subr.bf16.mxu0 0
      %662 = vmatpush1.bf16.msra.mxu0 0
      %663 = vmatprep.subr.bf16.mxu0 0
      %664 = vmatpush1.bf16.msra.mxu0 0
      %665 = vmatprep.subr.bf16.mxu0 0
      %666 = vmatpush1.bf16.msra.mxu0 0
      %667 = vmatprep.subr.bf16.mxu0 0
      %668 = vmatpush1.bf16.msra.mxu0 0
      %669 = vmatprep.subr.bf16.mxu0 0
      %670 = vmatpush1.bf16.msra.mxu0 0
      %671 = vmatprep.mubr.bf16.mxu0 0
      %672 = vmatmul.mubr.bf16.gmra.mrb[0].mxu0 %v634
      %v673 = vpop.f32.mrb[0].mxu0
      %v674 = vadd.f32 0.0, %v673
      %v675 = vpop.f32.mrb[0].mxu0
      %v676 = vpop.f32.mrb[0].mxu0
      %v677 = vpop.f32.mrb[0].mxu0
      %678 = vdwg.mxu0
      %679 = vrot.lane.b32.xlu0 %v344, 104
      %v680 = vpop.permute.xlu0 %679
      %681 = vrot.lane.b32.xlu0 %v344, 72
      %v682 = vpop.permute.xlu0 %681
      %v684 = vsel %vm348, %v680, 0
      %v687 = vsel %vm348, %v682, 0
      %689 = vmatprep.subr.bf16.mxu0 0
      %690 = vmatpush1.bf16.xpose.msra.mxu0 %v687
      %691 = vmatprep.subr.bf16.mxu0 0
      %692 = vmatpush1.bf16.xpose.msra.mxu0 0
      %693 = vmatprep.subr.bf16.mxu0 0
      %694 = vmatpush1.bf16.xpose.msra.mxu0 0
      %695 = vmatprep.subr.bf16.mxu0 0
      %696 = vmatpush1.bf16.xpose.msra.mxu0 0
      %697 = vmatprep.subr.bf16.mxu0 0
      %698 = vmatpush1.bf16.xpose.msra.mxu0 0
      %699 = vmatprep.subr.bf16.mxu0 0
      %700 = vmatpush1.bf16.xpose.msra.mxu0 0
      %701 = vmatprep.subr.bf16.mxu0 0
      %702 = vmatpush1.bf16.xpose.msra.mxu0 0
      %703 = vmatprep.subr.bf16.mxu0 0
      %704 = vmatpush1.bf16.xpose.msra.mxu0 0
      %705 = vmatprep.subr.bf16.mxu0 0
      %706 = vmatpush1.bf16.xpose.msra.mxu0 0
      %707 = vmatprep.subr.bf16.mxu0 0
      %708 = vmatpush1.bf16.xpose.msra.mxu0 0
      %709 = vmatprep.subr.bf16.mxu0 0
      %710 = vmatpush1.bf16.xpose.msra.mxu0 0
      %711 = vmatprep.subr.bf16.mxu0 0
      %712 = vmatpush1.bf16.xpose.msra.mxu0 0
      %713 = vmatprep.subr.bf16.mxu0 0
      %714 = vmatpush1.bf16.xpose.msra.mxu0 0
      %715 = vmatprep.subr.bf16.mxu0 0
      %716 = vmatpush1.bf16.xpose.msra.mxu0 0
      %717 = vmatprep.subr.bf16.mxu0 0
      %718 = vmatpush1.bf16.xpose.msra.mxu0 0
      %719 = vmatprep.subr.bf16.mxu0 0
      %720 = vmatpush1.bf16.xpose.msra.mxu0 0
      %721 = vmatprep.mubr.bf16.mxu0 0
      %722 = vmatmul.mubr.bf16.gmra.mrb[0].mxu0 %v684
      %v723 = vpop.f32.mrb[0].mxu0
      %v724 = vadd.f32 0.0, %v723
      %v725 = vpop.f32.mrb[0].mxu0
      %v726 = vpop.f32.mrb[0].mxu0
      %v727 = vpop.f32.mrb[0].mxu0
      %728 = vdwg.mxu0
      %v729 = vmul.f32 %v724, 0.35355338
      %v730 = vsel %vm348, %v729, -inf
      %731 = vmax.xlane.f32.xlu0 %v730
      %v732 = vpop.xlane.xlu0 %731
      %v733 = vsub.f32 %v729, %v732
      %v734 = vmul.f32 %v733, 1.442695
      %v735 = vpow.pop %v734
      %v736 = vsel %vm348, %v735, 0.0
      %737 = vadd.xlane.f32.xlu0 %v736
      %v738 = vpop.xlane.xlu0 %737
      %v739 = vrcp.pop %v738
      %v740 = vmul.f32 %v735, %v739
      %v741 = vpack.c.bf16 %v740, %v740
      %742 = vrot.lane.b32.xlu0 %v344, 40
      %v743 = vpop.permute.xlu0 %742
      %v745 = vsel %vm348, %v741, 0
      %v748 = vsel %vm413, %v743, 0
      %750 = vmatprep.subr.bf16.mxu0 0
      %751 = vmatpush1.bf16.msra.mxu0 %v748
      %752 = vmatprep.subr.bf16.mxu0 0
      %753 = vmatpush1.bf16.msra.mxu0 0
      %754 = vmatprep.subr.bf16.mxu0 0
      %755 = vmatpush1.bf16.msra.mxu0 0
      %756 = vmatprep.subr.bf16.mxu0 0
      %757 = vmatpush1.bf16.msra.mxu0 0
      %758 = vmatprep.subr.bf16.mxu0 0
      %759 = vmatpush1.bf16.msra.mxu0 0
      %760 = vmatprep.subr.bf16.mxu0 0
      %761 = vmatpush1.bf16.msra.mxu0 0
      %762 = vmatprep.subr.bf16.mxu0 0
      %763 = vmatpush1.bf16.msra.mxu0 0
      %764 = vmatprep.subr.bf16.mxu0 0
      %765 = vmatpush1.bf16.msra.mxu0 0
      %766 = vmatprep.subr.bf16.mxu0 0
      %767 = vmatpush1.bf16.msra.mxu0 0
      %768 = vmatprep.subr.bf16.mxu0 0
      %769 = vmatpush1.bf16.msra.mxu0 0
      %770 = vmatprep.subr.bf16.mxu0 0
      %771 = vmatpush1.bf16.msra.mxu0 0
      %772 = vmatprep.subr.bf16.mxu0 0
      %773 = vmatpush1.bf16.msra.mxu0 0
      %774 = vmatprep.subr.bf16.mxu0 0
      %775 = vmatpush1.bf16.msra.mxu0 0
      %776 = vmatprep.subr.bf16.mxu0 0
      %777 = vmatpush1.bf16.msra.mxu0 0
      %778 = vmatprep.subr.bf16.mxu0 0
      %779 = vmatpush1.bf16.msra.mxu0 0
      %780 = vmatprep.subr.bf16.mxu0 0
      %781 = vmatpush1.bf16.msra.mxu0 0
      %782 = vmatprep.mubr.bf16.mxu0 0
      %783 = vmatmul.mubr.bf16.gmra.mrb[0].mxu0 %v745
      %v784 = vpop.f32.mrb[0].mxu0
      %v785 = vadd.f32 0.0, %v784
      %v786 = vpop.f32.mrb[0].mxu0
      %v787 = vpop.f32.mrb[0].mxu0
      %v788 = vpop.f32.mrb[0].mxu0
      %789 = vdwg.mxu0
      %791 = vrot.lane.b32.xlu0 %v563, 8
      %v792 = vpop.permute.xlu0 %791
      %795 = vrot.lane.b32.xlu0 %v674, 16
      %v796 = vpop.permute.xlu0 %795
      %799 = vrot.lane.b32.xlu0 %v785, 24
      %v800 = vpop.permute.xlu0 %799
      %v802 = vsel %vm348, %v452, %v792
      %vm803 = vcmask 130048
      %v804 = vsel %vm803, %v802, %v796
      %vm805 = vcmask 195584
      %v806 = vsel %vm805, %v804, %v800
      %v807 = vpack.c.bf16 %v806, %v806
      %v808 = vld [vmem:[%s3] sm:$0xf]
      %v809 = vld [vmem:[%s3 + $0x4] sm:$0xf]
      %v810 = vld [vmem:[%s3 + $0x8] sm:$0xf]
      %v811 = vld [vmem:[%s3 + $0xc] sm:$0xf]
      %v816 = vunpack.c.l.b16 %v808
      %v817 = vunpack.c.l.b16 %v809
      %v818 = vunpack.c.l.b16 %v810
      %v819 = vunpack.c.l.b16 %v811
      %v820 = vpack.c.b16 %v817, %v816
      %v821 = vpack.c.b16 %v819, %v818
      %v825 = vsel %vm300, %v807, 0
      %827 = vmatprep.subr.bf16.mxu0 0
      %828 = vmatpush1.bf16.msra.mxu0 %v820
      %829 = vmatprep.subr.bf16.mxu0 0
      %830 = vmatpush1.bf16.msra.mxu0 %v821
      %831 = vmatprep.subr.bf16.mxu0 0
      %832 = vmatpush1.bf16.msra.mxu0 0
      %833 = vmatprep.subr.bf16.mxu0 0
      %834 = vmatpush1.bf16.msra.mxu0 0
      %835 = vmatprep.subr.bf16.mxu0 0
      %836 = vmatpush1.bf16.msra.mxu0 0
      %837 = vmatprep.subr.bf16.mxu0 0
      %838 = vmatpush1.bf16.msra.mxu0 0
      %839 = vmatprep.subr.bf16.mxu0 0
      %840 = vmatpush1.bf16.msra.mxu0 0
      %841 = vmatprep.subr.bf16.mxu0 0
      %842 = vmatpush1.bf16.msra.mxu0 0
      %843 = vmatprep.subr.bf16.mxu0 0
      %844 = vmatpush1.bf16.msra.mxu0 0
      %845 = vmatprep.subr.bf16.mxu0 0
      %846 = vmatpush1.bf16.msra.mxu0 0
      %847 = vmatprep.subr.bf16.mxu0 0
      %848 = vmatpush1.bf16.msra.mxu0 0
      %849 = vmatprep.subr.bf16.mxu0 0
      %850 = vmatpush1.bf16.msra.mxu0 0
      %851 = vmatprep.subr.bf16.mxu0 0
      %852 = vmatpush1.bf16.msra.mxu0 0
      %853 = vmatprep.subr.bf16.mxu0 0
      %854 = vmatpush1.bf16.msra.mxu0 0
      %855 = vmatprep.subr.bf16.mxu0 0
      %856 = vmatpush1.bf16.msra.mxu0 0
      %857 = vmatprep.subr.bf16.mxu0 0
      %858 = vmatpush1.bf16.msra.mxu0 0
      %859 = vmatprep.mubr.bf16.mxu0 0
      %860 = vmatmul.mubr.bf16.gmra.mrb[0].mxu0 %v825
      %v861 = vpop.f32.mrb[0].mxu0
      %v862 = vadd.f32 0.0, %v861
      %v863 = vpop.f32.mrb[0].mxu0
      %v864 = vpop.f32.mrb[0].mxu0
      %v865 = vpop.f32.mrb[0].mxu0
      %866 = vdwg.mxu0
      %v867 = vadd.f32 %v275, %v862
      %v868 = vld [vmem:[%s4] sm:$0x1]
      %v870 = vlaneseq
      %v871 = vshrl.u32 %v870, 7
      %v872 = vsub.s32 0, %v871
      %v873 = vrot.slane %v868, %v872
      %v875 = vadd.f32 %v867, %v873
      %v876 = vsel %vm300, %v875, 0.0
      %877 = vadd.xlane.f32.xlu0 %v876
      %v878 = vpop.xlane.xlu0 %877
      %v879 = vrcp.pop 32.0
      %v880 = vmul.f32 %v878, %v879
      %v881 = vsub.f32 %v875, %v880
      %v882 = vmul.f32 %v881, %v881
      %v883 = vsel %vm300, %v882, 0.0
      %884 = vadd.xlane.f32.xlu0 %v883
      %v885 = vpop.xlane.xlu0 %884
      %v886 = vmul.f32 %v885, %v879
      %v887 = vadd.f32 %v886, 1e-05
      %v888 = vrsqrt.pop %v887
      %v889 = vmul.f32 %v881, %v888
      %v890 = vld [vmem:[%s5] sm:$0x1]
      %v892 = vlaneseq
      %v893 = vshrl.u32 %v892, 7
      %v894 = vsub.s32 0, %v893
      %v895 = vrot.slane %v890, %v894
      %v897 = vmul.f32 %v889, %v895
      %v898 = vld [vmem:[%s6] sm:$0x1]
      %v900 = vlaneseq
      %v901 = vshrl.u32 %v900, 7
      %v902 = vsub.s32 0, %v901
      %v903 = vrot.slane %v898, %v902
      %v905 = vadd.f32 %v897, %v903
      %906 = vst.msk [vmem:[%s273] sm:$0xff] %vm300, %v905
      %p907 = scmp.lt.s32.totalorder %s18, 1
      %s908 = scalar_select %p907, %s18, 1
      %s909 = smul.addr %s908, 8
      %s910 = scalar_lea.vmem %s7, %s909
      // Predicated region
      $region49: #{forward.15} parent=47 // pred_check
        %p911 = pneg %p188
      $region50: #{forward.15} parent=47 // pred_check_branch
        %913 = sbr.rel (%p911) target = $region52
      $region51: #{forward.15} parent=47 // pred_region
        _
      $region52: #{forward.15} parent=47 // pred_fallthru
        _
    $region48: #{forward.15} parent=5 // pred_fallthru
      _
    %p914 = scmp.le.s32.totalorder 2, %s13
    // Predicated region
    $region53: #{forward.15} parent=5 // pred_check
      %p915 = pneg %p914
    $region54: #{forward.15} parent=5 // pred_check_branch
      %917 = sbr.rel (%p915) target = $region56
    $region55: #{forward.15} parent=5 // pred_region
      %s918 = ssub.s32 %s13, 2
      // Predicated region
      $region57: #{forward.15} parent=55 // pred_check
        %p919 = pneg %p194
      $region58: #{forward.15} parent=55 // pred_check_branch
        %921 = sbr.rel (%p919) target = $region60
      $region59: #{forward.15} parent=55 // pred_region
        %p922 = scmp.lt.s32.totalorder %s19, 1
        %s923 = scalar_select %p922, %s19, 1
        %s924 = smul.addr %s923, 8
        %s925 = scalar_lea.vmem %s7, %s924
      $region60: #{forward.15} parent=55 // pred_fallthru
        _
    $region56: #{forward.15} parent=5 // pred_fallthru
      _
  $region6: #{forward.15} parent=0 // loop_footer
    %s17 = sadd.s32 1, %s13
  $region7: #{forward.15} parent=0 // loop_footer_branch
    %12 = sbr.rel target = $region3
  $region8: #{forward.15} parent=0 // loop_exit
    _

// kernel: forward.11
$region0: #{forward.11}
  #allocation0 [shape = 'u32[]', space=smem, size = 0x4, offset = 0x4, fixed_abs, tag = 'smem constant byte address 0x4 - core index']
  #allocation1 [shape = 'u32[144,128]{1,0:T(1,128)}', space=vmem, size = 0x12000, scoped, tag = 'internal scratch']
  #allocation2 [shape = 'f32[2,32]{1,0:T(2,128)}', space=vmem, size = 0x400, scoped, tag = 'scratch operand']
  #allocation3 [shape = 'f32[2,32]{1,0:T(2,128)}', space=vmem, size = 0x400, scoped, tag = 'scratch operand']
  %s0 = inlined_call_operand.vmem [shape: f32[8,2,128], index: 0, kind: input, shape index: {}]
  %s1 = inlined_call_operand.vmem [shape: bf16[32,128], index: 1, kind: input, shape index: {}]
  %s2 = inlined_call_operand.vmem [shape: f32[8,2,32], index: 2, kind: output, shape index: {}]
  %s3 = sld [smem:[#allocation0]]
  $region18: #{forward.11} parent=0
    _
  %s5 = ssub.s32 1, %s3
  %s6 = scalar_select 0, %s5, %s3
  // Predicated region
  $region2: #{forward.11} parent=0 // pred_check
    _
  $region3: #{forward.11} parent=0 // pred_check_branch
    %8 = sbr.rel (0) target = $region5
  $region4: #{forward.11} parent=0 // pred_region
    _
  $region5: #{forward.11} parent=0 // pred_fallthru
    _
  // Predicated region
  $region6: #{forward.11} parent=0 // pred_check
    _
  $region7: #{forward.11} parent=0 // pred_check_branch
    %10 = sbr.rel (0) target = $region9
  $region8: #{forward.11} parent=0 // pred_region
    _
  $region9: #{forward.11} parent=0 // pred_fallthru
    _
  %vm12 = vcmask 254976
  %13 = vst.msk [vmem:[#allocation2] sm:$0x3] %vm12, 0.0
  %14 = vst.msk [vmem:[#allocation3] sm:$0x3] %vm12, 0.0
  %v15 = vld [vmem:[%s1] sm:$0xf]
  %v16 = vld [vmem:[%s1 + $0x4] sm:$0xf]
  %v17 = vld [vmem:[%s1 + $0x8] sm:$0xf]
  %v18 = vld [vmem:[%s1 + $0xc] sm:$0xf]
  %v19 = vld [vmem:[#allocation2] sm:$0x3]
  %v20 = vld [vmem:[%s0] sm:$0x3]
  %v21 = vpack.c.bf16 %v19, %v19
  %v26 = vunpack.c.l.b16 %v15
  %v27 = vunpack.c.l.b16 %v16
  %v28 = vunpack.c.l.b16 %v17
  %v29 = vunpack.c.l.b16 %v18
  %v30 = vpack.c.b16 %v27, %v26
  %v31 = vpack.c.b16 %v29, %v28
  %vm34 = vcmask 261120
  %v36 = vsel %vm34, %v21, 0
  %38 = vmatprep.subr.bf16.mxu0 0
  %39 = vmatpush1.bf16.msra.mxu0 %v30
  %40 = vmatprep.subr.bf16.mxu0 0
  %41 = vmatpush1.bf16.msra.mxu0 %v31
  %42 = vmatprep.subr.bf16.mxu0 0
  %43 = vmatpush1.bf16.msra.mxu0 0
  %44 = vmatprep.subr.bf16.mxu0 0
  %45 = vmatpush1.bf16.msra.mxu0 0
  %46 = vmatprep.subr.bf16.mxu0 0
  %47 = vmatpush1.bf16.msra.mxu0 0
  %48 = vmatprep.subr.bf16.mxu0 0
  %49 = vmatpush1.bf16.msra.mxu0 0
  %50 = vmatprep.subr.bf16.mxu0 0
  %51 = vmatpush1.bf16.msra.mxu0 0
  %52 = vmatprep.subr.bf16.mxu0 0
  %53 = vmatpush1.bf16.msra.mxu0 0
  %54 = vmatprep.subr.bf16.mxu0 0
  %55 = vmatpush1.bf16.msra.mxu0 0
  %56 = vmatprep.subr.bf16.mxu0 0
  %57 = vmatpush1.bf16.msra.mxu0 0
  %58 = vmatprep.subr.bf16.mxu0 0
  %59 = vmatpush1.bf16.msra.mxu0 0
  %60 = vmatprep.subr.bf16.mxu0 0
  %61 = vmatpush1.bf16.msra.mxu0 0
  %62 = vmatprep.subr.bf16.mxu0 0
  %63 = vmatpush1.bf16.msra.mxu0 0
  %64 = vmatprep.subr.bf16.mxu0 0
  %65 = vmatpush1.bf16.msra.mxu0 0
  %66 = vmatprep.subr.bf16.mxu0 0
  %67 = vmatpush1.bf16.msra.mxu0 0
  %68 = vmatprep.subr.bf16.mxu0 0
  %69 = vmatpush1.bf16.msra.mxu0 0
  %70 = vmatprep.mubr.bf16.mxu0 0
  %71 = vmatmul.mubr.bf16.gmra.mrb[0].mxu0 %v36
  %v72 = vpop.f32.mrb[0].mxu0
  %v73 = vadd.f32 0.0, %v72
  %v74 = vpop.f32.mrb[0].mxu0
  %v75 = vpop.f32.mrb[0].mxu0
  %v76 = vpop.f32.mrb[0].mxu0
  %77 = vdwg.mxu0
  %v78 = vadd.f32 %v20, %v73
  %v79 = vxor.u32 %v78, 2147483648
  %v80 = vmul.f32 %v79, 1.442695
  %v81 = vpow.pop %v80
  %v82 = vadd.f32 %v81, 1.0
  %v83 = vrcp.pop %v82
  %v84 = vmul.f32 1.0, %v83
  %v85 = vtanh.pop %v78
  %v86 = vld [vmem:[#allocation3] sm:$0x3]
  %88 = vrot.lane.b32.xlu0 %v86, 32
  %v89 = vpop.permute.xlu0 %88
  %v91 = vmul.f32 %v84, %v89
  %93 = vrot.lane.b32.xlu0 %v85, 64
  %v94 = vpop.permute.xlu0 %93
  %v96 = vmul.f32 %v84, %v94
  %98 = vrot.lane.b32.xlu0 %v96, 32
  %v99 = vpop.permute.xlu0 %98
  %v101 = vadd.f32 %v91, %v99
  %v102 = vtanh.pop %v101
  %104 = vrot.lane.b32.xlu0 %v102, 64
  %v105 = vpop.permute.xlu0 %104
  %v107 = vmul.f32 %v84, %v105
  %109 = vrot.lane.b32.xlu0 %v101, 96
  %v110 = vpop.permute.xlu0 %109
  %112 = vst.msk [vmem:[#allocation3] sm:$0x3] %vm12, %v110
  %114 = vrot.lane.b32.xlu0 %v107, 32
  %v115 = vpop.permute.xlu0 %114
  %117 = vst.msk [vmem:[#allocation2] sm:$0x3] %vm12, %v115
  %118 = vst.msk [vmem:[%s2] sm:$0x3] %vm12, %v115
  %v119 = vld [vmem:[#allocation2] sm:$0x3]
  %s120 = scalar_lea.vmem %s0, 2
  %v121 = vld [vmem:[%s120] sm:$0x3]
  %v122 = vpack.c.bf16 %v119, %v119
  %v124 = vsel %vm34, %v122, 0
  %126 = vmatprep.subr.bf16.mxu0 0
  %127 = vmatpush1.bf16.msra.mxu0 %v30
  %128 = vmatprep.subr.bf16.mxu0 0
  %129 = vmatpush1.bf16.msra.mxu0 %v31
  %130 = vmatprep.subr.bf16.mxu0 0
  %131 = vmatpush1.bf16.msra.mxu0 0
  %132 = vmatprep.subr.bf16.mxu0 0
  %133 = vmatpush1.bf16.msra.mxu0 0
  %134 = vmatprep.subr.bf16.mxu0 0
  %135 = vmatpush1.bf16.msra.mxu0 0
  %136 = vmatprep.subr.bf16.mxu0 0
  %137 = vmatpush1.bf16.msra.mxu0 0
  %138 = vmatprep.subr.bf16.mxu0 0
  %139 = vmatpush1.bf16.msra.mxu0 0
  %140 = vmatprep.subr.bf16.mxu0 0
  %141 = vmatpush1.bf16.msra.mxu0 0
  %142 = vmatprep.subr.bf16.mxu0 0
  %143 = vmatpush1.bf16.msra.mxu0 0
  %144 = vmatprep.subr.bf16.mxu0 0
  %145 = vmatpush1.bf16.msra.mxu0 0
  %146 = vmatprep.subr.bf16.mxu0 0
  %147 = vmatpush1.bf16.msra.mxu0 0
  %148 = vmatprep.subr.bf16.mxu0 0
  %149 = vmatpush1.bf16.msra.mxu0 0
  %150 = vmatprep.subr.bf16.mxu0 0
  %151 = vmatpush1.bf16.msra.mxu0 0
  %152 = vmatprep.subr.bf16.mxu0 0
  %153 = vmatpush1.bf16.msra.mxu0 0
  %154 = vmatprep.subr.bf16.mxu0 0
  %155 = vmatpush1.bf16.msra.mxu0 0
  %156 = vmatprep.subr.bf16.mxu0 0
  %157 = vmatpush1.bf16.msra.mxu0 0
  %158 = vmatprep.mubr.bf16.mxu0 0
  %159 = vmatmul.mubr.bf16.gmra.mrb[0].mxu0 %v124
  %v160 = vpop.f32.mrb[0].mxu0
  %v161 = vadd.f32 0.0, %v160
  %v162 = vpop.f32.mrb[0].mxu0
  %v163 = vpop.f32.mrb[0].mxu0
  %v164 = vpop.f32.mrb[0].mxu0
  %165 = vdwg.mxu0
  %v166 = vadd.f32 %v121, %v161
  %v167 = vxor.u32 %v166, 2147483648
  %v168 = vmul.f32 %v167, 1.442695
  %v169 = vpow.pop %v168
  %v170 = vadd.f32 %v169, 1.0
  %v171 = vrcp.pop %v170
  %v172 = vmul.f32 1.0, %v171
  %v173 = vtanh.pop %v166
  %v174 = vld [vmem:[#allocation3] sm:$0x3]
  %176 = vrot.lane.b32.xlu0 %v174, 32
  %v177 = vpop.permute.xlu0 %176
  %v179 = vmul.f32 %v172, %v177
  %181 = vrot.lane.b32.xlu0 %v173, 64
  %v182 = vpop.permute.xlu0 %181
  %v184 = vmul.f32 %v172, %v182
  %186 = vrot.lane.b32.xlu0 %v184, 32
  %v187 = vpop.permute.xlu0 %186
  %v189 = vadd.f32 %v179, %v187
  %v190 = vtanh.pop %v189
  %192 = vrot.lane.b32.xlu0 %v190, 64
  %v193 = vpop.permute.xlu0 %192
  %v195 = vmul.f32 %v172, %v193
  %197 = vrot.lane.b32.xlu0 %v189, 96
  %v198 = vpop.permute.xlu0 %197
  %200 = vst.msk [vmem:[#allocation3] sm:$0x3] %vm12, %v198
  %202 = vrot.lane.b32.xlu0 %v195, 32
  %v203 = vpop.permute.xlu0 %202
  %205 = vst.msk [vmem:[#allocation2] sm:$0x3] %vm12, %v203
  %s206 = scalar_lea.vmem %s2, 2
  %207 = vst.msk [vmem:[%s206] sm:$0x3] %vm12, %v203
  %v208 = vld [vmem:[#allocation2] sm:$0x3]
  %s209 = scalar_lea.vmem %s0, 4
  %v210 = vld [vmem:[%s209] sm:$0x3]
  %v211 = vpack.c.bf16 %v208, %v208
  %v213 = vsel %vm34, %v211, 0
  %215 = vmatprep.subr.bf16.mxu0 0
  %216 = vmatpush1.bf16.msra.mxu0 %v30
  %217 = vmatprep.subr.bf16.mxu0 0
  %218 = vmatpush1.bf16.msra.mxu0 %v31
  %219 = vmatprep.subr.bf16.mxu0 0
  %220 = vmatpush1.bf16.msra.mxu0 0
  %221 = vmatprep.subr.bf16.mxu0 0
  %222 = vmatpush1.bf16.msra.mxu0 0
  %223 = vmatprep.subr.bf16.mxu0 0
  %224 = vmatpush1.bf16.msra.mxu0 0
  %225 = vmatprep.subr.bf16.mxu0 0
  %226 = vmatpush1.bf16.msra.mxu0 0
  %227 = vmatprep.subr.bf16.mxu0 0
  %228 = vmatpush1.bf16.msra.mxu0 0
  %229 = vmatprep.subr.bf16.mxu0 0
  %230 = vmatpush1.bf16.msra.mxu0 0
  %231 = vmatprep.subr.bf16.mxu0 0
  %232 = vmatpush1.bf16.msra.mxu0 0
  %233 = vmatprep.subr.bf16.mxu0 0
  %234 = vmatpush1.bf16.msra.mxu0 0
  %235 = vmatprep.subr.bf16.mxu0 0
  %236 = vmatpush1.bf16.msra.mxu0 0
  %237 = vmatprep.subr.bf16.mxu0 0
  %238 = vmatpush1.bf16.msra.mxu0 0
  %239 = vmatprep.subr.bf16.mxu0 0
  %240 = vmatpush1.bf16.msra.mxu0 0
  %241 = vmatprep.subr.bf16.mxu0 0
  %242 = vmatpush1.bf16.msra.mxu0 0
  %243 = vmatprep.subr.bf16.mxu0 0
  %244 = vmatpush1.bf16.msra.mxu0 0
  %245 = vmatprep.subr.bf16.mxu0 0
  %246 = vmatpush1.bf16.msra.mxu0 0
  %247 = vmatprep.mubr.bf16.mxu0 0
  %248 = vmatmul.mubr.bf16.gmra.mrb[0].mxu0 %v213
  %v249 = vpop.f32.mrb[0].mxu0
  %v250 = vadd.f32 0.0, %v249
  %v251 = vpop.f32.mrb[0].mxu0
  %v252 = vpop.f32.mrb[0].mxu0
  %v253 = vpop.f32.mrb[0].mxu0
  %254 = vdwg.mxu0
  %v255 = vadd.f32 %v210, %v250
  %v256 = vxor.u32 %v255, 2147483648
  %v257 = vmul.f32 %v256, 1.442695
  %v258 = vpow.pop %v257
  %v259 = vadd.f32 %v258, 1.0
  %v260 = vrcp.pop %v259
  %v261 = vmul.f32 1.0, %v260
  %v262 = vtanh.pop %v255
  %v263 = vld [vmem:[#allocation3] sm:$0x3]
  %265 = vrot.lane.b32.xlu0 %v263, 32
  %v266 = vpop.permute.xlu0 %265
  %v268 = vmul.f32 %v261, %v266
  %270 = vrot.lane.b32.xlu0 %v262, 64
  %v271 = vpop.permute.xlu0 %270
  %v273 = vmul.f32 %v261, %v271
  %275 = vrot.lane.b32.xlu0 %v273, 32
  %v276 = vpop.permute.xlu0 %275
  %v278 = vadd.f32 %v268, %v276
  %v279 = vtanh.pop %v278
  %281 = vrot.lane.b32.xlu0 %v279, 64
  %v282 = vpop.permute.xlu0 %281
  %v284 = vmul.f32 %v261, %v282
  %286 = vrot.lane.b32.xlu0 %v278, 96
  %v287 = vpop.permute.xlu0 %286
  %289 = vst.msk [vmem:[#allocation3] sm:$0x3] %vm12, %v287
  %291 = vrot.lane.b32.xlu0 %v284, 32
  %v292 = vpop.permute.xlu0 %291
  %294 = vst.msk [vmem:[#allocation2] sm:$0x3] %vm12, %v292
  %s295 = scalar_lea.vmem %s2, 4
  %296 = vst.msk [vmem:[%s295] sm:$0x3] %vm12, %v292
  %v297 = vld [vmem:[#allocation2] sm:$0x3]
  %s298 = scalar_lea.vmem %s0, 6
  %v299 = vld [vmem:[%s298] sm:$0x3]
  %v300 = vpack.c.bf16 %v297, %v297
  %v302 = vsel %vm34, %v300, 0
  %304 = vmatprep.subr.bf16.mxu0 0
  %305 = vmatpush1.bf16.msra.mxu0 %v30
  %306 = vmatprep.subr.bf16.mxu0 0
  %307 = vmatpush1.bf16.msra.mxu0 %v31
  %308 = vmatprep.subr.bf16.mxu0 0
  %309 = vmatpush1.bf16.msra.mxu0 0
  %310 = vmatprep.subr.bf16.mxu0 0
  %311 = vmatpush1.bf16.msra.mxu0 0
  %312 = vmatprep.subr.bf16.mxu0 0
  %313 = vmatpush1.bf16.msra.mxu0 0
  %314 = vmatprep.subr.bf16.mxu0 0
  %315 = vmatpush1.bf16.msra.mxu0 0
  %316 = vmatprep.subr.bf16.mxu0 0
  %317 = vmatpush1.bf16.msra.mxu0 0
  %318 = vmatprep.subr.bf16.mxu0 0
  %319 = vmatpush1.bf16.msra.mxu0 0
  %320 = vmatprep.subr.bf16.mxu0 0
  %321 = vmatpush1.bf16.msra.mxu0 0
  %322 = vmatprep.subr.bf16.mxu0 0
  %323 = vmatpush1.bf16.msra.mxu0 0
  %324 = vmatprep.subr.bf16.mxu0 0
  %325 = vmatpush1.bf16.msra.mxu0 0
  %326 = vmatprep.subr.bf16.mxu0 0
  %327 = vmatpush1.bf16.msra.mxu0 0
  %328 = vmatprep.subr.bf16.mxu0 0
  %329 = vmatpush1.bf16.msra.mxu0 0
  %330 = vmatprep.subr.bf16.mxu0 0
  %331 = vmatpush1.bf16.msra.mxu0 0
  %332 = vmatprep.subr.bf16.mxu0 0
  %333 = vmatpush1.bf16.msra.mxu0 0
  %334 = vmatprep.subr.bf16.mxu0 0
  %335 = vmatpush1.bf16.msra.mxu0 0
  %336 = vmatprep.mubr.bf16.mxu0 0
  %337 = vmatmul.mubr.bf16.gmra.mrb[0].mxu0 %v302
  %v338 = vpop.f32.mrb[0].mxu0
  %v339 = vadd.f32 0.0, %v338
  %v340 = vpop.f32.mrb[0].mxu0
  %v341 = vpop.f32.mrb[0].mxu0
  %v342 = vpop.f32.mrb[0].mxu0
  %343 = vdwg.mxu0
  %v344 = vadd.f32 %v299, %v339
  %v345 = vxor.u32 %v344, 2147483648
  %v346 = vmul.f32 %v345, 1.442695
  %v347 = vpow.pop %v346
  %v348 = vadd.f32 %v347, 1.0
  %v349 = vrcp.pop %v348
  %v350 = vmul.f32 1.0, %v349
  %v351 = vtanh.pop %v344
  %v352 = vld [vmem:[#allocation3] sm:$0x3]
  %354 = vrot.lane.b32.xlu0 %v352, 32
  %v355 = vpop.permute.xlu0 %354
  %v357 = vmul.f32 %v350, %v355
  %359 = vrot.lane.b32.xlu0 %v351, 64
  %v360 = vpop.permute.xlu0 %359
  %v362 = vmul.f32 %v350, %v360
  %364 = vrot.lane.b32.xlu0 %v362, 32
  %v365 = vpop.permute.xlu0 %364
  %v367 = vadd.f32 %v357, %v365
  %v368 = vtanh.pop %v367
  %370 = vrot.lane.b32.xlu0 %v368, 64
  %v371 = vpop.permute.xlu0 %370
  %v373 = vmul.f32 %v350, %v371
  %375 = vrot.lane.b32.xlu0 %v367, 96
  %v376 = vpop.permute.xlu0 %375
  %378 = vst.msk [vmem:[#allocation3] sm:$0x3] %vm12, %v376
  %380 = vrot.lane.b32.xlu0 %v373, 32
  %v381 = vpop.permute.xlu0 %380
  %383 = vst.msk [vmem:[#allocation2] sm:$0x3] %vm12, %v381
  %s384 = scalar_lea.vmem %s2, 6
  %385 = vst.msk [vmem:[%s384] sm:$0x3] %vm12, %v381
  %v386 = vld [vmem:[#allocation2] sm:$0x3]
  %s387 = scalar_lea.vmem %s0, 8
  %v388 = vld [vmem:[%s387] sm:$0x3]
  %v389 = vpack.c.bf16 %v386, %v386
  %v391 = vsel %vm34, %v389, 0
  %393 = vmatprep.subr.bf16.mxu0 0
  %394 = vmatpush1.bf16.msra.mxu0 %v30
  %395 = vmatprep.subr.bf16.mxu0 0
  %396 = vmatpush1.bf16.msra.mxu0 %v31
  %397 = vmatprep.subr.bf16.mxu0 0
  %398 = vmatpush1.bf16.msra.mxu0 0
  %399 = vmatprep.subr.bf16.mxu0 0
  %400 = vmatpush1.bf16.msra.mxu0 0
  %401 = vmatprep.subr.bf16.mxu0 0
  %402 = vmatpush1.bf16.msra.mxu0 0
  %403 = vmatprep.subr.bf16.mxu0 0
  %404 = vmatpush1.bf16.msra.mxu0 0
  %405 = vmatprep.subr.bf16.mxu0 0
  %406 = vmatpush1.bf16.msra.mxu0 0
  %407 = vmatprep.subr.bf16.mxu0 0
  %408 = vmatpush1.bf16.msra.mxu0 0
  %409 = vmatprep.subr.bf16.mxu0 0
  %410 = vmatpush1.bf16.msra.mxu0 0
  %411 = vmatprep.subr.bf16.mxu0 0
  %412 = vmatpush1.bf16.msra.mxu0 0
  %413 = vmatprep.subr.bf16.mxu0 0
  %414 = vmatpush1.bf16.msra.mxu0 0
  %415 = vmatprep.subr.bf16.mxu0 0
  %416 = vmatpush1.bf16.msra.mxu0 0
  %417 = vmatprep.subr.bf16.mxu0 0
  %418 = vmatpush1.bf16.msra.mxu0 0
  %419 = vmatprep.subr.bf16.mxu0 0
  %420 = vmatpush1.bf16.msra.mxu0 0
  %421 = vmatprep.subr.bf16.mxu0 0
  %422 = vmatpush1.bf16.msra.mxu0 0
  %423 = vmatprep.subr.bf16.mxu0 0
  %424 = vmatpush1.bf16.msra.mxu0 0
  %425 = vmatprep.mubr.bf16.mxu0 0
  %426 = vmatmul.mubr.bf16.gmra.mrb[0].mxu0 %v391
  %v427 = vpop.f32.mrb[0].mxu0
  %v428 = vadd.f32 0.0, %v427
  %v429 = vpop.f32.mrb[0].mxu0
  %v430 = vpop.f32.mrb[0].mxu0
  %v431 = vpop.f32.mrb[0].mxu0
  %432 = vdwg.mxu0
  %v433 = vadd.f32 %v388, %v428
  %v434 = vxor.u32 %v433, 2147483648
  %v435 = vmul.f32 %v434, 1.442695
  %v436 = vpow.pop %v435
  %v437 = vadd.f32 %v436, 1.0
  %v438 = vrcp.pop %v437
  %v439 = vmul.f32 1.0, %v438
  %v440 = vtanh.pop %v433
  %v441 = vld [vmem:[#allocation3] sm:$0x3]
  %443 = vrot.lane.b32.xlu0 %v441, 32
  %v444 = vpop.permute.xlu0 %443
  %v446 = vmul.f32 %v439, %v444
  %448 = vrot.lane.b32.xlu0 %v440, 64
  %v449 = vpop.permute.xlu0 %448
  %v451 = vmul.f32 %v439, %v449
  %453 = vrot.lane.b32.xlu0 %v451, 32
  %v454 = vpop.permute.xlu0 %453
  %v456 = vadd.f32 %v446, %v454
  %v457 = vtanh.pop %v456
  %459 = vrot.lane.b32.xlu0 %v457, 64
  %v460 = vpop.permute.xlu0 %459
  %v462 = vmul.f32 %v439, %v460
  %464 = vrot.lane.b32.xlu0 %v456, 96
  %v465 = vpop.permute.xlu0 %464
  %467 = vst.msk [vmem:[#allocation3] sm:$0x3] %vm12, %v465
  %469 = vrot.lane.b32.xlu0 %v462, 32
  %v470 = vpop.permute.xlu0 %469
  %472 = vst.msk [vmem:[#allocation2] sm:$0x3] %vm12, %v470
  %s473 = scalar_lea.vmem %s2, 8
  %474 = vst.msk [vmem:[%s473] sm:$0x3] %vm12, %v470
  %v475 = vld [vmem:[#allocation2] sm:$0x3]
  %s476 = scalar_lea.vmem %s0, 10
  %v477 = vld [vmem:[%s476] sm:$0x3]
  %v478 = vpack.c.bf16 %v475, %v475
  %v480 = vsel %vm34, %v478, 0
  %482 = vmatprep.subr.bf16.mxu0 0
  %483 = vmatpush1.bf16.msra.mxu0 %v30
  %484 = vmatprep.subr.bf16.mxu0 0
  %485 = vmatpush1.bf16.msra.mxu0 %v31
  %486 = vmatprep.subr.bf16.mxu0 0
  %487 = vmatpush1.bf16.msra.mxu0 0
  %488 = vmatprep.subr.bf16.mxu0 0
  %489 = vmatpush1.bf16.msra.mxu0 0
  %490 = vmatprep.subr.bf16.mxu0 0
  %491 = vmatpush1.bf16.msra.mxu0 0
  %492 = vmatprep.subr.bf16.mxu0 0
  %493 = vmatpush1.bf16.msra.mxu0 0
  %494 = vmatprep.subr.bf16.mxu0 0
  %495 = vmatpush1.bf16.msra.mxu0 0
  %496 = vmatprep.subr.bf16.mxu0 0
  %497 = vmatpush1.bf16.msra.mxu0 0
  %498 = vmatprep.subr.bf16.mxu0 0
  %499 = vmatpush1.bf16.msra.mxu0 0
  %500 = vmatprep.subr.bf16.mxu0 0
  %501 = vmatpush1.bf16.msra.mxu0 0
  %502 = vmatprep.subr.bf16.mxu0 0
  %503 = vmatpush1.bf16.msra.mxu0 0
  %504 = vmatprep.subr.bf16.mxu0 0
  %505 = vmatpush1.bf16.msra.mxu0 0
  %506 = vmatprep.subr.bf16.mxu0 0
  %507 = vmatpush1.bf16.msra.mxu0 0
  %508 = vmatprep.subr.bf16.mxu0 0
  %509 = vmatpush1.bf16.msra.mxu0 0
  %510 = vmatprep.subr.bf16.mxu0 0
  %511 = vmatpush1.bf16.msra.mxu0 0
  %512 = vmatprep.subr.bf16.mxu0 0
  %513 = vmatpush1.bf16.msra.mxu0 0
  %514 = vmatprep.mubr.bf16.mxu0 0
  %515 = vmatmul.mubr.bf16.gmra.mrb[0].mxu0 %v480
  %v516 = vpop.f32.mrb[0].mxu0
  %v517 = vadd.f32 0.0, %v516
  %v518 = vpop.f32.mrb[0].mxu0
  %v519 = vpop.f32.mrb[0].mxu0
  %v520 = vpop.f32.mrb[0].mxu0
  %521 = vdwg.mxu0
  %v522 = vadd.f32 %v477, %v517
  %v523 = vxor.u32 %v522, 2147483648
  %v524 = vmul.f32 %v523, 1.442695
  %v525 = vpow.pop %v524
  %v526 = vadd.f32 %v525, 1.0
  %v527 = vrcp.pop %v526
  %v528 = vmul.f32 1.0, %v527
  %v529 = vtanh.pop %v522
  %v530 = vld [vmem:[#allocation3] sm:$0x3]
  %532 = vrot.lane.b32.xlu0 %v530, 32
  %v533 = vpop.permute.xlu0 %532
  %v535 = vmul.f32 %v528, %v533
  %537 = vrot.lane.b32.xlu0 %v529, 64
  %v538 = vpop.permute.xlu0 %537
  %v540 = vmul.f32 %v528, %v538
  %542 = vrot.lane.b32.xlu0 %v540, 32
  %v543 = vpop.permute.xlu0 %542
  %v545 = vadd.f32 %v535, %v543
  %v546 = vtanh.pop %v545
  %548 = vrot.lane.b32.xlu0 %v546, 64
  %v549 = vpop.permute.xlu0 %548
  %v551 = vmul.f32 %v528, %v549
  %553 = vrot.lane.b32.xlu0 %v545, 96
  %v554 = vpop.permute.xlu0 %553
  %556 = vst.msk [vmem:[#allocation3] sm:$0x3] %vm12, %v554
  %558 = vrot.lane.b32.xlu0 %v551, 32
  %v559 = vpop.permute.xlu0 %558
  %561 = vst.msk [vmem:[#allocation2] sm:$0x3] %vm12, %v559
  %s562 = scalar_lea.vmem %s2, 10
  %563 = vst.msk [vmem:[%s562] sm:$0x3] %vm12, %v559
  %v564 = vld [vmem:[#allocation2] sm:$0x3]
  %s565 = scalar_lea.vmem %s0, 12
  %v566 = vld [vmem:[%s565] sm:$0x3]
  %v567 = vpack.c.bf16 %v564, %v564
  %v569 = vsel %vm34, %v567, 0
  %571 = vmatprep.subr.bf16.mxu0 0
  %572 = vmatpush1.bf16.msra.mxu0 %v30
  %573 = vmatprep.subr.bf16.mxu0 0
  %574 = vmatpush1.bf16.msra.mxu0 %v31
  %575 = vmatprep.subr.bf16.mxu0 0
  %576 = vmatpush1.bf16.msra.mxu0 0
  %577 = vmatprep.subr.bf16.mxu0 0
  %578 = vmatpush1.bf16.msra.mxu0 0
  %579 = vmatprep.subr.bf16.mxu0 0
  %580 = vmatpush1.bf16.msra.mxu0 0
  %581 = vmatprep.subr.bf16.mxu0 0
  %582 = vmatpush1.bf16.msra.mxu0 0
  %583 = vmatprep.subr.bf16.mxu0 0
  %584 = vmatpush1.bf16.msra.mxu0 0
  %585 = vmatprep.subr.bf16.mxu0 0
  %586 = vmatpush1.bf16.msra.mxu0 0
  %587 = vmatprep.subr.bf16.mxu0 0
  %588 = vmatpush1.bf16.msra.mxu0 0
  %589 = vmatprep.subr.bf16.mxu0 0
  %590 = vmatpush1.bf16.msra.mxu0 0
  %591 = vmatprep.subr.bf16.mxu0 0
  %592 = vmatpush1.bf16.msra.mxu0 0
  %593 = vmatprep.subr.bf16.mxu0 0
  %594 = vmatpush1.bf16.msra.mxu0 0
  %595 = vmatprep.subr.bf16.mxu0 0
  %596 = vmatpush1.bf16.msra.mxu0 0
  %597 = vmatprep.subr.bf16.mxu0 0
  %598 = vmatpush1.bf16.msra.mxu0 0
  %599 = vmatprep.subr.bf16.mxu0 0
  %600 = vmatpush1.bf16.msra.mxu0 0
  %601 = vmatprep.subr.bf16.mxu0 0
  %602 = vmatpush1.bf16.msra.mxu0 0
  %603 = vmatprep.mubr.bf16.mxu0 0
  %604 = vmatmul.mubr.bf16.gmra.mrb[0].mxu0 %v569
  %v605 = vpop.f32.mrb[0].mxu0
  %v606 = vadd.f32 0.0, %v605
  %v607 = vpop.f32.mrb[0].mxu0
  %v608 = vpop.f32.mrb[0].mxu0
  %v609 = vpop.f32.mrb[0].mxu0
  %610 = vdwg.mxu0
  %v611 = vadd.f32 %v566, %v606
  %v612 = vxor.u32 %v611, 2147483648
  %v613 = vmul.f32 %v612, 1.442695
  %v614 = vpow.pop %v613
  %v615 = vadd.f32 %v614, 1.0
  %v616 = vrcp.pop %v615
  %v617 = vmul.f32 1.0, %v616
  %v618 = vtanh.pop %v611
  %v619 = vld [vmem:[#allocation3] sm:$0x3]
  %621 = vrot.lane.b32.xlu0 %v619, 32
  %v622 = vpop.permute.xlu0 %621
  %v624 = vmul.f32 %v617, %v622
  %626 = vrot.lane.b32.xlu0 %v618, 64
  %v627 = vpop.permute.xlu0 %626
  %v629 = vmul.f32 %v617, %v627
  %631 = vrot.lane.b32.xlu0 %v629, 32
  %v632 = vpop.permute.xlu0 %631
  %v634 = vadd.f32 %v624, %v632
  %v635 = vtanh.pop %v634
  %637 = vrot.lane.b32.xlu0 %v635, 64
  %v638 = vpop.permute.xlu0 %637
  %v640 = vmul.f32 %v617, %v638
  %642 = vrot.lane.b32.xlu0 %v634, 96
  %v643 = vpop.permute.xlu0 %642
  %645 = vst.msk [vmem:[#allocation3] sm:$0x3] %vm12, %v643
  %647 = vrot.lane.b32.xlu0 %v640, 32
  %v648 = vpop.permute.xlu0 %647
  %650 = vst.msk [vmem:[#allocation2] sm:$0x3] %vm12, %v648
  %s651 = scalar_lea.vmem %s2, 12
  %652 = vst.msk [vmem:[%s651] sm:$0x3] %vm12, %v648
  %v653 = vld [vmem:[#allocation2] sm:$0x3]
  %s654 = scalar_lea.vmem %s0, 14
  %v655 = vld [vmem:[%s654] sm:$0x3]
  %v656 = vpack.c.bf16 %v653, %v653
  %v658 = vsel %vm34, %v656, 0
  %660 = vmatprep.subr.bf16.mxu0 0
  %661 = vmatpush1.bf16.msra.mxu0 %v30
  %662 = vmatprep.subr.bf16.mxu0 0
  %663 = vmatpush1.bf16.msra.mxu0 %v31
  %664 = vmatprep.subr.bf16.mxu0 0
  %665 = vmatpush1.bf16.msra.mxu0 0
  %666 = vmatprep.subr.bf16.mxu0 0
  %667 = vmatpush1.bf16.msra.mxu0 0
  %668 = vmatprep.subr.bf16.mxu0 0
  %669 = vmatpush1.bf16.msra.mxu0 0
  %670 = vmatprep.subr.bf16.mxu0 0
  %671 = vmatpush1.bf16.msra.mxu0 0
  %672 = vmatprep.subr.bf16.mxu0 0
  %673 = vmatpush1.bf16.msra.mxu0 0
  %674 = vmatprep.subr.bf16.mxu0 0
  %675 = vmatpush1.bf16.msra.mxu0 0
  %676 = vmatprep.subr.bf16.mxu0 0
  %677 = vmatpush1.bf16.msra.mxu0 0
  %678 = vmatprep.subr.bf16.mxu0 0
  %679 = vmatpush1.bf16.msra.mxu0 0
  %680 = vmatprep.subr.bf16.mxu0 0
  %681 = vmatpush1.bf16.msra.mxu0 0
  %682 = vmatprep.subr.bf16.mxu0 0
  %683 = vmatpush1.bf16.msra.mxu0 0
  %684 = vmatprep.subr.bf16.mxu0 0
  %685 = vmatpush1.bf16.msra.mxu0 0
  %686 = vmatprep.subr.bf16.mxu0 0
  %687 = vmatpush1.bf16.msra.mxu0 0
  %688 = vmatprep.subr.bf16.mxu0 0
  %689 = vmatpush1.bf16.msra.mxu0 0
  %690 = vmatprep.subr.bf16.mxu0 0
  %691 = vmatpush1.bf16.msra.mxu0 0
  %692 = vmatprep.mubr.bf16.mxu0 0
  %693 = vmatmul.mubr.bf16.gmra.mrb[0].mxu0 %v658
  %v694 = vpop.f32.mrb[0].mxu0
  %v695 = vadd.f32 0.0, %v694
  %v696 = vpop.f32.mrb[0].mxu0
  %v697 = vpop.f32.mrb[0].mxu0
  %v698 = vpop.f32.mrb[0].mxu0
  %699 = vdwg.mxu0
  %v700 = vadd.f32 %v655, %v695
  %v701 = vxor.u32 %v700, 2147483648
  %v702 = vmul.f32 %v701, 1.442695
  %v703 = vpow.pop %v702
  %v704 = vadd.f32 %v703, 1.0
  %v705 = vrcp.pop %v704
  %v706 = vmul.f32 1.0, %v705
  %v707 = vtanh.pop %v700
  %v708 = vld [vmem:[#allocation3] sm:$0x3]
  %710 = vrot.lane.b32.xlu0 %v708, 32
  %v711 = vpop.permute.xlu0 %710
  %v713 = vmul.f32 %v706, %v711
  %715 = vrot.lane.b32.xlu0 %v707, 64
  %v716 = vpop.permute.xlu0 %715
  %v718 = vmul.f32 %v706, %v716
  %720 = vrot.lane.b32.xlu0 %v718, 32
  %v721 = vpop.permute.xlu0 %720
  %v723 = vadd.f32 %v713, %v721
  %v724 = vtanh.pop %v723
  %726 = vrot.lane.b32.xlu0 %v724, 64
  %v727 = vpop.permute.xlu0 %726
  %v729 = vmul.f32 %v706, %v727
  %731 = vrot.lane.b32.xlu0 %v723, 96
  %v732 = vpop.permute.xlu0 %731
  %734 = vst.msk [vmem:[#allocation3] sm:$0x3] %vm12, %v732
  %736 = vrot.lane.b32.xlu0 %v729, 32
  %v737 = vpop.permute.xlu0 %736
  %739 = vst.msk [vmem:[#allocation2] sm:$0x3] %vm12, %v737
  %s740 = scalar_lea.vmem %s2, 14
  %741 = vst.msk [vmem:[%s740] sm:$0x3] %vm12, %v737
  // Predicated region
  $region10: #{forward.11} parent=0 // pred_check
    _
  $region11: #{forward.11} parent=0 // pred_check_branch
    %743 = sbr.rel (0) target = $region13
  $region12: #{forward.11} parent=0 // pred_region
    _
  $region13: #{forward.11} parent=0 // pred_fallthru
    _
  // Predicated region
  $region14: #{forward.11} parent=0 // pred_check
    _
  $region15: #{forward.11} parent=0 // pred_check_branch
    %745 = sbr.rel (0) target = $region17
  $region16: #{forward.11} parent=0 // pred_region
    _
  $region17: #{forward.11} parent=0 // pred_fallthru
    _

// kernel: forward.19
$region0: #{forward.19}
  #allocation0 [shape = 'u32[]', space=smem, size = 0x4, offset = 0x4, fixed_abs, tag = 'smem constant byte address 0x4 - core index']
  #allocation1 [shape = 'u32[144,128]{1,0:T(1,128)}', space=vmem, size = 0x12000, scoped, tag = 'internal scratch']
  #allocation2 [shape = 'f32[8,128]{1,0:T(8,128)}', space=vmem, size = 0x1000, scoped, tag = 'scratch operand']
  %s0 = inlined_call_operand.vmem [shape: bf16[8,128], index: 0, kind: input, shape index: {}]
  %s1 = inlined_call_operand.vmem [shape: bf16[128,128], index: 1, kind: input, shape index: {}]
  %s2 = inlined_call_operand.vmem [shape: f32[1,128], index: 2, kind: input, shape index: {}]
  %s3 = inlined_call_operand.vmem [shape: f32[8,128], index: 3, kind: output, shape index: {}]
  %s4 = sld [smem:[#allocation0]]
  $region30: #{forward.19} parent=0
    _
  %s6 = ssub.s32 1, %s4
  %s7 = scalar_select 0, %s6, %s4
  // Predicated region
  $region2: #{forward.19} parent=0 // pred_check
    _
  $region3: #{forward.19} parent=0 // pred_check_branch
    %9 = sbr.rel (0) target = $region5
  $region4: #{forward.19} parent=0 // pred_region
    _
  $region5: #{forward.19} parent=0 // pred_fallthru
    _
  // Predicated region
  $region6: #{forward.19} parent=0 // pred_check
    _
  $region7: #{forward.19} parent=0 // pred_check_branch
    %11 = sbr.rel (0) target = $region9
  $region8: #{forward.19} parent=0 // pred_region
    _
  $region9: #{forward.19} parent=0 // pred_fallthru
    _
  // Predicated region
  $region10: #{forward.19} parent=0 // pred_check
    _
  $region11: #{forward.19} parent=0 // pred_check_branch
    %13 = sbr.rel (0) target = $region13
  $region12: #{forward.19} parent=0 // pred_region
    _
  $region13: #{forward.19} parent=0 // pred_fallthru
    _
  %p15 = scmp.eq.s32.totalorder 0, 0
  // Predicated region
  $region14: #{forward.19} parent=0 // pred_check
    %p16 = pneg %p15
  $region15: #{forward.19} parent=0 // pred_check_branch
    %18 = sbr.rel (%p16) target = $region17
  $region16: #{forward.19} parent=0 // pred_region
    %19 = vst [vmem:[#allocation2] sm:$0xff] 0.0
  $region17: #{forward.19} parent=0 // pred_fallthru
    _
  %v20 = vld [vmem:[#allocation2] sm:$0xff]
  %v21 = vld [vmem:[%s0] sm:$0xf]
  %v22 = vld [vmem:[%s1] sm:$0xf]
  %v23 = vld [vmem:[%s1 + $0x4] sm:$0xf]
  %v24 = vld [vmem:[%s1 + $0x8] sm:$0xf]
  %v25 = vld [vmem:[%s1 + $0xc] sm:$0xf]
  %v26 = vld [vmem:[%s1 + $0x10] sm:$0xf]
  %v27 = vld [vmem:[%s1 + $0x14] sm:$0xf]
  %v28 = vld [vmem:[%s1 + $0x18] sm:$0xf]
  %v29 = vld [vmem:[%s1 + $0x1c] sm:$0xf]
  %v30 = vld [vmem:[%s1 + $0x20] sm:$0xf]
  %v31 = vld [vmem:[%s1 + $0x24] sm:$0xf]
  %v32 = vld [vmem:[%s1 + $0x28] sm:$0xf]
  %v33 = vld [vmem:[%s1 + $0x2c] sm:$0xf]
  %v34 = vld [vmem:[%s1 + $0x30] sm:$0xf]
  %v35 = vld [vmem:[%s1 + $0x34] sm:$0xf]
  %v36 = vld [vmem:[%s1 + $0x38] sm:$0xf]
  %v37 = vld [vmem:[%s1 + $0x3c] sm:$0xf]
  %v54 = vunpack.c.l.b16 %v22
  %v55 = vunpack.c.l.b16 %v23
  %v56 = vunpack.c.l.b16 %v24
  %v57 = vunpack.c.l.b16 %v25
  %v58 = vunpack.c.l.b16 %v26
  %v59 = vunpack.c.l.b16 %v27
  %v60 = vunpack.c.l.b16 %v28
  %v61 = vunpack.c.l.b16 %v29
  %v62 = vunpack.c.l.b16 %v30
  %v63 = vunpack.c.l.b16 %v31
  %v64 = vunpack.c.l.b16 %v32
  %v65 = vunpack.c.l.b16 %v33
  %v66 = vunpack.c.l.b16 %v34
  %v67 = vunpack.c.l.b16 %v35
  %v68 = vunpack.c.l.b16 %v36
  %v69 = vunpack.c.l.b16 %v37
  %v70 = vpack.c.b16 %v55, %v54
  %v71 = vpack.c.b16 %v57, %v56
  %v72 = vpack.c.b16 %v59, %v58
  %v73 = vpack.c.b16 %v61, %v60
  %v74 = vpack.c.b16 %v63, %v62
  %v75 = vpack.c.b16 %v65, %v64
  %v76 = vpack.c.b16 %v67, %v66
  %v77 = vpack.c.b16 %v69, %v68
  %86 = vmatprep.subr.bf16.mxu0 0
  %87 = vmatpush1.bf16.msra.mxu0 %v70
  %88 = vmatprep.subr.bf16.mxu0 0
  %89 = vmatpush1.bf16.msra.mxu0 %v71
  %90 = vmatprep.subr.bf16.mxu0 0
  %91 = vmatpush1.bf16.msra.mxu0 %v72
  %92 = vmatprep.subr.bf16.mxu0 0
  %93 = vmatpush1.bf16.msra.mxu0 %v73
  %94 = vmatprep.subr.bf16.mxu0 0
  %95 = vmatpush1.bf16.msra.mxu0 %v74
  %96 = vmatprep.subr.bf16.mxu0 0
  %97 = vmatpush1.bf16.msra.mxu0 %v75
  %98 = vmatprep.subr.bf16.mxu0 0
  %99 = vmatpush1.bf16.msra.mxu0 %v76
  %100 = vmatprep.subr.bf16.mxu0 0
  %101 = vmatpush1.bf16.msra.mxu0 %v77
  %102 = vmatprep.subr.bf16.mxu0 0
  %103 = vmatpush1.bf16.msra.mxu0 0
  %104 = vmatprep.subr.bf16.mxu0 0
  %105 = vmatpush1.bf16.msra.mxu0 0
  %106 = vmatprep.subr.bf16.mxu0 0
  %107 = vmatpush1.bf16.msra.mxu0 0
  %108 = vmatprep.subr.bf16.mxu0 0
  %109 = vmatpush1.bf16.msra.mxu0 0
  %110 = vmatprep.subr.bf16.mxu0 0
  %111 = vmatpush1.bf16.msra.mxu0 0
  %112 = vmatprep.subr.bf16.mxu0 0
  %113 = vmatpush1.bf16.msra.mxu0 0
  %114 = vmatprep.subr.bf16.mxu0 0
  %115 = vmatpush1.bf16.msra.mxu0 0
  %116 = vmatprep.subr.bf16.mxu0 0
  %117 = vmatpush1.bf16.msra.mxu0 0
  %118 = vmatprep.mubr.bf16.mxu0 0
  %119 = vmatmul.mubr.bf16.gmra.mrb[0].mxu0 %v21
  %v120 = vpop.f32.mrb[0].mxu0
  %v121 = vadd.f32 0.0, %v120
  %v122 = vpop.f32.mrb[0].mxu0
  %v123 = vpop.f32.mrb[0].mxu0
  %v124 = vpop.f32.mrb[0].mxu0
  %125 = vdwg.mxu0
  %v126 = vadd.f32 %v20, %v121
  %127 = vst [vmem:[#allocation2] sm:$0xff] %v126
  // Predicated region
  $region18: #{forward.19} parent=0 // pred_check
    %p128 = pneg %p15
  $region19: #{forward.19} parent=0 // pred_check_branch
    %130 = sbr.rel (%p128) target = $region21
  $region20: #{forward.19} parent=0 // pred_region
    %v131 = vld [vmem:[#allocation2] sm:$0xff]
    %v132 = vld [vmem:[%s2] sm:$0x1]
    %v134 = vlaneseq
    %v135 = vshrl.u32 %v134, 7
    %v136 = vsub.s32 0, %v135
    %v137 = vrot.slane %v132, %v136
    %v139 = vadd.f32 %v131, %v137
    %140 = vst [vmem:[%s3] sm:$0xff] %v139
  $region21: #{forward.19} parent=0 // pred_fallthru
    _
  // Predicated region
  $region22: #{forward.19} parent=0 // pred_check
    _
  $region23: #{forward.19} parent=0 // pred_check_branch
    %142 = sbr.rel (0) target = $region25
  $region24: #{forward.19} parent=0 // pred_region
    _
  $region25: #{forward.19} parent=0 // pred_fallthru
    _
  // Predicated region
  $region26: #{forward.19} parent=0 // pred_check
    _
  $region27: #{forward.19} parent=0 // pred_check_branch
    %144 = sbr.rel (0) target = $region29
  $region28: #{forward.19} parent=0 // pred_region
    _
  $region29: #{forward.19} parent=0 // pred_fallthru
    _

// kernel: forward.16
$region0: #{forward.16}
  #allocation0 [shape = 'u32[]', space=smem, size = 0x4, offset = 0x4, fixed_abs, tag = 'smem constant byte address 0x4 - core index']
  #allocation1 [shape = 'u32[144,128]{1,0:T(1,128)}', space=vmem, size = 0x12000, scoped, tag = 'internal scratch']
  #allocation2 [shape = 'f32[16,32]{1,0:T(8,128)}', space=vmem, size = 0x2000, scoped, tag = 'scratch operand']
  %s0 = inlined_call_operand.vmem [shape: f32[16,32], index: 0, kind: input, shape index: {}]
  %s1 = inlined_call_operand.vmem [shape: bf16[32,2048], index: 1, kind: input, shape index: {}]
  %s2 = inlined_call_operand.vmem [shape: f32[1,2048], index: 2, kind: input, shape index: {}]
  %s3 = inlined_call_operand.vmem [shape: bf16[2048,32], index: 3, kind: input, shape index: {}]
  %s4 = inlined_call_operand.vmem [shape: f32[1,32], index: 4, kind: input, shape index: {}]
  %s5 = inlined_call_operand.vmem [shape: f32[1,32], index: 5, kind: input, shape index: {}]
  %s6 = inlined_call_operand.vmem [shape: f32[1,32], index: 6, kind: input, shape index: {}]
  %s7 = inlined_call_operand.vmem [shape: f32[16,32], index: 7, kind: output, shape index: {}]
  %s8 = sld [smem:[#allocation0]]
  $region92: #{forward.16} parent=0
    _
  %s10 = ssub.s32 1, %s8
  %s11 = scalar_select 0, %s10, %s8
  $region1: #{forward.16} parent=0
    #allocation3 [shape = 'u8[65536]{0}', space=vmem, size = 0x10000, scoped, tag = 'input window, operand 1']
    loop: start=0, step=1, limit=6
    $region2: #{forward.16} parent=1 // loop_pre_header
      _
    $region3: #{forward.16} parent=1 // loop_header
      %s13 = sphi 0, %s17
      %p14 = scmp.ge.s32.totalorder %s13, 6
      %s20 = sphi 0, %s32
      %s21 = sphi 0, %s28
      %s22 = sphi 0, %s20
      %s23 = sphi 0, %s21
      %s24 = sphi 0, %s22
      %s25 = sphi 0, %s23
      %s35 = sphi 0, %s37
      %s38 = sphi 0, %s35
      %s39 = sphi 0, %s38
      %s55 = sphi 0, %s39
      %s61 = sphi 0, %s63
      %s64 = sphi 0, %s61
      %s65 = sphi 0, %s64
      %s81 = sphi 0, %s65
      %s87 = sphi 0, %s89
      %s90 = sphi 0, %s87
      %s91 = sphi 0, %s90
      %s107 = sphi 0, %s91
      %s113 = sphi 0, %s115
      %s116 = sphi 0, %s113
      %s117 = sphi 0, %s116
      %s133 = sphi 0, %s117
      %s137 = sphi 0, %s137
      %s139 = sphi 0, %s137
      %s140 = sphi 0, %s139
      %s154 = sphi 0, %s140
      %s158 = sphi 0, %s158
      %s160 = sphi 0, %s158
      %s161 = sphi 0, %s160
      %s175 = sphi 0, %s161
      %s179 = sphi 0, %s179
      %s181 = sphi 0, %s179
      %s182 = sphi 0, %s181
      %s196 = sphi 0, %s182
      %s202 = sphi 0, %s204
      %s205 = sphi 0, %s202
      %s206 = sphi 0, %s205
      %s222 = sphi 0, %s206
    $region4: #{forward.16} parent=1 // loop_header_branch
      %16 = sbr.rel (%p14) target = $region8
    $region5: #{forward.16} parent=1 // loop_body
      %s18 = ssub.s32 %s13, 1
      %s19 = ssub.s32 %s13, 2
      %s26 = sadd.s32 1, %s21
      %p27 = scmp.ge.s32.totalorder %s26, 4
      %s28 = scalar_select %p27, 0, %s26
      %s29 = sadd.s32 1, %s20
      %s30 = scalar_select %p27, %s29, %s20
      %p31 = scmp.ge.s32.totalorder %s30, 1
      %s32 = scalar_select %p31, 0, %s30
      %s33 = ssub.s32 %s20, %s32
      %p34 = scmp.eq.s32.totalorder %s33, 0
      %s36 = sadd.s32 %s35, 1
      %s37 = scalar_select %p34, %s35, %s36
      %p40 = pneg %p34
      %p41 = scmp.eq.s32.totalorder %s13, 3
      %p42 = por %p40, %p41
      %p43 = scmp.ne.s32.totalorder %s35, %s38
      %p44 = scmp.eq.s32.totalorder %s13, 0
      %p45 = por %p43, %p44
      %p46 = scmp.ne.s32.totalorder %s35, %s38
      %p47 = scmp.eq.s32.totalorder %s18, 3
      %p48 = por %p46, %p47
      %p49 = scmp.ne.s32.totalorder %s38, %s39
      %p50 = scmp.eq.s32.totalorder %s18, 0
      %p51 = por %p49, %p50
      %p52 = scmp.ne.s32.totalorder %s38, %s39
      %p53 = scmp.eq.s32.totalorder %s19, 3
      %p54 = por %p52, %p53
      %p56 = scmp.ne.s32.totalorder %s39, %s55
      %p57 = scmp.eq.s32.totalorder %s19, 0
      %p58 = por %p56, %p57
      %s59 = ssub.s32 %s21, %s28
      %p60 = scmp.eq.s32.totalorder %s59, 0
      %s62 = sadd.s32 %s61, 1
      %s63 = scalar_select %p60, %s61, %s62
      %p66 = pneg %p60
      %p67 = scmp.eq.s32.totalorder %s13, 3
      %p68 = por %p66, %p67
      %p69 = scmp.ne.s32.totalorder %s61, %s64
      %p70 = scmp.eq.s32.totalorder %s13, 0
      %p71 = por %p69, %p70
      %p72 = scmp.ne.s32.totalorder %s61, %s64
      %p73 = scmp.eq.s32.totalorder %s18, 3
      %p74 = por %p72, %p73
      %p75 = scmp.ne.s32.totalorder %s64, %s65
      %p76 = scmp.eq.s32.totalorder %s18, 0
      %p77 = por %p75, %p76
      %p78 = scmp.ne.s32.totalorder %s64, %s65
      %p79 = scmp.eq.s32.totalorder %s19, 3
      %p80 = por %p78, %p79
      %p82 = scmp.ne.s32.totalorder %s65, %s81
      %p83 = scmp.eq.s32.totalorder %s19, 0
      %p84 = por %p82, %p83
      %s85 = ssub.s32 %s21, %s28
      %p86 = scmp.eq.s32.totalorder %s85, 0
      %s88 = sadd.s32 %s87, 1
      %s89 = scalar_select %p86, %s87, %s88
      %p92 = pneg %p86
      %p93 = scmp.eq.s32.totalorder %s13, 3
      %p94 = por %p92, %p93
      %p95 = scmp.ne.s32.totalorder %s87, %s90
      %p96 = scmp.eq.s32.totalorder %s13, 0
      %p97 = por %p95, %p96
      %p98 = scmp.ne.s32.totalorder %s87, %s90
      %p99 = scmp.eq.s32.totalorder %s18, 3
      %p100 = por %p98, %p99
      %p101 = scmp.ne.s32.totalorder %s90, %s91
      %p102 = scmp.eq.s32.totalorder %s18, 0
      %p103 = por %p101, %p102
      %p104 = scmp.ne.s32.totalorder %s90, %s91
      %p105 = scmp.eq.s32.totalorder %s19, 3
      %p106 = por %p104, %p105
      %p108 = scmp.ne.s32.totalorder %s91, %s107
      %p109 = scmp.eq.s32.totalorder %s19, 0
      %p110 = por %p108, %p109
      %s111 = ssub.s32 %s21, %s28
      %p112 = scmp.eq.s32.totalorder %s111, 0
      %s114 = sadd.s32 %s113, 1
      %s115 = scalar_select %p112, %s113, %s114
      %p118 = pneg %p112
      %p119 = scmp.eq.s32.totalorder %s13, 3
      %p120 = por %p118, %p119
      %p121 = scmp.ne.s32.totalorder %s113, %s116
      %p122 = scmp.eq.s32.totalorder %s13, 0
      %p123 = por %p121, %p122
      %p124 = scmp.ne.s32.totalorder %s113, %s116
      %p125 = scmp.eq.s32.totalorder %s18, 3
      %p126 = por %p124, %p125
      %p127 = scmp.ne.s32.totalorder %s116, %s117
      %p128 = scmp.eq.s32.totalorder %s18, 0
      %p129 = por %p127, %p128
      %p130 = scmp.ne.s32.totalorder %s116, %s117
      %p131 = scmp.eq.s32.totalorder %s19, 3
      %p132 = por %p130, %p131
      %p134 = scmp.ne.s32.totalorder %s117, %s133
      %p135 = scmp.eq.s32.totalorder %s19, 0
      %p136 = por %p134, %p135
      %s138 = sadd.s32 %s137, 1
      %p141 = scmp.eq.s32.totalorder %s13, 3
      %p142 = scmp.ne.s32.totalorder %s137, %s139
      %p143 = scmp.eq.s32.totalorder %s13, 0
      %p144 = por %p142, %p143
      %p145 = scmp.ne.s32.totalorder %s137, %s139
      %p146 = scmp.eq.s32.totalorder %s18, 3
      %p147 = por %p145, %p146
      %p148 = scmp.ne.s32.totalorder %s139, %s140
      %p149 = scmp.eq.s32.totalorder %s18, 0
      %p150 = por %p148, %p149
      %p151 = scmp.ne.s32.totalorder %s139, %s140
      %p152 = scmp.eq.s32.totalorder %s19, 3
      %p153 = por %p151, %p152
      %p155 = scmp.ne.s32.totalorder %s140, %s154
      %p156 = scmp.eq.s32.totalorder %s19, 0
      %p157 = por %p155, %p156
      %s159 = sadd.s32 %s158, 1
      %p162 = scmp.eq.s32.totalorder %s13, 3
      %p163 = scmp.ne.s32.totalorder %s158, %s160
      %p164 = scmp.eq.s32.totalorder %s13, 0
      %p165 = por %p163, %p164
      %p166 = scmp.ne.s32.totalorder %s158, %s160
      %p167 = scmp.eq.s32.totalorder %s18, 3
      %p168 = por %p166, %p167
      %p169 = scmp.ne.s32.totalorder %s160, %s161
      %p170 = scmp.eq.s32.totalorder %s18, 0
      %p171 = por %p169, %p170
      %p172 = scmp.ne.s32.totalorder %s160, %s161
      %p173 = scmp.eq.s32.totalorder %s19, 3
      %p174 = por %p172, %p173
      %p176 = scmp.ne.s32.totalorder %s161, %s175
      %p177 = scmp.eq.s32.totalorder %s19, 0
      %p178 = por %p176, %p177
      %s180 = sadd.s32 %s179, 1
      %p183 = scmp.eq.s32.totalorder %s13, 3
      %p184 = scmp.ne.s32.totalorder %s179, %s181
      %p185 = scmp.eq.s32.totalorder %s13, 0
      %p186 = por %p184, %p185
      %p187 = scmp.ne.s32.totalorder %s179, %s181
      %p188 = scmp.eq.s32.totalorder %s18, 3
      %p189 = por %p187, %p188
      %p190 = scmp.ne.s32.totalorder %s181, %s182
      %p191 = scmp.eq.s32.totalorder %s18, 0
      %p192 = por %p190, %p191
      %p193 = scmp.ne.s32.totalorder %s181, %s182
      %p194 = scmp.eq.s32.totalorder %s19, 3
      %p195 = por %p193, %p194
      %p197 = scmp.ne.s32.totalorder %s182, %s196
      %p198 = scmp.eq.s32.totalorder %s19, 0
      %p199 = por %p197, %p198
      %s200 = ssub.s32 %s20, %s32
      %p201 = scmp.eq.s32.totalorder %s200, 0
      %s203 = sadd.s32 %s202, 1
      %s204 = scalar_select %p201, %s202, %s203
      %p207 = pneg %p201
      %p208 = scmp.eq.s32.totalorder %s13, 3
      %p209 = por %p207, %p208
      %p210 = scmp.ne.s32.totalorder %s202, %s205
      %p211 = scmp.eq.s32.totalorder %s13, 0
      %p212 = por %p210, %p211
      %p213 = scmp.ne.s32.totalorder %s202, %s205
      %p214 = scmp.eq.s32.totalorder %s18, 3
      %p215 = por %p213, %p214
      %p216 = scmp.ne.s32.totalorder %s205, %s206
      %p217 = scmp.eq.s32.totalorder %s18, 0
      %p218 = por %p216, %p217
      %p219 = scmp.ne.s32.totalorder %s205, %s206
      %p220 = scmp.eq.s32.totalorder %s19, 3
      %p221 = por %p219, %p220
      %p223 = scmp.ne.s32.totalorder %s206, %s222
      %p224 = scmp.eq.s32.totalorder %s19, 0
      %p225 = por %p223, %p224
      %p226 = scmp.le.s32.totalorder 1, %s13
      %p227 = scmp.lt.s32.totalorder %s13, 5
      %p228 = pnand %p226, %p227
      %p229 = pneg %p228
      // Predicated region
      $region9: #{forward.16} parent=5 // pred_check
        _
      $region10: #{forward.16} parent=5 // pred_check_branch
        %231 = sbr.rel (%p228) target = $region12
      $region11: #{forward.16} parent=5 // pred_region
        %s232 = ssub.s32 %s13, 1
        // Predicated region
        $region13: #{forward.16} parent=11 // pred_check
          %p233 = pneg %p51
        $region14: #{forward.16} parent=11 // pred_check_branch
          %235 = sbr.rel (%p233) target = $region16
        $region15: #{forward.16} parent=11 // pred_region
          %s236 = smul.u32 2, %s22
          %p237 = scmp.lt.s32.totalorder %s236, 1
          %s238 = scalar_select %p237, %s236, 1
          %s239 = smul.addr %s238, 8
          %s240 = scalar_lea.vmem %s0, %s239
          %s241 = smul.u32 2, %s22
        $region16: #{forward.16} parent=11 // pred_fallthru
          _
        // Predicated region
        $region17: #{forward.16} parent=11 // pred_check
          %p242 = pneg %p150
        $region18: #{forward.16} parent=11 // pred_check_branch
          %244 = sbr.rel (%p242) target = $region20
        $region19: #{forward.16} parent=11 // pred_region
          _
        $region20: #{forward.16} parent=11 // pred_fallthru
          _
        // Predicated region
        $region21: #{forward.16} parent=11 // pred_check
          %p245 = pneg %p171
        $region22: #{forward.16} parent=11 // pred_check_branch
          %247 = sbr.rel (%p245) target = $region24
        $region23: #{forward.16} parent=11 // pred_region
          _
        $region24: #{forward.16} parent=11 // pred_fallthru
          _
        // Predicated region
        $region25: #{forward.16} parent=11 // pred_check
          %p248 = pneg %p192
        $region26: #{forward.16} parent=11 // pred_check_branch
          %250 = sbr.rel (%p248) target = $region28
        $region27: #{forward.16} parent=11 // pred_region
          _
        $region28: #{forward.16} parent=11 // pred_fallthru
          _
      $region12: #{forward.16} parent=5 // pred_fallthru
        _
      %p251 = scmp.lt.s32.totalorder %s13, 4
      // Predicated region
      $region29: #{forward.16} parent=5 // pred_check
        %p252 = pneg %p251
      $region30: #{forward.16} parent=5 // pred_check_branch
        %254 = sbr.rel (%p252) target = $region32
      $region31: #{forward.16} parent=5 // pred_region
        // Predicated region
        $region33: #{forward.16} parent=31 // pred_check
          %p255 = pneg %p71
        $region34: #{forward.16} parent=31 // pred_check_branch
          %257 = sbr.rel (%p255) target = $region36
        $region35: #{forward.16} parent=31 // pred_region
          %s258 = sand.u32 %s61, 1
          %s259 = sand.u32 %s61, 1
          %s260 = smul.addr %s259, 64
          %s261 = scalar_lea.vmem [#allocation3], %s260
          %s262 = smul.u32 4, %s21
          %s263 = smul.addr %s262, 4
          %s264 = scalar_lea.vmem %s1, %s263
          // Predicated region
          $region37: #{forward.16} parent=35 // pred_check
            _
          $region38: #{forward.16} parent=35 // pred_check_branch
            %266 = sbr.rel (0) target = $region40
          $region39: #{forward.16} parent=35 // pred_region
            // Predicated region
            $region41: #{forward.16} parent=39 // pred_check
              _
            $region42: #{forward.16} parent=39 // pred_check_branch
              %268 = sbr.rel (0) target = $region44
            $region43: #{forward.16} parent=39 // pred_region
              loop: start=0, step=1, limit=1
              $region45: #{forward.16} parent=43 // loop_pre_header
                _
              $region46: #{forward.16} parent=43 // loop_header
                %s270 = sphi 0, %s274
                %p271 = scmp.ge.s32.totalorder %s270, 1
                %s275 = sphi %s264, %s264
                %s276 = sphi %s261, %s261
              $region47: #{forward.16} parent=43 // loop_header_branch
                %273 = sbr.rel (%p271) target = $region51
              $region48: #{forward.16} parent=43 // loop_body
                %v277 = vld [vmem:[%s275] sm:$0xff]
                %278 = vst [vmem:[%s276] sm:$0xff] %v277
                %v279 = vld [vmem:[%s275 + $0x8] sm:$0xff]
                %280 = vst [vmem:[%s276 + $0x8] sm:$0xff] %v279
                %v281 = vld [vmem:[%s275 + $0x40] sm:$0xff]
                %282 = vst [vmem:[%s276 + $0x10] sm:$0xff] %v281
                %v283 = vld [vmem:[%s275 + $0x48] sm:$0xff]
                %284 = vst [vmem:[%s276 + $0x18] sm:$0xff] %v283
                %v285 = vld [vmem:[%s275 + $0x80] sm:$0xff]
                %286 = vst [vmem:[%s276 + $0x20] sm:$0xff] %v285
                %v287 = vld [vmem:[%s275 + $0x88] sm:$0xff]
                %288 = vst [vmem:[%s276 + $0x28] sm:$0xff] %v287
                %v289 = vld [vmem:[%s275 + $0xc0] sm:$0xff]
                %290 = vst [vmem:[%s276 + $0x30] sm:$0xff] %v289
                %v291 = vld [vmem:[%s275 + $0xc8] sm:$0xff]
                %292 = vst [vmem:[%s276 + $0x38] sm:$0xff] %v291
              $region49: #{forward.16} parent=43 // loop_footer
                %s274 = sadd.s32 1, %s270
              $region50: #{forward.16} parent=43 // loop_footer_branch
                %269 = sbr.rel target = $region46
              $region51: #{forward.16} parent=43 // loop_exit
                _
            $region44: #{forward.16} parent=39 // pred_fallthru
              _
            // Predicated region
            $region52: #{forward.16} parent=39 // pred_check
              _
            $region53: #{forward.16} parent=39 // pred_check_branch
              %294 = sbr.rel target = $region55
            $region54: #{forward.16} parent=39 // pred_region
              _
            $region55: #{forward.16} parent=39 // pred_fallthru
              _
          $region40: #{forward.16} parent=35 // pred_fallthru
            _
          %295 = vnop
        $region36: #{forward.16} parent=31 // pred_fallthru
          _
        // Predicated region
        $region56: #{forward.16} parent=31 // pred_check
          %p296 = pneg %p97
        $region57: #{forward.16} parent=31 // pred_check_branch
          %298 = sbr.rel (%p296) target = $region59
        $region58: #{forward.16} parent=31 // pred_region
          %s299 = smul.u32 4, %s21
          %p300 = scmp.lt.s32.totalorder %s299, 15
          %s301 = scalar_select %p300, %s299, 15
          %s302 = scalar_lea.vmem %s2, %s301
          %s303 = smul.u32 4, %s21
        $region59: #{forward.16} parent=31 // pred_fallthru
          _
        // Predicated region
        $region60: #{forward.16} parent=31 // pred_check
          %p304 = pneg %p123
        $region61: #{forward.16} parent=31 // pred_check_branch
          %306 = sbr.rel (%p304) target = $region63
        $region62: #{forward.16} parent=31 // pred_region
          %s307 = smul.u32 64, %s21
          %p308 = scmp.lt.s32.totalorder %s307, 255
          %s309 = scalar_select %p308, %s307, 255
          %s310 = smul.addr %s309, 4
          %s311 = scalar_lea.vmem %s3, %s310
          %s312 = smul.u32 64, %s21
        $region63: #{forward.16} parent=31 // pred_fallthru
          _
      $region32: #{forward.16} parent=5 // pred_fallthru
        _
      %p313 = scmp.le.s32.totalorder 1, %s13
      %p314 = scmp.lt.s32.totalorder %s13, 5
      %p315 = pnand %p313, %p314
      %p316 = pneg %p315
      // Predicated region
      $region64: #{forward.16} parent=5 // pred_check
        _
      $region65: #{forward.16} parent=5 // pred_check_branch
        %318 = sbr.rel (%p315) target = $region67
      $region66: #{forward.16} parent=5 // pred_region
        %s319 = ssub.s32 %s13, 1
        %s320 = sand.u32 %s64, 1
        %s321 = sand.u32 %s64, 1
        %s322 = smul.addr %s321, 64
        %s323 = scalar_lea.vmem [#allocation3], %s322
        // Predicated region
        $region68: #{forward.16} parent=66 // pred_check
          %p324 = pneg %p77
        $region69: #{forward.16} parent=66 // pred_check_branch
          %326 = sbr.rel (%p324) target = $region71
        $region70: #{forward.16} parent=66 // pred_region
          _
        $region71: #{forward.16} parent=66 // pred_fallthru
          _
        %s327 = smul.u32 2, %s22
        %p328 = scmp.lt.s32.totalorder %s327, 1
        %s329 = scalar_select %p328, %s327, 1
        %s330 = smul.addr %s329, 8
        %s331 = scalar_lea.vmem %s0, %s330
        %p332 = pneg %p51
        %p333 = pneg %p48
        %s334 = sand.u32 %s64, 1
        %s335 = sand.u32 %s64, 1
        %s336 = smul.addr %s335, 64
        %s337 = scalar_lea.vmem [#allocation3], %s336
        %p338 = pneg %p77
        %p339 = pneg %p74
        %s340 = smul.u32 4, %s23
        %p341 = scmp.lt.s32.totalorder %s340, 15
        %s342 = scalar_select %p341, %s340, 15
        %s343 = scalar_lea.vmem %s2, %s342
        %p344 = pneg %p103
        %p345 = pneg %p100
        %s346 = smul.u32 64, %s23
        %p347 = scmp.lt.s32.totalorder %s346, 255
        %s348 = scalar_select %p347, %s346, 255
        %s349 = smul.addr %s348, 4
        %s350 = scalar_lea.vmem %s3, %s349
        %p351 = pneg %p129
        %p352 = pneg %p126
        %p353 = pneg %p150
        %p354 = pneg %p147
        %p355 = pneg %p171
        %p356 = pneg %p168
        %p357 = pneg %p192
        %p358 = pneg %p189
        %p359 = pneg %p218
        %p360 = pneg %p215
        %s361 = smul.u32 2, %s22
        %p362 = scmp.lt.s32.totalorder %s361, 1
        %s363 = scalar_select %p362, %s361, 1
        %s364 = smul.addr %s363, 8
        %s365 = scalar_lea.vmem %s7, %s364
        %s366 = smul.u32 2, %s22
        %p367 = scmp.lt.s32.totalorder %s366, 1
        %s368 = scalar_select %p367, %s366, 1
        %s369 = smul.addr %s368, 8
        %s370 = scalar_lea.vmem %s0, %s369
        %s371 = smul.u32 2, %s22
        %s372 = smul.u32 4, %s23
        %s373 = smul.u32 4, %s23
        %p374 = scmp.lt.s32.totalorder %s373, 15
        %s375 = scalar_select %p374, %s373, 15
        %s376 = scalar_lea.vmem %s2, %s375
        %s377 = smul.u32 4, %s23
        %s378 = smul.u32 64, %s23
        %p379 = scmp.lt.s32.totalorder %s378, 255
        %s380 = scalar_select %p379, %s378, 255
        %s381 = smul.addr %s380, 4
        %s382 = scalar_lea.vmem %s3, %s381
        %s383 = smul.u32 64, %s23
        %s384 = smul.u32 2, %s22
        %p385 = scmp.lt.s32.totalorder %s384, 1
        %s386 = scalar_select %p385, %s384, 1
        %s387 = smul.addr %s386, 8
        %s388 = scalar_lea.vmem %s7, %s387
        %s389 = smul.u32 2, %s22
        %p391 = scmp.eq.s32.totalorder %s23, 0
        // Predicated region
        $region72: #{forward.16} parent=66 // pred_check
          %p392 = pneg %p391
        $region73: #{forward.16} parent=66 // pred_check_branch
          %394 = sbr.rel (%p392) target = $region75
        $region74: #{forward.16} parent=66 // pred_region
          %vm395 = vcmask 261120
          %396 = vst.msk [vmem:[#allocation2] sm:$0xff] %vm395, 0.0
          %397 = vst.msk [vmem:[#allocation2 + $0x8] sm:$0xff] %vm395, 0.0
        $region75: #{forward.16} parent=66 // pred_fallthru
          _
        %v398 = vld [vmem:[%s370] sm:$0xff]
        %v399 = vld [vmem:[%s370 + $0x8] sm:$0xff]
        %v400 = vpack.c.bf16 %v399, %v398
        %v401 = vld [vmem:[%s323] sm:$0xff]
        %v402 = vld [vmem:[%s323 + $0x8] sm:$0xff]
        %v403 = vld [vmem:[%s323 + $0x10] sm:$0xff]
        %v404 = vld [vmem:[%s323 + $0x18] sm:$0xff]
        %v405 = vld [vmem:[%s323 + $0x20] sm:$0xff]
        %v406 = vld [vmem:[%s323 + $0x28] sm:$0xff]
        %v407 = vld [vmem:[%s323 + $0x30] sm:$0xff]
        %v408 = vld [vmem:[%s323 + $0x38] sm:$0xff]
        %v409 = vld [vmem:[%s376] sm:$0xf]
        %v411 = vlaneseq
        %v412 = vshrl.u32 %v411, 7
        %v413 = vsub.s32 0, %v412
        %v414 = vrot.slane %v409, %v413
        %v415 = vlaneseq
        %v416 = vshrl.u32 %v415, 7
        %v417 = vsub.s32 1, %v416
        %v418 = vrot.slane %v409, %v417
        %v419 = vlaneseq
        %v420 = vshrl.u32 %v419, 7
        %v421 = vsub.s32 2, %v420
        %v422 = vrot.slane %v409, %v421
        %v423 = vlaneseq
        %v424 = vshrl.u32 %v423, 7
        %v425 = vsub.s32 3, %v424
        %v426 = vrot.slane %v409, %v425
        %v439 = vunpack.c.l.b16 %v401
        %v440 = vunpack.c.h.b16 %v401
        %v441 = vunpack.c.l.b16 %v402
        %v442 = vunpack.c.h.b16 %v402
        %v443 = vunpack.c.l.b16 %v403
        %v444 = vunpack.c.h.b16 %v403
        %v445 = vunpack.c.l.b16 %v404
        %v446 = vunpack.c.h.b16 %v404
        %v447 = vunpack.c.l.b16 %v405
        %v448 = vunpack.c.h.b16 %v405
        %v449 = vunpack.c.l.b16 %v406
        %v450 = vunpack.c.h.b16 %v406
        %v451 = vunpack.c.l.b16 %v407
        %v452 = vunpack.c.h.b16 %v407
        %v453 = vunpack.c.l.b16 %v408
        %v454 = vunpack.c.h.b16 %v408
        %v455 = vpack.c.b16 %v443, %v439
        %v456 = vpack.c.b16 %v444, %v440
        %v457 = vpack.c.b16 %v445, %v441
        %v458 = vpack.c.b16 %v446, %v442
        %v459 = vpack.c.b16 %v451, %v447
        %v460 = vpack.c.b16 %v452, %v448
        %v461 = vpack.c.b16 %v453, %v449
        %v462 = vpack.c.b16 %v454, %v450
        %vm471 = vcmask 261120
        %v473 = vsel %vm471, %v400, 0
        %475 = vmatprep.subr.bf16.mxu0 %v456
        %476 = vmatpush1.bf16.msra.mxu0 %v455
        %477 = vmatprep.subr.bf16.mxu0 %v460
        %478 = vmatpush1.bf16.msra.mxu0 %v459
        %479 = vmatprep.subr.bf16.mxu0 0
        %480 = vmatpush1.bf16.msra.mxu0 0
        %481 = vmatprep.subr.bf16.mxu0 0
        %482 = vmatpush1.bf16.msra.mxu0 0
        %483 = vmatprep.subr.bf16.mxu0 0
        %484 = vmatpush1.bf16.msra.mxu0 0
        %485 = vmatprep.subr.bf16.mxu0 0
        %486 = vmatpush1.bf16.msra.mxu0 0
        %487 = vmatprep.subr.bf16.mxu0 0
        %488 = vmatpush1.bf16.msra.mxu0 0
        %489 = vmatprep.subr.bf16.mxu0 0
        %490 = vmatpush1.bf16.msra.mxu0 0
        %491 = vmatprep.subr.bf16.mxu0 0
        %492 = vmatpush1.bf16.msra.mxu0 0
        %493 = vmatprep.subr.bf16.mxu0 0
        %494 = vmatpush1.bf16.msra.mxu0 0
        %495 = vmatprep.subr.bf16.mxu0 0
        %496 = vmatpush1.bf16.msra.mxu0 0
        %497 = vmatprep.subr.bf16.mxu0 0
        %498 = vmatpush1.bf16.msra.mxu0 0
        %499 = vmatprep.subr.bf16.mxu0 0
        %500 = vmatpush1.bf16.msra.mxu0 0
        %501 = vmatprep.subr.bf16.mxu0 0
        %502 = vmatpush1.bf16.msra.mxu0 0
        %503 = vmatprep.subr.bf16.mxu0 0
        %504 = vmatpush1.bf16.msra.mxu0 0
        %505 = vmatprep.subr.bf16.mxu0 0
        %506 = vmatpush1.bf16.msra.mxu0 0
        %507 = vmatprep.mubr.bf16.mxu0 0
        %508 = vmatmul.mubr.bf16.gmra.mrb[0].mxu0 %v473
        %v509 = vpop.f32.mrb[0].mxu0
        %v510 = vadd.f32 %v414, %v509
        %v511 = vpop.f32.mrb[0].mxu0
        %v512 = vadd.f32 %v418, %v511
        %v513 = vpop.f32.mrb[0].mxu0
        %v514 = vadd.f32 %v414, %v513
        %v515 = vpop.f32.mrb[0].mxu0
        %v516 = vadd.f32 %v418, %v515
        %517 = vdwg.mxu0
        %518 = vmatprep.subr.bf16.mxu0 %v458
        %519 = vmatpush1.bf16.msra.mxu0 %v457
        %520 = vmatprep.subr.bf16.mxu0 %v462
        %521 = vmatpush1.bf16.msra.mxu0 %v461
        %522 = vmatprep.subr.bf16.mxu0 0
        %523 = vmatpush1.bf16.msra.mxu0 0
        %524 = vmatprep.subr.bf16.mxu0 0
        %525 = vmatpush1.bf16.msra.mxu0 0
        %526 = vmatprep.subr.bf16.mxu0 0
        %527 = vmatpush1.bf16.msra.mxu0 0
        %528 = vmatprep.subr.bf16.mxu0 0
        %529 = vmatpush1.bf16.msra.mxu0 0
        %530 = vmatprep.subr.bf16.mxu0 0
        %531 = vmatpush1.bf16.msra.mxu0 0
        %532 = vmatprep.subr.bf16.mxu0 0
        %533 = vmatpush1.bf16.msra.mxu0 0
        %534 = vmatprep.subr.bf16.mxu0 0
        %535 = vmatpush1.bf16.msra.mxu0 0
        %536 = vmatprep.subr.bf16.mxu0 0
        %537 = vmatpush1.bf16.msra.mxu0 0
        %538 = vmatprep.subr.bf16.mxu0 0
        %539 = vmatpush1.bf16.msra.mxu0 0
        %540 = vmatprep.subr.bf16.mxu0 0
        %541 = vmatpush1.bf16.msra.mxu0 0
        %542 = vmatprep.subr.bf16.mxu0 0
        %543 = vmatpush1.bf16.msra.mxu0 0
        %544 = vmatprep.subr.bf16.mxu0 0
        %545 = vmatpush1.bf16.msra.mxu0 0
        %546 = vmatprep.subr.bf16.mxu0 0
        %547 = vmatpush1.bf16.msra.mxu0 0
        %548 = vmatprep.subr.bf16.mxu0 0
        %549 = vmatpush1.bf16.msra.mxu0 0
        %550 = vmatprep.mubr.bf16.mxu0 0
        %551 = vmatmul.mubr.bf16.gmra.mrb[0].mxu0 %v473
        %v552 = vpop.f32.mrb[0].mxu0
        %v553 = vadd.f32 %v422, %v552
        %v554 = vpop.f32.mrb[0].mxu0
        %v555 = vadd.f32 %v426, %v554
        %v556 = vpop.f32.mrb[0].mxu0
        %v557 = vadd.f32 %v422, %v556
        %v558 = vpop.f32.mrb[0].mxu0
        %v559 = vadd.f32 %v426, %v558
        %560 = vdwg.mxu0
        %v561 = vmax.f32 %v510, 0.0
        %v562 = vmax.f32 %v512, 0.0
        %v563 = vmax.f32 %v553, 0.0
        %v564 = vmax.f32 %v555, 0.0
        %v565 = vmax.f32 %v514, 0.0
        %v566 = vmax.f32 %v516, 0.0
        %v567 = vmax.f32 %v557, 0.0
        %v568 = vmax.f32 %v559, 0.0
        %v569 = vld [vmem:[#allocation2] sm:$0xff]
        %v570 = vld [vmem:[#allocation2 + $0x8] sm:$0xff]
        %v571 = vpack.c.bf16 %v565, %v561
        %v572 = vpack.c.bf16 %v566, %v562
        %v573 = vpack.c.bf16 %v567, %v563
        %v574 = vpack.c.bf16 %v568, %v564
        %v575 = vld [vmem:[%s382] sm:$0xf]
        %v576 = vld [vmem:[%s382 + $0x4] sm:$0xf]
        %v577 = vld [vmem:[%s382 + $0x8] sm:$0xf]
        %v578 = vld [vmem:[%s382 + $0xc] sm:$0xf]
        %v579 = vld [vmem:[%s382 + $0x10] sm:$0xf]
        %v580 = vld [vmem:[%s382 + $0x14] sm:$0xf]
        %v581 = vld [vmem:[%s382 + $0x18] sm:$0xf]
        %v582 = vld [vmem:[%s382 + $0x1c] sm:$0xf]
        %v583 = vld [vmem:[%s382 + $0x20] sm:$0xf]
        %v584 = vld [vmem:[%s382 + $0x24] sm:$0xf]
        %v585 = vld [vmem:[%s382 + $0x28] sm:$0xf]
        %v586 = vld [vmem:[%s382 + $0x2c] sm:$0xf]
        %v587 = vld [vmem:[%s382 + $0x30] sm:$0xf]
        %v588 = vld [vmem:[%s382 + $0x34] sm:$0xf]
        %v589 = vld [vmem:[%s382 + $0x38] sm:$0xf]
        %v590 = vld [vmem:[%s382 + $0x3c] sm:$0xf]
        %v591 = vld [vmem:[%s382 + $0x40] sm:$0xf]
        %v592 = vld [vmem:[%s382 + $0x44] sm:$0xf]
        %v593 = vld [vmem:[%s382 + $0x48] sm:$0xf]
        %v594 = vld [vmem:[%s382 + $0x4c] sm:$0xf]
        %v595 = vld [vmem:[%s382 + $0x50] sm:$0xf]
        %v596 = vld [vmem:[%s382 + $0x54] sm:$0xf]
        %v597 = vld [vmem:[%s382 + $0x58] sm:$0xf]
        %v598 = vld [vmem:[%s382 + $0x5c] sm:$0xf]
        %v599 = vld [vmem:[%s382 + $0x60] sm:$0xf]
        %v600 = vld [vmem:[%s382 + $0x64] sm:$0xf]
        %v601 = vld [vmem:[%s382 + $0x68] sm:$0xf]
        %v602 = vld [vmem:[%s382 + $0x6c] sm:$0xf]
        %v603 = vld [vmem:[%s382 + $0x70] sm:$0xf]
        %v604 = vld [vmem:[%s382 + $0x74] sm:$0xf]
        %v605 = vld [vmem:[%s382 + $0x78] sm:$0xf]
        %v606 = vld [vmem:[%s382 + $0x7c] sm:$0xf]
        %v607 = vld [vmem:[%s382 + $0x80] sm:$0xf]
        %v608 = vld [vmem:[%s382 + $0x84] sm:$0xf]
        %v609 = vld [vmem:[%s382 + $0x88] sm:$0xf]
        %v610 = vld [vmem:[%s382 + $0x8c] sm:$0xf]
        %v611 = vld [vmem:[%s382 + $0x90] sm:$0xf]
        %v612 = vld [vmem:[%s382 + $0x94] sm:$0xf]
        %v613 = vld [vmem:[%s382 + $0x98] sm:$0xf]
        %v614 = vld [vmem:[%s382 + $0x9c] sm:$0xf]
        %v615 = vld [vmem:[%s382 + $0xa0] sm:$0xf]
        %v616 = vld [vmem:[%s382 + $0xa4] sm:$0xf]
        %v617 = vld [vmem:[%s382 + $0xa8] sm:$0xf]
        %v618 = vld [vmem:[%s382 + $0xac] sm:$0xf]
        %v619 = vld [vmem:[%s382 + $0xb0] sm:$0xf]
        %v620 = vld [vmem:[%s382 + $0xb4] sm:$0xf]
        %v621 = vld [vmem:[%s382 + $0xb8] sm:$0xf]
        %v622 = vld [vmem:[%s382 + $0xbc] sm:$0xf]
        %v623 = vld [vmem:[%s382 + $0xc0] sm:$0xf]
        %v624 = vld [vmem:[%s382 + $0xc4] sm:$0xf]
        %v625 = vld [vmem:[%s382 + $0xc8] sm:$0xf]
        %v626 = vld [vmem:[%s382 + $0xcc] sm:$0xf]
        %v627 = vld [vmem:[%s382 + $0xd0] sm:$0xf]
        %v628 = vld [vmem:[%s382 + $0xd4] sm:$0xf]
        %v629 = vld [vmem:[%s382 + $0xd8] sm:$0xf]
        %v630 = vld [vmem:[%s382 + $0xdc] sm:$0xf]
        %v631 = vld [vmem:[%s382 + $0xe0] sm:$0xf]
        %v632 = vld [vmem:[%s382 + $0xe4] sm:$0xf]
        %v633 = vld [vmem:[%s382 + $0xe8] sm:$0xf]
        %v634 = vld [vmem:[%s382 + $0xec] sm:$0xf]
        %v635 = vld [vmem:[%s382 + $0xf0] sm:$0xf]
        %v636 = vld [vmem:[%s382 + $0xf4] sm:$0xf]
        %v637 = vld [vmem:[%s382 + $0xf8] sm:$0xf]
        %v638 = vld [vmem:[%s382 + $0xfc] sm:$0xf]
        %v703 = vunpack.c.l.b16 %v575
        %v704 = vunpack.c.l.b16 %v576
        %v705 = vunpack.c.l.b16 %v577
        %v706 = vunpack.c.l.b16 %v578
        %v707 = vunpack.c.l.b16 %v579
        %v708 = vunpack.c.l.b16 %v580
        %v709 = vunpack.c.l.b16 %v581
        %v710 = vunpack.c.l.b16 %v582
        %v711 = vunpack.c.l.b16 %v583
        %v712 = vunpack.c.l.b16 %v584
        %v713 = vunpack.c.l.b16 %v585
        %v714 = vunpack.c.l.b16 %v586
        %v715 = vunpack.c.l.b16 %v587
        %v716 = vunpack.c.l.b16 %v588
        %v717 = vunpack.c.l.b16 %v589
        %v718 = vunpack.c.l.b16 %v590
        %v719 = vunpack.c.l.b16 %v591
        %v720 = vunpack.c.l.b16 %v592
        %v721 = vunpack.c.l.b16 %v593
        %v722 = vunpack.c.l.b16 %v594
        %v723 = vunpack.c.l.b16 %v595
        %v724 = vunpack.c.l.b16 %v596
        %v725 = vunpack.c.l.b16 %v597
        %v726 = vunpack.c.l.b16 %v598
        %v727 = vunpack.c.l.b16 %v599
        %v728 = vunpack.c.l.b16 %v600
        %v729 = vunpack.c.l.b16 %v601
        %v730 = vunpack.c.l.b16 %v602
        %v731 = vunpack.c.l.b16 %v603
        %v732 = vunpack.c.l.b16 %v604
        %v733 = vunpack.c.l.b16 %v605
        %v734 = vunpack.c.l.b16 %v606
        %v735 = vunpack.c.l.b16 %v607
        %v736 = vunpack.c.l.b16 %v608
        %v737 = vunpack.c.l.b16 %v609
        %v738 = vunpack.c.l.b16 %v610
        %v739 = vunpack.c.l.b16 %v611
        %v740 = vunpack.c.l.b16 %v612
        %v741 = vunpack.c.l.b16 %v613
        %v742 = vunpack.c.l.b16 %v614
        %v743 = vunpack.c.l.b16 %v615
        %v744 = vunpack.c.l.b16 %v616
        %v745 = vunpack.c.l.b16 %v617
        %v746 = vunpack.c.l.b16 %v618
        %v747 = vunpack.c.l.b16 %v619
        %v748 = vunpack.c.l.b16 %v620
        %v749 = vunpack.c.l.b16 %v621
        %v750 = vunpack.c.l.b16 %v622
        %v751 = vunpack.c.l.b16 %v623
        %v752 = vunpack.c.l.b16 %v624
        %v753 = vunpack.c.l.b16 %v625
        %v754 = vunpack.c.l.b16 %v626
        %v755 = vunpack.c.l.b16 %v627
        %v756 = vunpack.c.l.b16 %v628
        %v757 = vunpack.c.l.b16 %v629
        %v758 = vunpack.c.l.b16 %v630
        %v759 = vunpack.c.l.b16 %v631
        %v760 = vunpack.c.l.b16 %v632
        %v761 = vunpack.c.l.b16 %v633
        %v762 = vunpack.c.l.b16 %v634
        %v763 = vunpack.c.l.b16 %v635
        %v764 = vunpack.c.l.b16 %v636
        %v765 = vunpack.c.l.b16 %v637
        %v766 = vunpack.c.l.b16 %v638
        %v767 = vpack.c.b16 %v704, %v703
        %v768 = vpack.c.b16 %v706, %v705
        %v769 = vpack.c.b16 %v708, %v707
        %v770 = vpack.c.b16 %v710, %v709
        %v771 = vpack.c.b16 %v712, %v711
        %v772 = vpack.c.b16 %v714, %v713
        %v773 = vpack.c.b16 %v716, %v715
        %v774 = vpack.c.b16 %v718, %v717
        %v775 = vpack.c.b16 %v720, %v719
        %v776 = vpack.c.b16 %v722, %v721
        %v777 = vpack.c.b16 %v724, %v723
        %v778 = vpack.c.b16 %v726, %v725
        %v779 = vpack.c.b16 %v728, %v727
        %v780 = vpack.c.b16 %v730, %v729
        %v781 = vpack.c.b16 %v732, %v731
        %v782 = vpack.c.b16 %v734, %v733
        %v783 = vpack.c.b16 %v736, %v735
        %v784 = vpack.c.b16 %v738, %v737
        %v785 = vpack.c.b16 %v740, %v739
        %v786 = vpack.c.b16 %v742, %v741
        %v787 = vpack.c.b16 %v744, %v743
        %v788 = vpack.c.b16 %v746, %v745
        %v789 = vpack.c.b16 %v748, %v747
        %v790 = vpack.c.b16 %v750, %v749
        %v791 = vpack.c.b16 %v752, %v751
        %v792 = vpack.c.b16 %v754, %v753
        %v793 = vpack.c.b16 %v756, %v755
        %v794 = vpack.c.b16 %v758, %v757
        %v795 = vpack.c.b16 %v760, %v759
        %v796 = vpack.c.b16 %v762, %v761
        %v797 = vpack.c.b16 %v764, %v763
        %v798 = vpack.c.b16 %v766, %v765
        %831 = vmatprep.subr.bf16.mxu0 0
        %832 = vmatpush1.bf16.msra.mxu0 %v767
        %833 = vmatprep.subr.bf16.mxu0 0
        %834 = vmatpush1.bf16.msra.mxu0 %v768
        %835 = vmatprep.subr.bf16.mxu0 0
        %836 = vmatpush1.bf16.msra.mxu0 %v769
        %837 = vmatprep.subr.bf16.mxu0 0
        %838 = vmatpush1.bf16.msra.mxu0 %v770
        %839 = vmatprep.subr.bf16.mxu0 0
        %840 = vmatpush1.bf16.msra.mxu0 %v771
        %841 = vmatprep.subr.bf16.mxu0 0
        %842 = vmatpush1.bf16.msra.mxu0 %v772
        %843 = vmatprep.subr.bf16.mxu0 0
        %844 = vmatpush1.bf16.msra.mxu0 %v773
        %845 = vmatprep.subr.bf16.mxu0 0
        %846 = vmatpush1.bf16.msra.mxu0 %v774
        %847 = vmatprep.subr.bf16.mxu0 0
        %848 = vmatpush1.bf16.msra.mxu0 %v775
        %849 = vmatprep.subr.bf16.mxu0 0
        %850 = vmatpush1.bf16.msra.mxu0 %v776
        %851 = vmatprep.subr.bf16.mxu0 0
        %852 = vmatpush1.bf16.msra.mxu0 %v777
        %853 = vmatprep.subr.bf16.mxu0 0
        %854 = vmatpush1.bf16.msra.mxu0 %v778
        %855 = vmatprep.subr.bf16.mxu0 0
        %856 = vmatpush1.bf16.msra.mxu0 %v779
        %857 = vmatprep.subr.bf16.mxu0 0
        %858 = vmatpush1.bf16.msra.mxu0 %v780
        %859 = vmatprep.subr.bf16.mxu0 0
        %860 = vmatpush1.bf16.msra.mxu0 %v781
        %861 = vmatprep.subr.bf16.mxu0 0
        %862 = vmatpush1.bf16.msra.mxu0 %v782
        %863 = vmatprep.mubr.bf16.mxu0 %v572
        %864 = vmatmul.mubr.bf16.gmra.mrb[0].mxu0 %v571
        %v865 = vpop.f32.mrb[0].mxu0
        %v866 = vadd.f32 0.0, %v865
        %v867 = vpop.f32.mrb[0].mxu0
        %v868 = vpop.f32.mrb[0].mxu0
        %v869 = vadd.f32 0.0, %v868
        %v870 = vpop.f32.mrb[0].mxu0
        %871 = vdwg.mxu0
        %872 = vmatprep.subr.bf16.mxu0 0
        %873 = vmatpush1.bf16.msra.mxu0 %v783
        %874 = vmatprep.subr.bf16.mxu0 0
        %875 = vmatpush1.bf16.msra.mxu0 %v784
        %876 = vmatprep.subr.bf16.mxu0 0
        %877 = vmatpush1.bf16.msra.mxu0 %v785
        %878 = vmatprep.subr.bf16.mxu0 0
        %879 = vmatpush1.bf16.msra.mxu0 %v786
        %880 = vmatprep.subr.bf16.mxu0 0
        %881 = vmatpush1.bf16.msra.mxu0 %v787
        %882 = vmatprep.subr.bf16.mxu0 0
        %883 = vmatpush1.bf16.msra.mxu0 %v788
        %884 = vmatprep.subr.bf16.mxu0 0
        %885 = vmatpush1.bf16.msra.mxu0 %v789
        %886 = vmatprep.subr.bf16.mxu0 0
        %887 = vmatpush1.bf16.msra.mxu0 %v790
        %888 = vmatprep.subr.bf16.mxu0 0
        %889 = vmatpush1.bf16.msra.mxu0 %v791
        %890 = vmatprep.subr.bf16.mxu0 0
        %891 = vmatpush1.bf16.msra.mxu0 %v792
        %892 = vmatprep.subr.bf16.mxu0 0
        %893 = vmatpush1.bf16.msra.mxu0 %v793
        %894 = vmatprep.subr.bf16.mxu0 0
        %895 = vmatpush1.bf16.msra.mxu0 %v794
        %896 = vmatprep.subr.bf16.mxu0 0
        %897 = vmatpush1.bf16.msra.mxu0 %v795
        %898 = vmatprep.subr.bf16.mxu0 0
        %899 = vmatpush1.bf16.msra.mxu0 %v796
        %900 = vmatprep.subr.bf16.mxu0 0
        %901 = vmatpush1.bf16.msra.mxu0 %v797
        %902 = vmatprep.subr.bf16.mxu0 0
        %903 = vmatpush1.bf16.msra.mxu0 %v798
        %904 = vmatprep.mubr.bf16.mxu0 %v574
        %905 = vmatmul.mubr.bf16.gmra.mrb[0].mxu0 %v573
        %v906 = vpop.f32.mrb[0].mxu0
        %v907 = vadd.f32 %v866, %v906
        %v908 = vpop.f32.mrb[0].mxu0
        %v909 = vpop.f32.mrb[0].mxu0
        %v910 = vadd.f32 %v869, %v909
        %v911 = vpop.f32.mrb[0].mxu0
        %912 = vdwg.mxu0
        %v913 = vadd.f32 %v569, %v907
        %v914 = vadd.f32 %v570, %v910
        %915 = vst.msk [vmem:[#allocation2] sm:$0xff] %vm471, %v913
        %916 = vst.msk [vmem:[#allocation2 + $0x8] sm:$0xff] %vm471, %v914
        %p917 = scmp.eq.s32.totalorder %s23, 3
        // Predicated region
        $region76: #{forward.16} parent=66 // pred_check
          %p918 = pneg %p917
        $region77: #{forward.16} parent=66 // pred_check_branch
          %920 = sbr.rel (%p918) target = $region79
        $region78: #{forward.16} parent=66 // pred_region
          %v921 = vld [vmem:[#allocation2] sm:$0xff]
          %v922 = vld [vmem:[#allocation2 + $0x8] sm:$0xff]
          %v923 = vld [vmem:[%s4] sm:$0x1]
          %v925 = vlaneseq
          %v926 = vshrl.u32 %v925, 7
          %v927 = vsub.s32 0, %v926
          %v928 = vrot.slane %v923, %v927
          %v930 = vadd.f32 %v921, %v928
          %v931 = vadd.f32 %v922, %v928
          %v932 = vadd.f32 %v930, %v398
          %v933 = vadd.f32 %v931, %v399
          %v934 = vsel %vm471, %v932, 0.0
          %935 = vadd.xlane.f32.xlu0 %v934
          %v936 = vpop.xlane.xlu0 %935
          %v937 = vsel %vm471, %v933, 0.0
          %938 = vadd.xlane.f32.xlu0 %v937
          %v939 = vpop.xlane.xlu0 %938
          %v940 = vrcp.pop 32.0
          %v941 = vmul.f32 %v936, %v940
          %v942 = vmul.f32 %v939, %v940
          %v943 = vsub.f32 %v932, %v941
          %v944 = vsub.f32 %v933, %v942
          %v945 = vmul.f32 %v943, %v943
          %v946 = vmul.f32 %v944, %v944
          %v947 = vsel %vm471, %v945, 0.0
          %948 = vadd.xlane.f32.xlu0 %v947
          %v949 = vpop.xlane.xlu0 %948
          %v950 = vsel %vm471, %v946, 0.0
          %951 = vadd.xlane.f32.xlu0 %v950
          %v952 = vpop.xlane.xlu0 %951
          %v953 = vmul.f32 %v949, %v940
          %v954 = vmul.f32 %v952, %v940
          %v955 = vadd.f32 %v953, 1e-05
          %v956 = vadd.f32 %v954, 1e-05
          %v957 = vrsqrt.pop %v955
          %v958 = vrsqrt.pop %v956
          %v959 = vmul.f32 %v943, %v957
          %v960 = vmul.f32 %v944, %v958
          %v961 = vld [vmem:[%s5] sm:$0x1]
          %v963 = vlaneseq
          %v964 = vshrl.u32 %v963, 7
          %v965 = vsub.s32 0, %v964
          %v966 = vrot.slane %v961, %v965
          %v968 = vmul.f32 %v959, %v966
          %v969 = vmul.f32 %v960, %v966
          %v970 = vld [vmem:[%s6] sm:$0x1]
          %v972 = vlaneseq
          %v973 = vshrl.u32 %v972, 7
          %v974 = vsub.s32 0, %v973
          %v975 = vrot.slane %v970, %v974
          %v977 = vadd.f32 %v968, %v975
          %v978 = vadd.f32 %v969, %v975
          %979 = vst.msk [vmem:[%s388] sm:$0xff] %vm471, %v977
          %980 = vst.msk [vmem:[%s388 + $0x8] sm:$0xff] %vm471, %v978
        $region79: #{forward.16} parent=66 // pred_fallthru
          _
        %s981 = smul.u32 2, %s22
        %p982 = scmp.lt.s32.totalorder %s981, 1
        %s983 = scalar_select %p982, %s981, 1
        %s984 = smul.addr %s983, 8
        %s985 = scalar_lea.vmem %s7, %s984
        // Predicated region
        $region80: #{forward.16} parent=66 // pred_check
          %p986 = pneg %p215
        $region81: #{forward.16} parent=66 // pred_check_branch
          %988 = sbr.rel (%p986) target = $region83
        $region82: #{forward.16} parent=66 // pred_region
          %s989 = smul.u32 2, %s22
        $region83: #{forward.16} parent=66 // pred_fallthru
          _
        // Predicated region
        $region84: #{forward.16} parent=66 // pred_check
          %p990 = pneg %p215
        $region85: #{forward.16} parent=66 // pred_check_branch
          %992 = sbr.rel (%p990) target = $region87
        $region86: #{forward.16} parent=66 // pred_region
          %s993 = smul.u32 2, %s22
          %p994 = scmp.lt.s32.totalorder %s993, 1
          %s995 = scalar_select %p994, %s993, 1
          %s996 = smul.addr %s995, 8
          %s997 = scalar_lea.vmem %s7, %s996
        $region87: #{forward.16} parent=66 // pred_fallthru
          _
      $region67: #{forward.16} parent=5 // pred_fallthru
        _
      %p998 = scmp.le.s32.totalorder 2, %s13
      // Predicated region
      $region88: #{forward.16} parent=5 // pred_check
        %p999 = pneg %p998
      $region89: #{forward.16} parent=5 // pred_check_branch
        %1001 = sbr.rel (%p999) target = $region91
      $region90: #{forward.16} parent=5 // pred_region
        %s1002 = ssub.s32 %s13, 2
      $region91: #{forward.16} parent=5 // pred_fallthru
        _
    $region6: #{forward.16} parent=1 // loop_footer
      %s17 = sadd.s32 1, %s13
    $region7: #{forward.16} parent=1 // loop_footer_branch
      %12 = sbr.rel target = $region3
    $region8: #{forward.16} parent=1 // loop_exit
      _

</llo_original>
